<compile_context>
chip_gen: v5e
topology: v5e:2x2
jax: 0.10.0
libtpu: 0.0.40
codegen_flags: <defaults>
</compile_context>

<pallas_src>
import functools
import math

import jax
import jax.numpy as jnp
from jax.experimental import pallas as pl
from jax.experimental.pallas import tpu as pltpu


def _round_up(n, m):
    return ((n + m - 1) // m) * m


# --------------------------------------------------------------------------
# Kernel: one batch tile per grid step, weights resident in VMEM.
# --------------------------------------------------------------------------
def _vae_kernel(x_ref, eps_ref,
                we0_ref, be0_ref, we1_ref, be1_ref,
                wmv_ref, bmv_ref,
                wd0_ref, bd0_ref, wd1_ref, bd1_ref,
                wl_ref, bl_ref,
                zmean_ref, zvar_ref, z_ref, xlogits_ref):
    f32 = jnp.float32
    mm_dtype = we0_ref.dtype              # bf16 (or f32) matmul operand dtype
    zp = zmean_ref.shape[-1]              # 128-padded latent width

    # ---------------- encoder ----------------
    x = x_ref[...]                        # (TB, IN_P) already in mm_dtype
    h = jnp.dot(x, we0_ref[...], preferred_element_type=f32) + be0_ref[...]
    h = jnp.maximum(h, 0.0)               # ReLU in f32
    h = jnp.dot(h.astype(mm_dtype), we1_ref[...],
                preferred_element_type=f32) + be1_ref[...]
    h = jnp.maximum(h, 0.0)

    # Fused mean|var head: one (TB, 2*zp) matmul, split on a 128-lane boundary.
    mv = jnp.dot(h.astype(mm_dtype), wmv_ref[...],
                 preferred_element_type=f32) + bmv_ref[...]
    z_mean = mv[:, :zp]                   # padded cols are exactly 0
    pre_var = mv[:, zp:]
    z_var = jnp.logaddexp(pre_var, 0.0)   # numerically stable softplus (f32)

    # ------------- reparameterize -------------
    # eps padded cols are 0, so padded z cols stay 0 for the decoder matmul.
    z = z_mean + z_var * eps_ref[...]

    # ---------------- decoder ----------------
    d = jnp.dot(z.astype(mm_dtype), wd0_ref[...],
                preferred_element_type=f32) + bd0_ref[...]
    d = jnp.maximum(d, 0.0)
    d = jnp.dot(d.astype(mm_dtype), wd1_ref[...],
                preferred_element_type=f32) + bd1_ref[...]
    d = jnp.maximum(d, 0.0)
    x_logits = jnp.dot(d.astype(mm_dtype), wl_ref[...],
                       preferred_element_type=f32) + bl_ref[...]

    # Lane-dense (multiple-of-128 wide) unmasked stores.
    zmean_ref[...] = z_mean
    zvar_ref[...] = z_var
    z_ref[...] = z
    xlogits_ref[...] = x_logits


# --------------------------------------------------------------------------
# Wrapper: padding / packing, grid + BlockSpecs, output un-padding.
# --------------------------------------------------------------------------
def vae_forward(x, eps, params, *, block_b=512, matmul_dtype=jnp.bfloat16):
    """x: (B, 784) f32; eps: (B, z_dim) f32 standard-normal noise."""
    f32 = jnp.float32
    B, in_dim = x.shape
    h2 = params["we0"].shape[1]           # 2 * h_dim
    h = params["we1"].shape[1]            # h_dim
    z_dim = params["wm"].shape[1]

    # Lane-dense padded dims (multiples of 128).
    IN_P = _round_up(in_dim, 128)         # 784 -> 896
    H2P = _round_up(h2, 128)
    HP = _round_up(h, 128)
    ZP = _round_up(z_dim, 128)            # 8 -> 128

    # Batch tile: large (pipelined) tile, sublane-aligned, never bigger than B.
    TB = min(_round_up(block_b, 8), _round_up(B, 8))
    B_pad = _round_up(B, TB)

    def pad2(a, rows, cols, dtype):
        r, c = a.shape
        return jnp.zeros((rows, cols), dtype).at[:r, :c].set(a.astype(dtype))

    # ---- weights: zero-padded, matmul dtype; biases stay f32 ----
    we0 = pad2(params["we0"], IN_P, H2P, matmul_dtype)
    be0 = pad2(params["be0"], 1, H2P, f32)
    we1 = pad2(params["we1"], H2P, HP, matmul_dtype)
    be1 = pad2(params["be1"], 1, HP, f32)
    # Fused mean|var head, packed at a 128-lane boundary.
    wmv = jnp.zeros((HP, 2 * ZP), matmul_dtype)
    wmv = wmv.at[:h, :z_dim].set(params["wm"].astype(matmul_dtype))
    wmv = wmv.at[:h, ZP:ZP + z_dim].set(params["wv"].astype(matmul_dtype))
    bmv = jnp.zeros((1, 2 * ZP), f32)
    bmv = bmv.at[:, :z_dim].set(params["bm"].astype(f32))
    bmv = bmv.at[:, ZP:ZP + z_dim].set(params["bv"].astype(f32))
    wd0 = pad2(params["wd0"], ZP, HP, matmul_dtype)
    bd0 = pad2(params["bd0"], 1, HP, f32)
    wd1 = pad2(params["wd1"], HP, H2P, matmul_dtype)
    bd1 = pad2(params["bd1"], 1, H2P, f32)
    wl = pad2(params["wl"], H2P, IN_P, matmul_dtype)
    bl = pad2(params["bl"], 1, IN_P, f32)

    # ---- activations: zero-padded (zeros don't perturb the matmuls) ----
    x_p = pad2(x, B_pad, IN_P, matmul_dtype)
    eps_p = pad2(eps, B_pad, ZP, f32)

    args = (x_p, eps_p,
            we0, be0, we1, be1,
            wmv, bmv,
            wd0, bd0, wd1, bd1,
            wl, bl)

    batch_spec = lambda shape: pl.BlockSpec(shape, lambda i: (i, 0))
    const_spec = lambda shape: pl.BlockSpec(shape, lambda i: (0, 0))

    in_specs = [
        batch_spec((TB, IN_P)),           # x
        batch_spec((TB, ZP)),             # eps
        const_spec((IN_P, H2P)), const_spec((1, H2P)),    # we0, be0
        const_spec((H2P, HP)), const_spec((1, HP)),       # we1, be1
        const_spec((HP, 2 * ZP)), const_spec((1, 2 * ZP)),  # wmv, bmv
        const_spec((ZP, HP)), const_spec((1, HP)),        # wd0, bd0
        const_spec((HP, H2P)), const_spec((1, H2P)),      # wd1, bd1
        const_spec((H2P, IN_P)), const_spec((1, IN_P)),   # wl, bl
    ]
    out_specs = (
        batch_spec((TB, ZP)),             # z_mean (padded)
        batch_spec((TB, ZP)),             # z_var  (padded)
        batch_spec((TB, ZP)),             # z      (padded)
        batch_spec((TB, IN_P)),           # x_logits (padded)
    )
    out_shape = (
        jax.ShapeDtypeStruct((B_pad, ZP), f32),
        jax.ShapeDtypeStruct((B_pad, ZP), f32),
        jax.ShapeDtypeStruct((B_pad, ZP), f32),
        jax.ShapeDtypeStruct((B_pad, IN_P), f32),
    )

    # ---- compiler hints: VMEM budget + cost estimate ----
    mm_bytes = jnp.dtype(matmul_dtype).itemsize
    mxu_terms = (IN_P * H2P + H2P * HP + HP * 2 * ZP
                 + ZP * HP + HP * H2P + H2P * IN_P)
    weight_bytes = (mxu_terms * mm_bytes
                    + (H2P + HP + 2 * ZP + HP + H2P + IN_P) * 4)
    stream_block_bytes = (TB * IN_P * mm_bytes + TB * ZP * 4
                          + 3 * TB * ZP * 4 + TB * IN_P * 4)
    vmem_need = 2 * (weight_bytes + stream_block_bytes)   # double-buffer headroom
    vmem_limit = int(min(64 * 2**20, max(32 * 2**20, vmem_need + (4 << 20))))

    cost = pl.CostEstimate(
        flops=2 * B_pad * mxu_terms,
        transcendentals=2 * B_pad * ZP,                    # exp + log in softplus
        bytes_accessed=int(weight_bytes
                           + B_pad * IN_P * mm_bytes       # x in
                           + B_pad * ZP * 4                # eps in
                           + 3 * B_pad * ZP * 4            # z_mean, z_var, z out
                           + B_pad * IN_P * 4),            # logits out
    )

    zmean_p, zvar_p, z_p, xlogits_p = pl.pallas_call(
        _vae_kernel,
        out_shape=out_shape,
        grid=(B_pad // TB,),
        in_specs=in_specs,
        out_specs=out_specs,
        compiler_params=pltpu.CompilerParams(
            dimension_semantics=("parallel",),
            vmem_limit_bytes=vmem_limit),
        cost_estimate=cost,
    )(*args)

    # Un-pad back to the logical shapes.
    return (zmean_p[:B, :z_dim], zvar_p[:B, :z_dim],
            z_p[:B, :z_dim], xlogits_p[:B, :in_dim])


# --------------------------------------------------------------------------
# Parameter init (PyTorch nn.Linear style, weights stored pre-transposed as
# (in_features, out_features)) and pure-JAX reference.
# --------------------------------------------------------------------------
def init_params(key, h_dim, z_dim, in_dim=784):
    def linear(k, fan_in, fan_out):
        kw, kb = jax.random.split(k)
        bound = 1.0 / jnp.sqrt(fan_in)
        w = jax.random.uniform(kw, (fan_in, fan_out), jnp.float32, -bound, bound)
        b = jax.random.uniform(kb, (1, fan_out), jnp.float32, -bound, bound)
        return w, b

    keys = jax.random.split(key, 7)
    p = {}
    p["we0"], p["be0"] = linear(keys[0], in_dim, 2 * h_dim)   # fc_e0
    p["we1"], p["be1"] = linear(keys[1], 2 * h_dim, h_dim)    # fc_e1
    p["wm"], p["bm"] = linear(keys[2], h_dim, z_dim)          # fc_mean
    p["wv"], p["bv"] = linear(keys[3], h_dim, z_dim)          # fc_var
    p["wd0"], p["bd0"] = linear(keys[4], z_dim, h_dim)        # fc_d0
    p["wd1"], p["bd1"] = linear(keys[5], h_dim, 2 * h_dim)    # fc_d1
    p["wl"], p["bl"] = linear(keys[6], 2 * h_dim, in_dim)     # fc_logits
    return p


def reference_forward(x, eps, p, matmul_dtype=jnp.bfloat16):
    """Pure-JAX reference using the same mixed precision as the kernel
    (bf16 matmul operands, f32 accumulation and elementwise)."""
    def mm(a, w):
        return jnp.dot(a.astype(matmul_dtype), w.astype(matmul_dtype),
                       preferred_element_type=jnp.float32)
    relu = lambda v: jnp.maximum(v, 0.0)
    h = relu(mm(x, p["we0"]) + p["be0"])
    h = relu(mm(h, p["we1"]) + p["be1"])
    z_mean = mm(h, p["wm"]) + p["bm"]
    z_var = jnp.logaddexp(mm(h, p["wv"]) + p["bv"], 0.0)
    z = z_mean + z_var * eps
    d = relu(mm(z, p["wd0"]) + p["bd0"])
    d = relu(mm(d, p["wd1"]) + p["bd1"])
    x_ = mm(d, p["wl"]) + p["bl"]
    return z_mean, z_var, z, x_


if __name__ == "__main__":
    B, H_DIM, Z_DIM, IN_DIM = 256, 32, 8, 784
    BLOCK_B = 128   # small demo tile -> 2-step grid; use 512-1024 in production

    key = jax.random.PRNGKey(0)
    k_params, k_x, k_eps = jax.random.split(key, 3)

    params = init_params(k_params, H_DIM, Z_DIM, IN_DIM)
    x = jax.random.uniform(k_x, (B, IN_DIM), jnp.float32)       # MNIST-like input
    eps = jax.random.normal(k_eps, (B, Z_DIM), jnp.float32)     # rsample noise

    fwd = jax.jit(functools.partial(vae_forward, block_b=BLOCK_B))
    z_mean, z_var, z, x_logits = jax.block_until_ready(fwd(x, eps, params))

    ref = reference_forward(x, eps, params)
    for got, want in zip((z_mean, z_var, z, x_logits), ref):
        assert got.shape == want.shape
        assert jnp.allclose(got, want, atol=2e-3, rtol=2e-3), "mismatch vs reference"

    print("KERNEL_OK")
</pallas_src>

<mosaic_0001>
module attributes {stable_mosaic.version = 11 : i64} {
  func.func @_vae_kernel(%arg0: i32, %arg1: memref<128x896xbf16, #tpu.memory_space<vmem>>, %arg2: memref<128x128xf32, #tpu.memory_space<vmem>>, %arg3: memref<896x128xbf16, #tpu.memory_space<vmem>>, %arg4: memref<1x128xf32, #tpu.memory_space<vmem>>, %arg5: memref<128x128xbf16, #tpu.memory_space<vmem>>, %arg6: memref<1x128xf32, #tpu.memory_space<vmem>>, %arg7: memref<128x256xbf16, #tpu.memory_space<vmem>>, %arg8: memref<1x256xf32, #tpu.memory_space<vmem>>, %arg9: memref<128x128xbf16, #tpu.memory_space<vmem>>, %arg10: memref<1x128xf32, #tpu.memory_space<vmem>>, %arg11: memref<128x128xbf16, #tpu.memory_space<vmem>>, %arg12: memref<1x128xf32, #tpu.memory_space<vmem>>, %arg13: memref<128x896xbf16, #tpu.memory_space<vmem>>, %arg14: memref<1x896xf32, #tpu.memory_space<vmem>>, %arg15: memref<128x128xf32, #tpu.memory_space<vmem>>, %arg16: memref<128x128xf32, #tpu.memory_space<vmem>>, %arg17: memref<128x128xf32, #tpu.memory_space<vmem>>, %arg18: memref<128x896xf32, #tpu.memory_space<vmem>>) attributes {dimension_semantics = [#tpu.dimension_semantics<parallel>], iteration_bounds = array<i64: 2>, scalar_prefetch = 0 : i64, scratch_operands = 0 : i64, tpu.core_type = #tpu.core_type<tc>, window_params = [{transform_indices = @transform_0, window_bounds = array<i64: 128, 896>}, {transform_indices = @transform_1, window_bounds = array<i64: 128, 128>}, {pipeline_mode = #tpu.pipeline_mode<synchronous>, transform_indices = @transform_2, window_bounds = array<i64: 896, 128>}, {pipeline_mode = #tpu.pipeline_mode<synchronous>, transform_indices = @transform_3, window_bounds = array<i64: 1, 128>}, {pipeline_mode = #tpu.pipeline_mode<synchronous>, transform_indices = @transform_4, window_bounds = array<i64: 128, 128>}, {pipeline_mode = #tpu.pipeline_mode<synchronous>, transform_indices = @transform_5, window_bounds = array<i64: 1, 128>}, {pipeline_mode = #tpu.pipeline_mode<synchronous>, transform_indices = @transform_6, window_bounds = array<i64: 128, 256>}, {pipeline_mode = #tpu.pipeline_mode<synchronous>, transform_indices = @transform_7, window_bounds = array<i64: 1, 256>}, {pipeline_mode = #tpu.pipeline_mode<synchronous>, transform_indices = @transform_8, window_bounds = array<i64: 128, 128>}, {pipeline_mode = #tpu.pipeline_mode<synchronous>, transform_indices = @transform_9, window_bounds = array<i64: 1, 128>}, {pipeline_mode = #tpu.pipeline_mode<synchronous>, transform_indices = @transform_10, window_bounds = array<i64: 128, 128>}, {pipeline_mode = #tpu.pipeline_mode<synchronous>, transform_indices = @transform_11, window_bounds = array<i64: 1, 128>}, {pipeline_mode = #tpu.pipeline_mode<synchronous>, transform_indices = @transform_12, window_bounds = array<i64: 128, 896>}, {pipeline_mode = #tpu.pipeline_mode<synchronous>, transform_indices = @transform_13, window_bounds = array<i64: 1, 896>}, {transform_indices = @transform_14, window_bounds = array<i64: 128, 128>}, {transform_indices = @transform_15, window_bounds = array<i64: 128, 128>}, {transform_indices = @transform_16, window_bounds = array<i64: 128, 128>}, {transform_indices = @transform_17, window_bounds = array<i64: 128, 896>}]} {
    %c0 = arith.constant 0 : index
    %c0_0 = arith.constant 0 : index
    %0 = vector.load %arg1[%c0, %c0_0] : memref<128x896xbf16, #tpu.memory_space<vmem>>, vector<128x896xbf16>
    %c0_1 = arith.constant 0 : index
    %c0_2 = arith.constant 0 : index
    %1 = vector.load %arg3[%c0_1, %c0_2] : memref<896x128xbf16, #tpu.memory_space<vmem>>, vector<896x128xbf16>
    %cst = arith.constant dense<0.000000e+00> : vector<128x128xf32>
    %2 = tpu.matmul %0, %1, %cst {dimension_numbers = #tpu.dot_dimension_numbers<[1], [0], [0], [1], [0, 0, 1, 1], [], []>} : vector<128x896xbf16>, vector<896x128xbf16>, vector<128x128xf32> -> vector<128x128xf32>
    %c0_3 = arith.constant 0 : index
    %c0_4 = arith.constant 0 : index
    %3 = vector.load %arg4[%c0_3, %c0_4] : memref<1x128xf32, #tpu.memory_space<vmem>>, vector<1x128xf32>
    %4 = vector.broadcast %3 : vector<1x128xf32> to vector<128x128xf32>
    %5 = arith.addf %2, %4 : vector<128x128xf32>
    %cst_5 = arith.constant 0.000000e+00 : f32
    %6 = vector.broadcast %cst_5 : f32 to vector<128x128xf32>
    %7 = arith.maximumf %5, %6 : vector<128x128xf32>
    %8 = arith.truncf %7 : vector<128x128xf32> to vector<128x128xbf16>
    %c0_6 = arith.constant 0 : index
    %c0_7 = arith.constant 0 : index
    %9 = vector.load %arg5[%c0_6, %c0_7] : memref<128x128xbf16, #tpu.memory_space<vmem>>, vector<128x128xbf16>
    %cst_8 = arith.constant dense<0.000000e+00> : vector<128x128xf32>
    %10 = tpu.matmul %8, %9, %cst_8 {dimension_numbers = #tpu.dot_dimension_numbers<[1], [0], [0], [1], [0, 0, 1, 1], [], []>} : vector<128x128xbf16>, vector<128x128xbf16>, vector<128x128xf32> -> vector<128x128xf32>
    %c0_9 = arith.constant 0 : index
    %c0_10 = arith.constant 0 : index
    %11 = vector.load %arg6[%c0_9, %c0_10] : memref<1x128xf32, #tpu.memory_space<vmem>>, vector<1x128xf32>
    %12 = vector.broadcast %11 : vector<1x128xf32> to vector<128x128xf32>
    %13 = arith.addf %10, %12 : vector<128x128xf32>
    %cst_11 = arith.constant 0.000000e+00 : f32
    %14 = vector.broadcast %cst_11 : f32 to vector<128x128xf32>
    %15 = arith.maximumf %13, %14 : vector<128x128xf32>
    %16 = arith.truncf %15 : vector<128x128xf32> to vector<128x128xbf16>
    %c0_12 = arith.constant 0 : index
    %c0_13 = arith.constant 0 : index
    %17 = vector.load %arg7[%c0_12, %c0_13] : memref<128x256xbf16, #tpu.memory_space<vmem>>, vector<128x256xbf16>
    %cst_14 = arith.constant dense<0.000000e+00> : vector<128x256xf32>
    %18 = tpu.matmul %16, %17, %cst_14 {dimension_numbers = #tpu.dot_dimension_numbers<[1], [0], [0], [1], [0, 0, 1, 1], [], []>} : vector<128x128xbf16>, vector<128x256xbf16>, vector<128x256xf32> -> vector<128x256xf32>
    %c0_15 = arith.constant 0 : index
    %c0_16 = arith.constant 0 : index
    %19 = vector.load %arg8[%c0_15, %c0_16] : memref<1x256xf32, #tpu.memory_space<vmem>>, vector<1x256xf32>
    %20 = vector.broadcast %19 : vector<1x256xf32> to vector<128x256xf32>
    %21 = arith.addf %18, %20 : vector<128x256xf32>
    %22 = vector.extract_strided_slice %21 {offsets = [0, 0], sizes = [128, 128], strides = [1, 1]} : vector<128x256xf32> to vector<128x128xf32>
    %23 = vector.extract_strided_slice %21 {offsets = [0, 128], sizes = [128, 128], strides = [1, 1]} : vector<128x256xf32> to vector<128x128xf32>
    %cst_17 = arith.constant 0.000000e+00 : f32
    %24 = vector.broadcast %cst_17 : f32 to vector<128x128xf32>
    %25 = arith.maximumf %23, %24 : vector<128x128xf32>
    %26 = vector.broadcast %cst_17 : f32 to vector<128x128xf32>
    %27 = arith.subf %23, %26 : vector<128x128xf32>
    %28 = arith.cmpf one, %27, %27 : vector<128x128xf32>
    %29 = vector.broadcast %cst_17 : f32 to vector<128x128xf32>
    %30 = arith.addf %23, %29 : vector<128x128xf32>
    %31 = math.absf %27 : vector<128x128xf32>
    %cst_18 = arith.constant 0.000000e+00 : f32
    %32 = vector.broadcast %cst_18 : f32 to vector<128x128xf32>
    %33 = arith.subf %32, %31 : vector<128x128xf32>
    %34 = math.exp %33 : vector<128x128xf32>
    %35 = math.log1p %34 : vector<128x128xf32>
    %36 = arith.addf %25, %35 : vector<128x128xf32>
    %37 = arith.select %28, %30, %36 : vector<128x128xi1>, vector<128x128xf32>
    %c0_19 = arith.constant 0 : index
    %c0_20 = arith.constant 0 : index
    %38 = vector.load %arg2[%c0_19, %c0_20] : memref<128x128xf32, #tpu.memory_space<vmem>>, vector<128x128xf32>
    %39 = arith.mulf %37, %38 : vector<128x128xf32>
    %40 = arith.addf %22, %39 : vector<128x128xf32>
    %41 = arith.truncf %40 : vector<128x128xf32> to vector<128x128xbf16>
    %c0_21 = arith.constant 0 : index
    %c0_22 = arith.constant 0 : index
    %42 = vector.load %arg9[%c0_21, %c0_22] : memref<128x128xbf16, #tpu.memory_space<vmem>>, vector<128x128xbf16>
    %cst_23 = arith.constant dense<0.000000e+00> : vector<128x128xf32>
    %43 = tpu.matmul %41, %42, %cst_23 {dimension_numbers = #tpu.dot_dimension_numbers<[1], [0], [0], [1], [0, 0, 1, 1], [], []>} : vector<128x128xbf16>, vector<128x128xbf16>, vector<128x128xf32> -> vector<128x128xf32>
    %c0_24 = arith.constant 0 : index
    %c0_25 = arith.constant 0 : index
    %44 = vector.load %arg10[%c0_24, %c0_25] : memref<1x128xf32, #tpu.memory_space<vmem>>, vector<1x128xf32>
    %45 = vector.broadcast %44 : vector<1x128xf32> to vector<128x128xf32>
    %46 = arith.addf %43, %45 : vector<128x128xf32>
    %cst_26 = arith.constant 0.000000e+00 : f32
    %47 = vector.broadcast %cst_26 : f32 to vector<128x128xf32>
    %48 = arith.maximumf %46, %47 : vector<128x128xf32>
    %49 = arith.truncf %48 : vector<128x128xf32> to vector<128x128xbf16>
    %c0_27 = arith.constant 0 : index
    %c0_28 = arith.constant 0 : index
    %50 = vector.load %arg11[%c0_27, %c0_28] : memref<128x128xbf16, #tpu.memory_space<vmem>>, vector<128x128xbf16>
    %cst_29 = arith.constant dense<0.000000e+00> : vector<128x128xf32>
    %51 = tpu.matmul %49, %50, %cst_29 {dimension_numbers = #tpu.dot_dimension_numbers<[1], [0], [0], [1], [0, 0, 1, 1], [], []>} : vector<128x128xbf16>, vector<128x128xbf16>, vector<128x128xf32> -> vector<128x128xf32>
    %c0_30 = arith.constant 0 : index
    %c0_31 = arith.constant 0 : index
    %52 = vector.load %arg12[%c0_30, %c0_31] : memref<1x128xf32, #tpu.memory_space<vmem>>, vector<1x128xf32>
    %53 = vector.broadcast %52 : vector<1x128xf32> to vector<128x128xf32>
    %54 = arith.addf %51, %53 : vector<128x128xf32>
    %cst_32 = arith.constant 0.000000e+00 : f32
    %55 = vector.broadcast %cst_32 : f32 to vector<128x128xf32>
    %56 = arith.maximumf %54, %55 : vector<128x128xf32>
    %57 = arith.truncf %56 : vector<128x128xf32> to vector<128x128xbf16>
    %c0_33 = arith.constant 0 : index
    %c0_34 = arith.constant 0 : index
    %58 = vector.load %arg13[%c0_33, %c0_34] : memref<128x896xbf16, #tpu.memory_space<vmem>>, vector<128x896xbf16>
    %cst_35 = arith.constant dense<0.000000e+00> : vector<128x896xf32>
    %59 = tpu.matmul %57, %58, %cst_35 {dimension_numbers = #tpu.dot_dimension_numbers<[1], [0], [0], [1], [0, 0, 1, 1], [], []>} : vector<128x128xbf16>, vector<128x896xbf16>, vector<128x896xf32> -> vector<128x896xf32>
    %c0_36 = arith.constant 0 : index
    %c0_37 = arith.constant 0 : index
    %60 = vector.load %arg14[%c0_36, %c0_37] : memref<1x896xf32, #tpu.memory_space<vmem>>, vector<1x896xf32>
    %61 = vector.broadcast %60 : vector<1x896xf32> to vector<128x896xf32>
    %62 = arith.addf %59, %61 : vector<128x896xf32>
    %c0_38 = arith.constant 0 : index
    %c0_39 = arith.constant 0 : index
    %63 = vector.load %arg15[%c0_38, %c0_39] : memref<128x128xf32, #tpu.memory_space<vmem>>, vector<128x128xf32>
    tpu.vector_store %arg15[%c0_38, %c0_39], %22 {strides = array<i32>} : memref<128x128xf32, #tpu.memory_space<vmem>>, vector<128x128xf32>,
    %c0_40 = arith.constant 0 : index
    %c0_41 = arith.constant 0 : index
    %64 = vector.load %arg16[%c0_40, %c0_41] : memref<128x128xf32, #tpu.memory_space<vmem>>, vector<128x128xf32>
    tpu.vector_store %arg16[%c0_40, %c0_41], %37 {strides = array<i32>} : memref<128x128xf32, #tpu.memory_space<vmem>>, vector<128x128xf32>,
    %c0_42 = arith.constant 0 : index
    %c0_43 = arith.constant 0 : index
    %65 = vector.load %arg17[%c0_42, %c0_43] : memref<128x128xf32, #tpu.memory_space<vmem>>, vector<128x128xf32>
    tpu.vector_store %arg17[%c0_42, %c0_43], %40 {strides = array<i32>} : memref<128x128xf32, #tpu.memory_space<vmem>>, vector<128x128xf32>,
    %c0_44 = arith.constant 0 : index
    %c0_45 = arith.constant 0 : index
    %66 = vector.load %arg18[%c0_44, %c0_45] : memref<128x896xf32, #tpu.memory_space<vmem>>, vector<128x896xf32>
    tpu.vector_store %arg18[%c0_44, %c0_45], %62 {strides = array<i32>} : memref<128x896xf32, #tpu.memory_space<vmem>>, vector<128x896xf32>,
    return
  }
  func.func @transform_0(%arg0: i32) -> (i32, i32) {
    %c0_i32 = arith.constant 0 : i32
    %c0_i32_0 = arith.constant 0 : i32
    return %arg0, %c0_i32 : i32, i32
  }
  func.func @transform_1(%arg0: i32) -> (i32, i32) {
    %c0_i32 = arith.constant 0 : i32
    %c0_i32_0 = arith.constant 0 : i32
    return %arg0, %c0_i32 : i32, i32
  }
  func.func @transform_2(%arg0: i32) -> (i32, i32) {
    %c0_i32 = arith.constant 0 : i32
    %c0_i32_0 = arith.constant 0 : i32
    %c0_i32_1 = arith.constant 0 : i32
    return %c0_i32, %c0_i32_0 : i32, i32
  }
  func.func @transform_3(%arg0: i32) -> (i32, i32) {
    %c0_i32 = arith.constant 0 : i32
    %c0_i32_0 = arith.constant 0 : i32
    %c0_i32_1 = arith.constant 0 : i32
    return %c0_i32, %c0_i32_0 : i32, i32
  }
  func.func @transform_4(%arg0: i32) -> (i32, i32) {
    %c0_i32 = arith.constant 0 : i32
    %c0_i32_0 = arith.constant 0 : i32
    %c0_i32_1 = arith.constant 0 : i32
    return %c0_i32, %c0_i32_0 : i32, i32
  }
  func.func @transform_5(%arg0: i32) -> (i32, i32) {
    %c0_i32 = arith.constant 0 : i32
    %c0_i32_0 = arith.constant 0 : i32
    %c0_i32_1 = arith.constant 0 : i32
    return %c0_i32, %c0_i32_0 : i32, i32
  }
  func.func @transform_6(%arg0: i32) -> (i32, i32) {
    %c0_i32 = arith.constant 0 : i32
    %c0_i32_0 = arith.constant 0 : i32
    %c0_i32_1 = arith.constant 0 : i32
    return %c0_i32, %c0_i32_0 : i32, i32
  }
  func.func @transform_7(%arg0: i32) -> (i32, i32) {
    %c0_i32 = arith.constant 0 : i32
    %c0_i32_0 = arith.constant 0 : i32
    %c0_i32_1 = arith.constant 0 : i32
    return %c0_i32, %c0_i32_0 : i32, i32
  }
  func.func @transform_8(%arg0: i32) -> (i32, i32) {
    %c0_i32 = arith.constant 0 : i32
    %c0_i32_0 = arith.constant 0 : i32
    %c0_i32_1 = arith.constant 0 : i32
    return %c0_i32, %c0_i32_0 : i32, i32
  }
  func.func @transform_9(%arg0: i32) -> (i32, i32) {
    %c0_i32 = arith.constant 0 : i32
    %c0_i32_0 = arith.constant 0 : i32
    %c0_i32_1 = arith.constant 0 : i32
    return %c0_i32, %c0_i32_0 : i32, i32
  }
  func.func @transform_10(%arg0: i32) -> (i32, i32) {
    %c0_i32 = arith.constant 0 : i32
    %c0_i32_0 = arith.constant 0 : i32
    %c0_i32_1 = arith.constant 0 : i32
    return %c0_i32, %c0_i32_0 : i32, i32
  }
  func.func @transform_11(%arg0: i32) -> (i32, i32) {
    %c0_i32 = arith.constant 0 : i32
    %c0_i32_0 = arith.constant 0 : i32
    %c0_i32_1 = arith.constant 0 : i32
    return %c0_i32, %c0_i32_0 : i32, i32
  }
  func.func @transform_12(%arg0: i32) -> (i32, i32) {
    %c0_i32 = arith.constant 0 : i32
    %c0_i32_0 = arith.constant 0 : i32
    %c0_i32_1 = arith.constant 0 : i32
    return %c0_i32, %c0_i32_0 : i32, i32
  }
  func.func @transform_13(%arg0: i32) -> (i32, i32) {
    %c0_i32 = arith.constant 0 : i32
    %c0_i32_0 = arith.constant 0 : i32
    %c0_i32_1 = arith.constant 0 : i32
    return %c0_i32, %c0_i32_0 : i32, i32
  }
  func.func @transform_14(%arg0: i32) -> (i32, i32) {
    %c0_i32 = arith.constant 0 : i32
    %c0_i32_0 = arith.constant 0 : i32
    return %arg0, %c0_i32 : i32, i32
  }
  func.func @transform_15(%arg0: i32) -> (i32, i32) {
    %c0_i32 = arith.constant 0 : i32
    %c0_i32_0 = arith.constant 0 : i32
    return %arg0, %c0_i32 : i32, i32
  }
  func.func @transform_16(%arg0: i32) -> (i32, i32) {
    %c0_i32 = arith.constant 0 : i32
    %c0_i32_0 = arith.constant 0 : i32
    return %arg0, %c0_i32 : i32, i32
  }
  func.func @transform_17(%arg0: i32) -> (i32, i32) {
    %c0_i32 = arith.constant 0 : i32
    %c0_i32_0 = arith.constant 0 : i32
    return %arg0, %c0_i32 : i32, i32
  }
}

</mosaic_0001>

<llo_original>
// kernel: vae_forward.1
$region0: #{vae_forward.1}
  #allocation0 [shape = 'u32[]', space=smem, size = 0x4, offset = 0x4, fixed_abs, tag = 'smem constant byte address 0x4 - core index']
  #allocation1 [shape = 'u32[72,128]{1,0:T(1,128)}', space=vmem, size = 0x9000, scoped, tag = 'internal scratch']
  %s0 = inlined_call_operand.vmem [shape: bf16[256,896], index: 0, kind: input, shape index: {}]
  %s1 = inlined_call_operand.vmem [shape: f32[256,128], index: 1, kind: input, shape index: {}]
  %s2 = inlined_call_operand.vmem [shape: bf16[896,128], index: 2, kind: input, shape index: {}]
  %s3 = inlined_call_operand.vmem [shape: f32[1,128], index: 3, kind: input, shape index: {}]
  %s4 = inlined_call_operand.vmem [shape: bf16[128,128], index: 4, kind: input, shape index: {}]
  %s5 = inlined_call_operand.vmem [shape: f32[1,128], index: 5, kind: input, shape index: {}]
  %s6 = inlined_call_operand.vmem [shape: bf16[128,256], index: 6, kind: input, shape index: {}]
  %s7 = inlined_call_operand.vmem [shape: f32[1,256], index: 7, kind: input, shape index: {}]
  %s8 = inlined_call_operand.vmem [shape: bf16[128,128], index: 8, kind: input, shape index: {}]
  %s9 = inlined_call_operand.vmem [shape: f32[1,128], index: 9, kind: input, shape index: {}]
  %s10 = inlined_call_operand.vmem [shape: bf16[128,128], index: 10, kind: input, shape index: {}]
  %s11 = inlined_call_operand.vmem [shape: f32[1,128], index: 11, kind: input, shape index: {}]
  %s12 = inlined_call_operand.vmem [shape: bf16[128,896], index: 12, kind: input, shape index: {}]
  %s13 = inlined_call_operand.vmem [shape: f32[1,896], index: 13, kind: input, shape index: {}]
  %s14 = inlined_call_operand.vmem [shape: f32[256,128], index: 14, kind: output, shape index: {0}]
  %s15 = inlined_call_operand.vmem [shape: f32[256,128], index: 15, kind: output, shape index: {1}]
  %s16 = inlined_call_operand.vmem [shape: f32[256,128], index: 16, kind: output, shape index: {2}]
  %s17 = inlined_call_operand.vmem [shape: f32[256,896], index: 17, kind: output, shape index: {3}]
  %18 = xla_tuple %s14, %s15, %s16, %s17
  %s19 = sld [smem:[#allocation0]]
  $region113: #{vae_forward.1} parent=0
    _
  %s21 = ssub.s32 1, %s19
  %s22 = scalar_select 0, %s21, %s19
  loop: start=0, step=1, limit=4
  $region2: #{vae_forward.1} parent=0 // loop_pre_header
    _
  $region3: #{vae_forward.1} parent=0 // loop_header
    %s24 = sphi 0, %s28
    %p25 = scmp.ge.s32.totalorder %s24, 4
    %s34 = sphi 0, %s36
    %s37 = sphi 0, %s34
    %s38 = sphi 0, %s37
    %s54 = sphi 0, %s38
    %s60 = sphi 0, %s62
    %s63 = sphi 0, %s60
    %s64 = sphi 0, %s63
    %s80 = sphi 0, %s64
    %s84 = sphi 0, %s84
    %s86 = sphi 0, %s84
    %s87 = sphi 0, %s86
    %s101 = sphi 0, %s87
    %s105 = sphi 0, %s105
    %s107 = sphi 0, %s105
    %s108 = sphi 0, %s107
    %s122 = sphi 0, %s108
    %s126 = sphi 0, %s126
    %s128 = sphi 0, %s126
    %s129 = sphi 0, %s128
    %s143 = sphi 0, %s129
    %s147 = sphi 0, %s147
    %s149 = sphi 0, %s147
    %s150 = sphi 0, %s149
    %s164 = sphi 0, %s150
    %s168 = sphi 0, %s168
    %s170 = sphi 0, %s168
    %s171 = sphi 0, %s170
    %s185 = sphi 0, %s171
    %s189 = sphi 0, %s189
    %s191 = sphi 0, %s189
    %s192 = sphi 0, %s191
    %s206 = sphi 0, %s192
    %s210 = sphi 0, %s210
    %s212 = sphi 0, %s210
    %s213 = sphi 0, %s212
    %s227 = sphi 0, %s213
    %s231 = sphi 0, %s231
    %s233 = sphi 0, %s231
    %s234 = sphi 0, %s233
    %s248 = sphi 0, %s234
    %s252 = sphi 0, %s252
    %s254 = sphi 0, %s252
    %s255 = sphi 0, %s254
    %s269 = sphi 0, %s255
    %s273 = sphi 0, %s273
    %s275 = sphi 0, %s273
    %s276 = sphi 0, %s275
    %s290 = sphi 0, %s276
    %s294 = sphi 0, %s294
    %s296 = sphi 0, %s294
    %s297 = sphi 0, %s296
    %s311 = sphi 0, %s297
    %s315 = sphi 0, %s315
    %s317 = sphi 0, %s315
    %s318 = sphi 0, %s317
    %s332 = sphi 0, %s318
    %s338 = sphi 0, %s340
    %s341 = sphi 0, %s338
    %s342 = sphi 0, %s341
    %s358 = sphi 0, %s342
    %s364 = sphi 0, %s366
    %s367 = sphi 0, %s364
    %s368 = sphi 0, %s367
    %s384 = sphi 0, %s368
    %s390 = sphi 0, %s392
    %s393 = sphi 0, %s390
    %s394 = sphi 0, %s393
    %s410 = sphi 0, %s394
    %s416 = sphi 0, %s418
    %s419 = sphi 0, %s416
    %s420 = sphi 0, %s419
    %s436 = sphi 0, %s420
  $region4: #{vae_forward.1} parent=0 // loop_header_branch
    %27 = sbr.rel (%p25) target = $region8
  $region5: #{vae_forward.1} parent=0 // loop_body
    %s29 = ssub.s32 %s24, 1
    %s30 = ssub.s32 %s24, 2
    %s31 = sadd.s32 %s24, 1
    %s32 = ssub.s32 %s24, %s31
    %p33 = scmp.eq.s32.totalorder %s32, 0
    %s35 = sadd.s32 %s34, 1
    %s36 = scalar_select %p33, %s34, %s35
    %p39 = pneg %p33
    %p40 = scmp.eq.s32.totalorder %s24, 1
    %p41 = por %p39, %p40
    %p42 = scmp.ne.s32.totalorder %s34, %s37
    %p43 = scmp.eq.s32.totalorder %s24, 0
    %p44 = por %p42, %p43
    %p45 = scmp.ne.s32.totalorder %s34, %s37
    %p46 = scmp.eq.s32.totalorder %s29, 1
    %p47 = por %p45, %p46
    %p48 = scmp.ne.s32.totalorder %s37, %s38
    %p49 = scmp.eq.s32.totalorder %s29, 0
    %p50 = por %p48, %p49
    %p51 = scmp.ne.s32.totalorder %s37, %s38
    %p52 = scmp.eq.s32.totalorder %s30, 1
    %p53 = por %p51, %p52
    %p55 = scmp.ne.s32.totalorder %s38, %s54
    %p56 = scmp.eq.s32.totalorder %s30, 0
    %p57 = por %p55, %p56
    %s58 = ssub.s32 %s24, %s31
    %p59 = scmp.eq.s32.totalorder %s58, 0
    %s61 = sadd.s32 %s60, 1
    %s62 = scalar_select %p59, %s60, %s61
    %p65 = pneg %p59
    %p66 = scmp.eq.s32.totalorder %s24, 1
    %p67 = por %p65, %p66
    %p68 = scmp.ne.s32.totalorder %s60, %s63
    %p69 = scmp.eq.s32.totalorder %s24, 0
    %p70 = por %p68, %p69
    %p71 = scmp.ne.s32.totalorder %s60, %s63
    %p72 = scmp.eq.s32.totalorder %s29, 1
    %p73 = por %p71, %p72
    %p74 = scmp.ne.s32.totalorder %s63, %s64
    %p75 = scmp.eq.s32.totalorder %s29, 0
    %p76 = por %p74, %p75
    %p77 = scmp.ne.s32.totalorder %s63, %s64
    %p78 = scmp.eq.s32.totalorder %s30, 1
    %p79 = por %p77, %p78
    %p81 = scmp.ne.s32.totalorder %s64, %s80
    %p82 = scmp.eq.s32.totalorder %s30, 0
    %p83 = por %p81, %p82
    %s85 = sadd.s32 %s84, 1
    %p88 = scmp.eq.s32.totalorder %s24, 1
    %p89 = scmp.ne.s32.totalorder %s84, %s86
    %p90 = scmp.eq.s32.totalorder %s24, 0
    %p91 = por %p89, %p90
    %p92 = scmp.ne.s32.totalorder %s84, %s86
    %p93 = scmp.eq.s32.totalorder %s29, 1
    %p94 = por %p92, %p93
    %p95 = scmp.ne.s32.totalorder %s86, %s87
    %p96 = scmp.eq.s32.totalorder %s29, 0
    %p97 = por %p95, %p96
    %p98 = scmp.ne.s32.totalorder %s86, %s87
    %p99 = scmp.eq.s32.totalorder %s30, 1
    %p100 = por %p98, %p99
    %p102 = scmp.ne.s32.totalorder %s87, %s101
    %p103 = scmp.eq.s32.totalorder %s30, 0
    %p104 = por %p102, %p103
    %s106 = sadd.s32 %s105, 1
    %p109 = scmp.eq.s32.totalorder %s24, 1
    %p110 = scmp.ne.s32.totalorder %s105, %s107
    %p111 = scmp.eq.s32.totalorder %s24, 0
    %p112 = por %p110, %p111
    %p113 = scmp.ne.s32.totalorder %s105, %s107
    %p114 = scmp.eq.s32.totalorder %s29, 1
    %p115 = por %p113, %p114
    %p116 = scmp.ne.s32.totalorder %s107, %s108
    %p117 = scmp.eq.s32.totalorder %s29, 0
    %p118 = por %p116, %p117
    %p119 = scmp.ne.s32.totalorder %s107, %s108
    %p120 = scmp.eq.s32.totalorder %s30, 1
    %p121 = por %p119, %p120
    %p123 = scmp.ne.s32.totalorder %s108, %s122
    %p124 = scmp.eq.s32.totalorder %s30, 0
    %p125 = por %p123, %p124
    %s127 = sadd.s32 %s126, 1
    %p130 = scmp.eq.s32.totalorder %s24, 1
    %p131 = scmp.ne.s32.totalorder %s126, %s128
    %p132 = scmp.eq.s32.totalorder %s24, 0
    %p133 = por %p131, %p132
    %p134 = scmp.ne.s32.totalorder %s126, %s128
    %p135 = scmp.eq.s32.totalorder %s29, 1
    %p136 = por %p134, %p135
    %p137 = scmp.ne.s32.totalorder %s128, %s129
    %p138 = scmp.eq.s32.totalorder %s29, 0
    %p139 = por %p137, %p138
    %p140 = scmp.ne.s32.totalorder %s128, %s129
    %p141 = scmp.eq.s32.totalorder %s30, 1
    %p142 = por %p140, %p141
    %p144 = scmp.ne.s32.totalorder %s129, %s143
    %p145 = scmp.eq.s32.totalorder %s30, 0
    %p146 = por %p144, %p145
    %s148 = sadd.s32 %s147, 1
    %p151 = scmp.eq.s32.totalorder %s24, 1
    %p152 = scmp.ne.s32.totalorder %s147, %s149
    %p153 = scmp.eq.s32.totalorder %s24, 0
    %p154 = por %p152, %p153
    %p155 = scmp.ne.s32.totalorder %s147, %s149
    %p156 = scmp.eq.s32.totalorder %s29, 1
    %p157 = por %p155, %p156
    %p158 = scmp.ne.s32.totalorder %s149, %s150
    %p159 = scmp.eq.s32.totalorder %s29, 0
    %p160 = por %p158, %p159
    %p161 = scmp.ne.s32.totalorder %s149, %s150
    %p162 = scmp.eq.s32.totalorder %s30, 1
    %p163 = por %p161, %p162
    %p165 = scmp.ne.s32.totalorder %s150, %s164
    %p166 = scmp.eq.s32.totalorder %s30, 0
    %p167 = por %p165, %p166
    %s169 = sadd.s32 %s168, 1
    %p172 = scmp.eq.s32.totalorder %s24, 1
    %p173 = scmp.ne.s32.totalorder %s168, %s170
    %p174 = scmp.eq.s32.totalorder %s24, 0
    %p175 = por %p173, %p174
    %p176 = scmp.ne.s32.totalorder %s168, %s170
    %p177 = scmp.eq.s32.totalorder %s29, 1
    %p178 = por %p176, %p177
    %p179 = scmp.ne.s32.totalorder %s170, %s171
    %p180 = scmp.eq.s32.totalorder %s29, 0
    %p181 = por %p179, %p180
    %p182 = scmp.ne.s32.totalorder %s170, %s171
    %p183 = scmp.eq.s32.totalorder %s30, 1
    %p184 = por %p182, %p183
    %p186 = scmp.ne.s32.totalorder %s171, %s185
    %p187 = scmp.eq.s32.totalorder %s30, 0
    %p188 = por %p186, %p187
    %s190 = sadd.s32 %s189, 1
    %p193 = scmp.eq.s32.totalorder %s24, 1
    %p194 = scmp.ne.s32.totalorder %s189, %s191
    %p195 = scmp.eq.s32.totalorder %s24, 0
    %p196 = por %p194, %p195
    %p197 = scmp.ne.s32.totalorder %s189, %s191
    %p198 = scmp.eq.s32.totalorder %s29, 1
    %p199 = por %p197, %p198
    %p200 = scmp.ne.s32.totalorder %s191, %s192
    %p201 = scmp.eq.s32.totalorder %s29, 0
    %p202 = por %p200, %p201
    %p203 = scmp.ne.s32.totalorder %s191, %s192
    %p204 = scmp.eq.s32.totalorder %s30, 1
    %p205 = por %p203, %p204
    %p207 = scmp.ne.s32.totalorder %s192, %s206
    %p208 = scmp.eq.s32.totalorder %s30, 0
    %p209 = por %p207, %p208
    %s211 = sadd.s32 %s210, 1
    %p214 = scmp.eq.s32.totalorder %s24, 1
    %p215 = scmp.ne.s32.totalorder %s210, %s212
    %p216 = scmp.eq.s32.totalorder %s24, 0
    %p217 = por %p215, %p216
    %p218 = scmp.ne.s32.totalorder %s210, %s212
    %p219 = scmp.eq.s32.totalorder %s29, 1
    %p220 = por %p218, %p219
    %p221 = scmp.ne.s32.totalorder %s212, %s213
    %p222 = scmp.eq.s32.totalorder %s29, 0
    %p223 = por %p221, %p222
    %p224 = scmp.ne.s32.totalorder %s212, %s213
    %p225 = scmp.eq.s32.totalorder %s30, 1
    %p226 = por %p224, %p225
    %p228 = scmp.ne.s32.totalorder %s213, %s227
    %p229 = scmp.eq.s32.totalorder %s30, 0
    %p230 = por %p228, %p229
    %s232 = sadd.s32 %s231, 1
    %p235 = scmp.eq.s32.totalorder %s24, 1
    %p236 = scmp.ne.s32.totalorder %s231, %s233
    %p237 = scmp.eq.s32.totalorder %s24, 0
    %p238 = por %p236, %p237
    %p239 = scmp.ne.s32.totalorder %s231, %s233
    %p240 = scmp.eq.s32.totalorder %s29, 1
    %p241 = por %p239, %p240
    %p242 = scmp.ne.s32.totalorder %s233, %s234
    %p243 = scmp.eq.s32.totalorder %s29, 0
    %p244 = por %p242, %p243
    %p245 = scmp.ne.s32.totalorder %s233, %s234
    %p246 = scmp.eq.s32.totalorder %s30, 1
    %p247 = por %p245, %p246
    %p249 = scmp.ne.s32.totalorder %s234, %s248
    %p250 = scmp.eq.s32.totalorder %s30, 0
    %p251 = por %p249, %p250
    %s253 = sadd.s32 %s252, 1
    %p256 = scmp.eq.s32.totalorder %s24, 1
    %p257 = scmp.ne.s32.totalorder %s252, %s254
    %p258 = scmp.eq.s32.totalorder %s24, 0
    %p259 = por %p257, %p258
    %p260 = scmp.ne.s32.totalorder %s252, %s254
    %p261 = scmp.eq.s32.totalorder %s29, 1
    %p262 = por %p260, %p261
    %p263 = scmp.ne.s32.totalorder %s254, %s255
    %p264 = scmp.eq.s32.totalorder %s29, 0
    %p265 = por %p263, %p264
    %p266 = scmp.ne.s32.totalorder %s254, %s255
    %p267 = scmp.eq.s32.totalorder %s30, 1
    %p268 = por %p266, %p267
    %p270 = scmp.ne.s32.totalorder %s255, %s269
    %p271 = scmp.eq.s32.totalorder %s30, 0
    %p272 = por %p270, %p271
    %s274 = sadd.s32 %s273, 1
    %p277 = scmp.eq.s32.totalorder %s24, 1
    %p278 = scmp.ne.s32.totalorder %s273, %s275
    %p279 = scmp.eq.s32.totalorder %s24, 0
    %p280 = por %p278, %p279
    %p281 = scmp.ne.s32.totalorder %s273, %s275
    %p282 = scmp.eq.s32.totalorder %s29, 1
    %p283 = por %p281, %p282
    %p284 = scmp.ne.s32.totalorder %s275, %s276
    %p285 = scmp.eq.s32.totalorder %s29, 0
    %p286 = por %p284, %p285
    %p287 = scmp.ne.s32.totalorder %s275, %s276
    %p288 = scmp.eq.s32.totalorder %s30, 1
    %p289 = por %p287, %p288
    %p291 = scmp.ne.s32.totalorder %s276, %s290
    %p292 = scmp.eq.s32.totalorder %s30, 0
    %p293 = por %p291, %p292
    %s295 = sadd.s32 %s294, 1
    %p298 = scmp.eq.s32.totalorder %s24, 1
    %p299 = scmp.ne.s32.totalorder %s294, %s296
    %p300 = scmp.eq.s32.totalorder %s24, 0
    %p301 = por %p299, %p300
    %p302 = scmp.ne.s32.totalorder %s294, %s296
    %p303 = scmp.eq.s32.totalorder %s29, 1
    %p304 = por %p302, %p303
    %p305 = scmp.ne.s32.totalorder %s296, %s297
    %p306 = scmp.eq.s32.totalorder %s29, 0
    %p307 = por %p305, %p306
    %p308 = scmp.ne.s32.totalorder %s296, %s297
    %p309 = scmp.eq.s32.totalorder %s30, 1
    %p310 = por %p308, %p309
    %p312 = scmp.ne.s32.totalorder %s297, %s311
    %p313 = scmp.eq.s32.totalorder %s30, 0
    %p314 = por %p312, %p313
    %s316 = sadd.s32 %s315, 1
    %p319 = scmp.eq.s32.totalorder %s24, 1
    %p320 = scmp.ne.s32.totalorder %s315, %s317
    %p321 = scmp.eq.s32.totalorder %s24, 0
    %p322 = por %p320, %p321
    %p323 = scmp.ne.s32.totalorder %s315, %s317
    %p324 = scmp.eq.s32.totalorder %s29, 1
    %p325 = por %p323, %p324
    %p326 = scmp.ne.s32.totalorder %s317, %s318
    %p327 = scmp.eq.s32.totalorder %s29, 0
    %p328 = por %p326, %p327
    %p329 = scmp.ne.s32.totalorder %s317, %s318
    %p330 = scmp.eq.s32.totalorder %s30, 1
    %p331 = por %p329, %p330
    %p333 = scmp.ne.s32.totalorder %s318, %s332
    %p334 = scmp.eq.s32.totalorder %s30, 0
    %p335 = por %p333, %p334
    %s336 = ssub.s32 %s24, %s31
    %p337 = scmp.eq.s32.totalorder %s336, 0
    %s339 = sadd.s32 %s338, 1
    %s340 = scalar_select %p337, %s338, %s339
    %p343 = pneg %p337
    %p344 = scmp.eq.s32.totalorder %s24, 1
    %p345 = por %p343, %p344
    %p346 = scmp.ne.s32.totalorder %s338, %s341
    %p347 = scmp.eq.s32.totalorder %s24, 0
    %p348 = por %p346, %p347
    %p349 = scmp.ne.s32.totalorder %s338, %s341
    %p350 = scmp.eq.s32.totalorder %s29, 1
    %p351 = por %p349, %p350
    %p352 = scmp.ne.s32.totalorder %s341, %s342
    %p353 = scmp.eq.s32.totalorder %s29, 0
    %p354 = por %p352, %p353
    %p355 = scmp.ne.s32.totalorder %s341, %s342
    %p356 = scmp.eq.s32.totalorder %s30, 1
    %p357 = por %p355, %p356
    %p359 = scmp.ne.s32.totalorder %s342, %s358
    %p360 = scmp.eq.s32.totalorder %s30, 0
    %p361 = por %p359, %p360
    %s362 = ssub.s32 %s24, %s31
    %p363 = scmp.eq.s32.totalorder %s362, 0
    %s365 = sadd.s32 %s364, 1
    %s366 = scalar_select %p363, %s364, %s365
    %p369 = pneg %p363
    %p370 = scmp.eq.s32.totalorder %s24, 1
    %p371 = por %p369, %p370
    %p372 = scmp.ne.s32.totalorder %s364, %s367
    %p373 = scmp.eq.s32.totalorder %s24, 0
    %p374 = por %p372, %p373
    %p375 = scmp.ne.s32.totalorder %s364, %s367
    %p376 = scmp.eq.s32.totalorder %s29, 1
    %p377 = por %p375, %p376
    %p378 = scmp.ne.s32.totalorder %s367, %s368
    %p379 = scmp.eq.s32.totalorder %s29, 0
    %p380 = por %p378, %p379
    %p381 = scmp.ne.s32.totalorder %s367, %s368
    %p382 = scmp.eq.s32.totalorder %s30, 1
    %p383 = por %p381, %p382
    %p385 = scmp.ne.s32.totalorder %s368, %s384
    %p386 = scmp.eq.s32.totalorder %s30, 0
    %p387 = por %p385, %p386
    %s388 = ssub.s32 %s24, %s31
    %p389 = scmp.eq.s32.totalorder %s388, 0
    %s391 = sadd.s32 %s390, 1
    %s392 = scalar_select %p389, %s390, %s391
    %p395 = pneg %p389
    %p396 = scmp.eq.s32.totalorder %s24, 1
    %p397 = por %p395, %p396
    %p398 = scmp.ne.s32.totalorder %s390, %s393
    %p399 = scmp.eq.s32.totalorder %s24, 0
    %p400 = por %p398, %p399
    %p401 = scmp.ne.s32.totalorder %s390, %s393
    %p402 = scmp.eq.s32.totalorder %s29, 1
    %p403 = por %p401, %p402
    %p404 = scmp.ne.s32.totalorder %s393, %s394
    %p405 = scmp.eq.s32.totalorder %s29, 0
    %p406 = por %p404, %p405
    %p407 = scmp.ne.s32.totalorder %s393, %s394
    %p408 = scmp.eq.s32.totalorder %s30, 1
    %p409 = por %p407, %p408
    %p411 = scmp.ne.s32.totalorder %s394, %s410
    %p412 = scmp.eq.s32.totalorder %s30, 0
    %p413 = por %p411, %p412
    %s414 = ssub.s32 %s24, %s31
    %p415 = scmp.eq.s32.totalorder %s414, 0
    %s417 = sadd.s32 %s416, 1
    %s418 = scalar_select %p415, %s416, %s417
    %p421 = pneg %p415
    %p422 = scmp.eq.s32.totalorder %s24, 1
    %p423 = por %p421, %p422
    %p424 = scmp.ne.s32.totalorder %s416, %s419
    %p425 = scmp.eq.s32.totalorder %s24, 0
    %p426 = por %p424, %p425
    %p427 = scmp.ne.s32.totalorder %s416, %s419
    %p428 = scmp.eq.s32.totalorder %s29, 1
    %p429 = por %p427, %p428
    %p430 = scmp.ne.s32.totalorder %s419, %s420
    %p431 = scmp.eq.s32.totalorder %s29, 0
    %p432 = por %p430, %p431
    %p433 = scmp.ne.s32.totalorder %s419, %s420
    %p434 = scmp.eq.s32.totalorder %s30, 1
    %p435 = por %p433, %p434
    %p437 = scmp.ne.s32.totalorder %s420, %s436
    %p438 = scmp.eq.s32.totalorder %s30, 0
    %p439 = por %p437, %p438
    %p440 = scmp.le.s32.totalorder 1, %s24
    %p441 = scmp.lt.s32.totalorder %s24, 3
    %p442 = pnand %p440, %p441
    %p443 = pneg %p442
    // Predicated region
    $region9: #{vae_forward.1} parent=5 // pred_check
      _
    $region10: #{vae_forward.1} parent=5 // pred_check_branch
      %445 = sbr.rel (%p442) target = $region12
    $region11: #{vae_forward.1} parent=5 // pred_region
      %s446 = ssub.s32 %s24, 1
      // Predicated region
      $region13: #{vae_forward.1} parent=11 // pred_check
        %p447 = pneg %p97
      $region14: #{vae_forward.1} parent=11 // pred_check_branch
        %449 = sbr.rel (%p447) target = $region16
      $region15: #{vae_forward.1} parent=11 // pred_region
        _
      $region16: #{vae_forward.1} parent=11 // pred_fallthru
        _
      // Predicated region
      $region17: #{vae_forward.1} parent=11 // pred_check
        %p450 = pneg %p118
      $region18: #{vae_forward.1} parent=11 // pred_check_branch
        %452 = sbr.rel (%p450) target = $region20
      $region19: #{vae_forward.1} parent=11 // pred_region
        _
      $region20: #{vae_forward.1} parent=11 // pred_fallthru
        _
      // Predicated region
      $region21: #{vae_forward.1} parent=11 // pred_check
        %p453 = pneg %p139
      $region22: #{vae_forward.1} parent=11 // pred_check_branch
        %455 = sbr.rel (%p453) target = $region24
      $region23: #{vae_forward.1} parent=11 // pred_region
        _
      $region24: #{vae_forward.1} parent=11 // pred_fallthru
        _
      // Predicated region
      $region25: #{vae_forward.1} parent=11 // pred_check
        %p456 = pneg %p160
      $region26: #{vae_forward.1} parent=11 // pred_check_branch
        %458 = sbr.rel (%p456) target = $region28
      $region27: #{vae_forward.1} parent=11 // pred_region
        _
      $region28: #{vae_forward.1} parent=11 // pred_fallthru
        _
      // Predicated region
      $region29: #{vae_forward.1} parent=11 // pred_check
        %p459 = pneg %p181
      $region30: #{vae_forward.1} parent=11 // pred_check_branch
        %461 = sbr.rel (%p459) target = $region32
      $region31: #{vae_forward.1} parent=11 // pred_region
        _
      $region32: #{vae_forward.1} parent=11 // pred_fallthru
        _
      // Predicated region
      $region33: #{vae_forward.1} parent=11 // pred_check
        %p462 = pneg %p202
      $region34: #{vae_forward.1} parent=11 // pred_check_branch
        %464 = sbr.rel (%p462) target = $region36
      $region35: #{vae_forward.1} parent=11 // pred_region
        _
      $region36: #{vae_forward.1} parent=11 // pred_fallthru
        _
      // Predicated region
      $region37: #{vae_forward.1} parent=11 // pred_check
        %p465 = pneg %p223
      $region38: #{vae_forward.1} parent=11 // pred_check_branch
        %467 = sbr.rel (%p465) target = $region40
      $region39: #{vae_forward.1} parent=11 // pred_region
        _
      $region40: #{vae_forward.1} parent=11 // pred_fallthru
        _
      // Predicated region
      $region41: #{vae_forward.1} parent=11 // pred_check
        %p468 = pneg %p244
      $region42: #{vae_forward.1} parent=11 // pred_check_branch
        %470 = sbr.rel (%p468) target = $region44
      $region43: #{vae_forward.1} parent=11 // pred_region
        _
      $region44: #{vae_forward.1} parent=11 // pred_fallthru
        _
      // Predicated region
      $region45: #{vae_forward.1} parent=11 // pred_check
        %p471 = pneg %p265
      $region46: #{vae_forward.1} parent=11 // pred_check_branch
        %473 = sbr.rel (%p471) target = $region48
      $region47: #{vae_forward.1} parent=11 // pred_region
        _
      $region48: #{vae_forward.1} parent=11 // pred_fallthru
        _
      // Predicated region
      $region49: #{vae_forward.1} parent=11 // pred_check
        %p474 = pneg %p286
      $region50: #{vae_forward.1} parent=11 // pred_check_branch
        %476 = sbr.rel (%p474) target = $region52
      $region51: #{vae_forward.1} parent=11 // pred_region
        _
      $region52: #{vae_forward.1} parent=11 // pred_fallthru
        _
      // Predicated region
      $region53: #{vae_forward.1} parent=11 // pred_check
        %p477 = pneg %p307
      $region54: #{vae_forward.1} parent=11 // pred_check_branch
        %479 = sbr.rel (%p477) target = $region56
      $region55: #{vae_forward.1} parent=11 // pred_region
        _
      $region56: #{vae_forward.1} parent=11 // pred_fallthru
        _
      // Predicated region
      $region57: #{vae_forward.1} parent=11 // pred_check
        %p480 = pneg %p328
      $region58: #{vae_forward.1} parent=11 // pred_check_branch
        %482 = sbr.rel (%p480) target = $region60
      $region59: #{vae_forward.1} parent=11 // pred_region
        _
      $region60: #{vae_forward.1} parent=11 // pred_fallthru
        _
    $region12: #{vae_forward.1} parent=5 // pred_fallthru
      _
    %p483 = scmp.lt.s32.totalorder %s24, 2
    // Predicated region
    $region61: #{vae_forward.1} parent=5 // pred_check
      %p484 = pneg %p483
    $region62: #{vae_forward.1} parent=5 // pred_check_branch
      %486 = sbr.rel (%p484) target = $region64
    $region63: #{vae_forward.1} parent=5 // pred_region
      // Predicated region
      $region65: #{vae_forward.1} parent=63 // pred_check
        %p487 = pneg %p44
      $region66: #{vae_forward.1} parent=63 // pred_check_branch
        %489 = sbr.rel (%p487) target = $region68
      $region67: #{vae_forward.1} parent=63 // pred_region
        %s490 = smul.u32 16, %s24
        %p491 = scmp.lt.s32.totalorder %s490, 31
        %s492 = scalar_select %p491, %s490, 31
        %s493 = smul.addr %s492, 7
        %s494 = smul.addr %s493, 4
        %s495 = scalar_lea.vmem %s0, %s494
        %s496 = smul.u32 16, %s24
      $region68: #{vae_forward.1} parent=63 // pred_fallthru
        _
      // Predicated region
      $region69: #{vae_forward.1} parent=63 // pred_check
        %p497 = pneg %p70
      $region70: #{vae_forward.1} parent=63 // pred_check_branch
        %499 = sbr.rel (%p497) target = $region72
      $region71: #{vae_forward.1} parent=63 // pred_region
        %s500 = smul.u32 16, %s24
        %p501 = scmp.lt.s32.totalorder %s500, 31
        %s502 = scalar_select %p501, %s500, 31
        %s503 = smul.addr %s502, 8
        %s504 = scalar_lea.vmem %s1, %s503
        %s505 = smul.u32 16, %s24
      $region72: #{vae_forward.1} parent=63 // pred_fallthru
        _
    $region64: #{vae_forward.1} parent=5 // pred_fallthru
      _
    %p506 = scmp.le.s32.totalorder 1, %s24
    %p507 = scmp.lt.s32.totalorder %s24, 3
    %p508 = pnand %p506, %p507
    %p509 = pneg %p508
    // Predicated region
    $region73: #{vae_forward.1} parent=5 // pred_check
      _
    $region74: #{vae_forward.1} parent=5 // pred_check_branch
      %511 = sbr.rel (%p508) target = $region76
    $region75: #{vae_forward.1} parent=5 // pred_region
      %s512 = ssub.s32 %s24, 1
      %s513 = smul.u32 16, %s29
      %p514 = scmp.lt.s32.totalorder %s513, 31
      %s515 = scalar_select %p514, %s513, 31
      %s516 = smul.addr %s515, 7
      %s517 = smul.addr %s516, 4
      %s518 = scalar_lea.vmem %s0, %s517
      %p519 = pneg %p50
      %p520 = pneg %p47
      %s521 = smul.u32 16, %s29
      %p522 = scmp.lt.s32.totalorder %s521, 31
      %s523 = scalar_select %p522, %s521, 31
      %s524 = smul.addr %s523, 8
      %s525 = scalar_lea.vmem %s1, %s524
      %p526 = pneg %p76
      %p527 = pneg %p73
      %p528 = pneg %p97
      %p529 = pneg %p94
      %p530 = pneg %p118
      %p531 = pneg %p115
      %p532 = pneg %p139
      %p533 = pneg %p136
      %p534 = pneg %p160
      %p535 = pneg %p157
      %p536 = pneg %p181
      %p537 = pneg %p178
      %p538 = pneg %p202
      %p539 = pneg %p199
      %p540 = pneg %p223
      %p541 = pneg %p220
      %p542 = pneg %p244
      %p543 = pneg %p241
      %p544 = pneg %p265
      %p545 = pneg %p262
      %p546 = pneg %p286
      %p547 = pneg %p283
      %p548 = pneg %p307
      %p549 = pneg %p304
      %p550 = pneg %p328
      %p551 = pneg %p325
      %p552 = pneg %p354
      %p553 = pneg %p351
      %s554 = smul.u32 16, %s29
      %p555 = scmp.lt.s32.totalorder %s554, 31
      %s556 = scalar_select %p555, %s554, 31
      %s557 = smul.addr %s556, 8
      %s558 = scalar_lea.vmem %s14, %s557
      %p559 = pneg %p380
      %p560 = pneg %p377
      %s561 = smul.u32 16, %s29
      %p562 = scmp.lt.s32.totalorder %s561, 31
      %s563 = scalar_select %p562, %s561, 31
      %s564 = smul.addr %s563, 8
      %s565 = scalar_lea.vmem %s15, %s564
      %p566 = pneg %p406
      %p567 = pneg %p403
      %s568 = smul.u32 16, %s29
      %p569 = scmp.lt.s32.totalorder %s568, 31
      %s570 = scalar_select %p569, %s568, 31
      %s571 = smul.addr %s570, 8
      %s572 = scalar_lea.vmem %s16, %s571
      %p573 = pneg %p432
      %p574 = pneg %p429
      %s575 = smul.u32 16, %s29
      %p576 = scmp.lt.s32.totalorder %s575, 31
      %s577 = scalar_select %p576, %s575, 31
      %s578 = smul.addr %s577, 7
      %s579 = smul.addr %s578, 8
      %s580 = scalar_lea.vmem %s17, %s579
      %s581 = smul.u32 16, %s29
      %p582 = scmp.lt.s32.totalorder %s581, 31
      %s583 = scalar_select %p582, %s581, 31
      %s584 = smul.addr %s583, 7
      %s585 = smul.addr %s584, 4
      %s586 = scalar_lea.vmem %s0, %s585
      %s587 = smul.u32 16, %s29
      %s588 = smul.u32 16, %s29
      %p589 = scmp.lt.s32.totalorder %s588, 31
      %s590 = scalar_select %p589, %s588, 31
      %s591 = smul.addr %s590, 8
      %s592 = scalar_lea.vmem %s1, %s591
      %s593 = smul.u32 16, %s29
      %s594 = smul.u32 16, %s29
      %p595 = scmp.lt.s32.totalorder %s594, 31
      %s596 = scalar_select %p595, %s594, 31
      %s597 = smul.addr %s596, 8
      %s598 = scalar_lea.vmem %s14, %s597
      %s599 = smul.u32 16, %s29
      %s600 = smul.u32 16, %s29
      %p601 = scmp.lt.s32.totalorder %s600, 31
      %s602 = scalar_select %p601, %s600, 31
      %s603 = smul.addr %s602, 8
      %s604 = scalar_lea.vmem %s15, %s603
      %s605 = smul.u32 16, %s29
      %s606 = smul.u32 16, %s29
      %p607 = scmp.lt.s32.totalorder %s606, 31
      %s608 = scalar_select %p607, %s606, 31
      %s609 = smul.addr %s608, 8
      %s610 = scalar_lea.vmem %s16, %s609
      %s611 = smul.u32 16, %s29
      %s612 = smul.u32 16, %s29
      %p613 = scmp.lt.s32.totalorder %s612, 31
      %s614 = scalar_select %p613, %s612, 31
      %s615 = smul.addr %s614, 7
      %s616 = smul.addr %s615, 8
      %s617 = scalar_lea.vmem %s17, %s616
      %s618 = smul.u32 16, %s29
      %v619 = vld [vmem:[%s586] sm:$0xff]
      %v620 = vld [vmem:[%s586 + $0x8] sm:$0xff]
      %v621 = vld [vmem:[%s586 + $0x10] sm:$0xff]
      %v622 = vld [vmem:[%s586 + $0x18] sm:$0xf]
      %v623 = vld [vmem:[%s586 + $0x1c] sm:$0xff]
      %v624 = vld [vmem:[%s586 + $0x24] sm:$0xff]
      %v625 = vld [vmem:[%s586 + $0x2c] sm:$0xff]
      %v626 = vld [vmem:[%s586 + $0x34] sm:$0xf]
      %v627 = vld [vmem:[%s586 + $0x38] sm:$0xff]
      %v628 = vld [vmem:[%s586 + $0x40] sm:$0xff]
      %v629 = vld [vmem:[%s586 + $0x48] sm:$0xff]
      %v630 = vld [vmem:[%s586 + $0x50] sm:$0xf]
      %v631 = vld [vmem:[%s586 + $0x54] sm:$0xff]
      %v632 = vld [vmem:[%s586 + $0x5c] sm:$0xff]
      %v633 = vld [vmem:[%s586 + $0x64] sm:$0xff]
      %v634 = vld [vmem:[%s586 + $0x6c] sm:$0xf]
      %v635 = vld [vmem:[%s586 + $0x70] sm:$0xff]
      %v636 = vld [vmem:[%s586 + $0x78] sm:$0xff]
      %v637 = vld [vmem:[%s586 + $0x80] sm:$0xff]
      %v638 = vld [vmem:[%s586 + $0x88] sm:$0xf]
      %v639 = vld [vmem:[%s586 + $0x8c] sm:$0xff]
      %v640 = vld [vmem:[%s586 + $0x94] sm:$0xff]
      %v641 = vld [vmem:[%s586 + $0x9c] sm:$0xff]
      %v642 = vld [vmem:[%s586 + $0xa4] sm:$0xf]
      %v643 = vld [vmem:[%s586 + $0xa8] sm:$0xff]
      %v644 = vld [vmem:[%s586 + $0xb0] sm:$0xff]
      %v645 = vld [vmem:[%s586 + $0xb8] sm:$0xff]
      %v646 = vld [vmem:[%s586 + $0xc0] sm:$0xf]
      %v647 = vld [vmem:[%s586 + $0xc4] sm:$0xff]
      %v648 = vld [vmem:[%s586 + $0xcc] sm:$0xff]
      %v649 = vld [vmem:[%s586 + $0xd4] sm:$0xff]
      %v650 = vld [vmem:[%s586 + $0xdc] sm:$0xf]
      %v651 = vld [vmem:[%s586 + $0xe0] sm:$0xff]
      %v652 = vld [vmem:[%s586 + $0xe8] sm:$0xff]
      %v653 = vld [vmem:[%s586 + $0xf0] sm:$0xff]
      %v654 = vld [vmem:[%s586 + $0xf8] sm:$0xf]
      %v655 = vld [vmem:[%s586 + $0xfc] sm:$0xff]
      %v656 = vld [vmem:[%s586 + $0x104] sm:$0xff]
      %v657 = vld [vmem:[%s586 + $0x10c] sm:$0xff]
      %v658 = vld [vmem:[%s586 + $0x114] sm:$0xf]
      %v659 = vld [vmem:[%s586 + $0x118] sm:$0xff]
      %v660 = vld [vmem:[%s586 + $0x120] sm:$0xff]
      %v661 = vld [vmem:[%s586 + $0x128] sm:$0xff]
      %v662 = vld [vmem:[%s586 + $0x130] sm:$0xf]
      %v663 = vld [vmem:[%s586 + $0x134] sm:$0xff]
      %v664 = vld [vmem:[%s586 + $0x13c] sm:$0xff]
      %v665 = vld [vmem:[%s586 + $0x144] sm:$0xff]
      %v666 = vld [vmem:[%s586 + $0x14c] sm:$0xf]
      %v667 = vld [vmem:[%s586 + $0x150] sm:$0xff]
      %v668 = vld [vmem:[%s586 + $0x158] sm:$0xff]
      %v669 = vld [vmem:[%s586 + $0x160] sm:$0xff]
      %v670 = vld [vmem:[%s586 + $0x168] sm:$0xf]
      %v671 = vld [vmem:[%s586 + $0x16c] sm:$0xff]
      %v672 = vld [vmem:[%s586 + $0x174] sm:$0xff]
      %v673 = vld [vmem:[%s586 + $0x17c] sm:$0xff]
      %v674 = vld [vmem:[%s586 + $0x184] sm:$0xf]
      %v675 = vld [vmem:[%s586 + $0x188] sm:$0xff]
      %v676 = vld [vmem:[%s586 + $0x190] sm:$0xff]
      %v677 = vld [vmem:[%s586 + $0x198] sm:$0xff]
      %v678 = vld [vmem:[%s586 + $0x1a0] sm:$0xf]
      %v679 = vld [vmem:[%s586 + $0x1a4] sm:$0xff]
      %v680 = vld [vmem:[%s586 + $0x1ac] sm:$0xff]
      %v681 = vld [vmem:[%s586 + $0x1b4] sm:$0xff]
      %v682 = vld [vmem:[%s586 + $0x1bc] sm:$0xf]
      %v683 = vld [vmem:[%s2] sm:$0xf]
      %v684 = vld [vmem:[%s2 + $0x4] sm:$0xf]
      %v685 = vld [vmem:[%s2 + $0x8] sm:$0xf]
      %v686 = vld [vmem:[%s2 + $0xc] sm:$0xf]
      %v687 = vld [vmem:[%s2 + $0x10] sm:$0xf]
      %v688 = vld [vmem:[%s2 + $0x14] sm:$0xf]
      %v689 = vld [vmem:[%s2 + $0x18] sm:$0xf]
      %v690 = vld [vmem:[%s2 + $0x1c] sm:$0xf]
      %v691 = vld [vmem:[%s2 + $0x20] sm:$0xf]
      %v692 = vld [vmem:[%s2 + $0x24] sm:$0xf]
      %v693 = vld [vmem:[%s2 + $0x28] sm:$0xf]
      %v694 = vld [vmem:[%s2 + $0x2c] sm:$0xf]
      %v695 = vld [vmem:[%s2 + $0x30] sm:$0xf]
      %v696 = vld [vmem:[%s2 + $0x34] sm:$0xf]
      %v697 = vld [vmem:[%s2 + $0x38] sm:$0xf]
      %v698 = vld [vmem:[%s2 + $0x3c] sm:$0xf]
      %v699 = vld [vmem:[%s2 + $0x40] sm:$0xf]
      %v700 = vld [vmem:[%s2 + $0x44] sm:$0xf]
      %v701 = vld [vmem:[%s2 + $0x48] sm:$0xf]
      %v702 = vld [vmem:[%s2 + $0x4c] sm:$0xf]
      %v703 = vld [vmem:[%s2 + $0x50] sm:$0xf]
      %v704 = vld [vmem:[%s2 + $0x54] sm:$0xf]
      %v705 = vld [vmem:[%s2 + $0x58] sm:$0xf]
      %v706 = vld [vmem:[%s2 + $0x5c] sm:$0xf]
      %v707 = vld [vmem:[%s2 + $0x60] sm:$0xf]
      %v708 = vld [vmem:[%s2 + $0x64] sm:$0xf]
      %v709 = vld [vmem:[%s2 + $0x68] sm:$0xf]
      %v710 = vld [vmem:[%s2 + $0x6c] sm:$0xf]
      %v711 = vld [vmem:[%s2 + $0x70] sm:$0xf]
      %v712 = vld [vmem:[%s2 + $0x74] sm:$0xf]
      %v713 = vld [vmem:[%s2 + $0x78] sm:$0xf]
      %v714 = vld [vmem:[%s2 + $0x7c] sm:$0xf]
      %v715 = vld [vmem:[%s2 + $0x80] sm:$0xf]
      %v716 = vld [vmem:[%s2 + $0x84] sm:$0xf]
      %v717 = vld [vmem:[%s2 + $0x88] sm:$0xf]
      %v718 = vld [vmem:[%s2 + $0x8c] sm:$0xf]
      %v719 = vld [vmem:[%s2 + $0x90] sm:$0xf]
      %v720 = vld [vmem:[%s2 + $0x94] sm:$0xf]
      %v721 = vld [vmem:[%s2 + $0x98] sm:$0xf]
      %v722 = vld [vmem:[%s2 + $0x9c] sm:$0xf]
      %v723 = vld [vmem:[%s2 + $0xa0] sm:$0xf]
      %v724 = vld [vmem:[%s2 + $0xa4] sm:$0xf]
      %v725 = vld [vmem:[%s2 + $0xa8] sm:$0xf]
      %v726 = vld [vmem:[%s2 + $0xac] sm:$0xf]
      %v727 = vld [vmem:[%s2 + $0xb0] sm:$0xf]
      %v728 = vld [vmem:[%s2 + $0xb4] sm:$0xf]
      %v729 = vld [vmem:[%s2 + $0xb8] sm:$0xf]
      %v730 = vld [vmem:[%s2 + $0xbc] sm:$0xf]
      %v731 = vld [vmem:[%s2 + $0xc0] sm:$0xf]
      %v732 = vld [vmem:[%s2 + $0xc4] sm:$0xf]
      %v733 = vld [vmem:[%s2 + $0xc8] sm:$0xf]
      %v734 = vld [vmem:[%s2 + $0xcc] sm:$0xf]
      %v735 = vld [vmem:[%s2 + $0xd0] sm:$0xf]
      %v736 = vld [vmem:[%s2 + $0xd4] sm:$0xf]
      %v737 = vld [vmem:[%s2 + $0xd8] sm:$0xf]
      %v738 = vld [vmem:[%s2 + $0xdc] sm:$0xf]
      %v739 = vld [vmem:[%s2 + $0xe0] sm:$0xf]
      %v740 = vld [vmem:[%s2 + $0xe4] sm:$0xf]
      %v741 = vld [vmem:[%s2 + $0xe8] sm:$0xf]
      %v742 = vld [vmem:[%s2 + $0xec] sm:$0xf]
      %v743 = vld [vmem:[%s2 + $0xf0] sm:$0xf]
      %v744 = vld [vmem:[%s2 + $0xf4] sm:$0xf]
      %v745 = vld [vmem:[%s2 + $0xf8] sm:$0xf]
      %v746 = vld [vmem:[%s2 + $0xfc] sm:$0xf]
      %v747 = vld [vmem:[%s2 + $0x100] sm:$0xf]
      %v748 = vld [vmem:[%s2 + $0x104] sm:$0xf]
      %v749 = vld [vmem:[%s2 + $0x108] sm:$0xf]
      %v750 = vld [vmem:[%s2 + $0x10c] sm:$0xf]
      %v751 = vld [vmem:[%s2 + $0x110] sm:$0xf]
      %v752 = vld [vmem:[%s2 + $0x114] sm:$0xf]
      %v753 = vld [vmem:[%s2 + $0x118] sm:$0xf]
      %v754 = vld [vmem:[%s2 + $0x11c] sm:$0xf]
      %v755 = vld [vmem:[%s2 + $0x120] sm:$0xf]
      %v756 = vld [vmem:[%s2 + $0x124] sm:$0xf]
      %v757 = vld [vmem:[%s2 + $0x128] sm:$0xf]
      %v758 = vld [vmem:[%s2 + $0x12c] sm:$0xf]
      %v759 = vld [vmem:[%s2 + $0x130] sm:$0xf]
      %v760 = vld [vmem:[%s2 + $0x134] sm:$0xf]
      %v761 = vld [vmem:[%s2 + $0x138] sm:$0xf]
      %v762 = vld [vmem:[%s2 + $0x13c] sm:$0xf]
      %v763 = vld [vmem:[%s2 + $0x140] sm:$0xf]
      %v764 = vld [vmem:[%s2 + $0x144] sm:$0xf]
      %v765 = vld [vmem:[%s2 + $0x148] sm:$0xf]
      %v766 = vld [vmem:[%s2 + $0x14c] sm:$0xf]
      %v767 = vld [vmem:[%s2 + $0x150] sm:$0xf]
      %v768 = vld [vmem:[%s2 + $0x154] sm:$0xf]
      %v769 = vld [vmem:[%s2 + $0x158] sm:$0xf]
      %v770 = vld [vmem:[%s2 + $0x15c] sm:$0xf]
      %v771 = vld [vmem:[%s2 + $0x160] sm:$0xf]
      %v772 = vld [vmem:[%s2 + $0x164] sm:$0xf]
      %v773 = vld [vmem:[%s2 + $0x168] sm:$0xf]
      %v774 = vld [vmem:[%s2 + $0x16c] sm:$0xf]
      %v775 = vld [vmem:[%s2 + $0x170] sm:$0xf]
      %v776 = vld [vmem:[%s2 + $0x174] sm:$0xf]
      %v777 = vld [vmem:[%s2 + $0x178] sm:$0xf]
      %v778 = vld [vmem:[%s2 + $0x17c] sm:$0xf]
      %v779 = vld [vmem:[%s2 + $0x180] sm:$0xf]
      %v780 = vld [vmem:[%s2 + $0x184] sm:$0xf]
      %v781 = vld [vmem:[%s2 + $0x188] sm:$0xf]
      %v782 = vld [vmem:[%s2 + $0x18c] sm:$0xf]
      %v783 = vld [vmem:[%s2 + $0x190] sm:$0xf]
      %v784 = vld [vmem:[%s2 + $0x194] sm:$0xf]
      %v785 = vld [vmem:[%s2 + $0x198] sm:$0xf]
      %v786 = vld [vmem:[%s2 + $0x19c] sm:$0xf]
      %v787 = vld [vmem:[%s2 + $0x1a0] sm:$0xf]
      %v788 = vld [vmem:[%s2 + $0x1a4] sm:$0xf]
      %v789 = vld [vmem:[%s2 + $0x1a8] sm:$0xf]
      %v790 = vld [vmem:[%s2 + $0x1ac] sm:$0xf]
      %v791 = vld [vmem:[%s2 + $0x1b0] sm:$0xf]
      %v792 = vld [vmem:[%s2 + $0x1b4] sm:$0xf]
      %v793 = vld [vmem:[%s2 + $0x1b8] sm:$0xf]
      %v794 = vld [vmem:[%s2 + $0x1bc] sm:$0xf]
      %v795 = vld [vmem:[%s3] sm:$0x1]
      %v797 = vperm.slane %v795, 0
      %v863 = vunpack.c.l.b16 %v619
      %v864 = vunpack.c.h.b16 %v619
      %v865 = vunpack.c.l.b16 %v620
      %v866 = vunpack.c.h.b16 %v620
      %v867 = vunpack.c.l.b16 %v621
      %v868 = vunpack.c.h.b16 %v621
      %v869 = vunpack.c.l.b16 %v622
      %v870 = vunpack.c.l.b16 %v623
      %v871 = vunpack.c.h.b16 %v623
      %v872 = vunpack.c.l.b16 %v624
      %v873 = vunpack.c.h.b16 %v624
      %v874 = vunpack.c.l.b16 %v625
      %v875 = vunpack.c.h.b16 %v625
      %v876 = vunpack.c.l.b16 %v626
      %v877 = vunpack.c.l.b16 %v627
      %v878 = vunpack.c.h.b16 %v627
      %v879 = vunpack.c.l.b16 %v628
      %v880 = vunpack.c.h.b16 %v628
      %v881 = vunpack.c.l.b16 %v629
      %v882 = vunpack.c.h.b16 %v629
      %v883 = vunpack.c.l.b16 %v630
      %v884 = vunpack.c.l.b16 %v631
      %v885 = vunpack.c.h.b16 %v631
      %v886 = vunpack.c.l.b16 %v632
      %v887 = vunpack.c.h.b16 %v632
      %v888 = vunpack.c.l.b16 %v633
      %v889 = vunpack.c.h.b16 %v633
      %v890 = vunpack.c.l.b16 %v634
      %v891 = vunpack.c.l.b16 %v635
      %v892 = vunpack.c.h.b16 %v635
      %v893 = vunpack.c.l.b16 %v636
      %v894 = vunpack.c.h.b16 %v636
      %v895 = vunpack.c.l.b16 %v637
      %v896 = vunpack.c.h.b16 %v637
      %v897 = vunpack.c.l.b16 %v638
      %v898 = vunpack.c.l.b16 %v639
      %v899 = vunpack.c.h.b16 %v639
      %v900 = vunpack.c.l.b16 %v640
      %v901 = vunpack.c.h.b16 %v640
      %v902 = vunpack.c.l.b16 %v641
      %v903 = vunpack.c.h.b16 %v641
      %v904 = vunpack.c.l.b16 %v642
      %v905 = vunpack.c.l.b16 %v643
      %v906 = vunpack.c.h.b16 %v643
      %v907 = vunpack.c.l.b16 %v644
      %v908 = vunpack.c.h.b16 %v644
      %v909 = vunpack.c.l.b16 %v645
      %v910 = vunpack.c.h.b16 %v645
      %v911 = vunpack.c.l.b16 %v646
      %v912 = vunpack.c.l.b16 %v647
      %v913 = vunpack.c.h.b16 %v647
      %v914 = vunpack.c.l.b16 %v648
      %v915 = vunpack.c.h.b16 %v648
      %v916 = vunpack.c.l.b16 %v649
      %v917 = vunpack.c.h.b16 %v649
      %v918 = vunpack.c.l.b16 %v650
      %v919 = vunpack.c.l.b16 %v651
      %v920 = vunpack.c.h.b16 %v651
      %v921 = vunpack.c.l.b16 %v652
      %v922 = vunpack.c.h.b16 %v652
      %v923 = vunpack.c.l.b16 %v653
      %v924 = vunpack.c.h.b16 %v653
      %v925 = vunpack.c.l.b16 %v654
      %v926 = vunpack.c.l.b16 %v655
      %v927 = vunpack.c.h.b16 %v655
      %v928 = vunpack.c.l.b16 %v656
      %v929 = vunpack.c.h.b16 %v656
      %v930 = vunpack.c.l.b16 %v657
      %v931 = vunpack.c.h.b16 %v657
      %v932 = vunpack.c.l.b16 %v658
      %v933 = vunpack.c.l.b16 %v659
      %v934 = vunpack.c.h.b16 %v659
      %v935 = vunpack.c.l.b16 %v660
      %v936 = vunpack.c.h.b16 %v660
      %v937 = vunpack.c.l.b16 %v661
      %v938 = vunpack.c.h.b16 %v661
      %v939 = vunpack.c.l.b16 %v662
      %v940 = vunpack.c.l.b16 %v663
      %v941 = vunpack.c.h.b16 %v663
      %v942 = vunpack.c.l.b16 %v664
      %v943 = vunpack.c.h.b16 %v664
      %v944 = vunpack.c.l.b16 %v665
      %v945 = vunpack.c.h.b16 %v665
      %v946 = vunpack.c.l.b16 %v666
      %v947 = vunpack.c.l.b16 %v667
      %v948 = vunpack.c.h.b16 %v667
      %v949 = vunpack.c.l.b16 %v668
      %v950 = vunpack.c.h.b16 %v668
      %v951 = vunpack.c.l.b16 %v669
      %v952 = vunpack.c.h.b16 %v669
      %v953 = vunpack.c.l.b16 %v670
      %v954 = vunpack.c.l.b16 %v671
      %v955 = vunpack.c.h.b16 %v671
      %v956 = vunpack.c.l.b16 %v672
      %v957 = vunpack.c.h.b16 %v672
      %v958 = vunpack.c.l.b16 %v673
      %v959 = vunpack.c.h.b16 %v673
      %v960 = vunpack.c.l.b16 %v674
      %v961 = vunpack.c.l.b16 %v675
      %v962 = vunpack.c.h.b16 %v675
      %v963 = vunpack.c.l.b16 %v676
      %v964 = vunpack.c.h.b16 %v676
      %v965 = vunpack.c.l.b16 %v677
      %v966 = vunpack.c.h.b16 %v677
      %v967 = vunpack.c.l.b16 %v678
      %v968 = vunpack.c.l.b16 %v679
      %v969 = vunpack.c.h.b16 %v679
      %v970 = vunpack.c.l.b16 %v680
      %v971 = vunpack.c.h.b16 %v680
      %v972 = vunpack.c.l.b16 %v681
      %v973 = vunpack.c.h.b16 %v681
      %v974 = vunpack.c.l.b16 %v682
      %v975 = vpack.c.b16 %v870, %v863
      %v976 = vpack.c.b16 %v871, %v864
      %v977 = vpack.c.b16 %v872, %v865
      %v978 = vpack.c.b16 %v873, %v866
      %v979 = vpack.c.b16 %v874, %v867
      %v980 = vpack.c.b16 %v875, %v868
      %v981 = vpack.c.b16 %v876, %v869
      %v982 = vpack.c.b16 %v884, %v877
      %v983 = vpack.c.b16 %v885, %v878
      %v984 = vpack.c.b16 %v886, %v879
      %v985 = vpack.c.b16 %v887, %v880
      %v986 = vpack.c.b16 %v888, %v881
      %v987 = vpack.c.b16 %v889, %v882
      %v988 = vpack.c.b16 %v890, %v883
      %v989 = vpack.c.b16 %v898, %v891
      %v990 = vpack.c.b16 %v899, %v892
      %v991 = vpack.c.b16 %v900, %v893
      %v992 = vpack.c.b16 %v901, %v894
      %v993 = vpack.c.b16 %v902, %v895
      %v994 = vpack.c.b16 %v903, %v896
      %v995 = vpack.c.b16 %v904, %v897
      %v996 = vpack.c.b16 %v912, %v905
      %v997 = vpack.c.b16 %v913, %v906
      %v998 = vpack.c.b16 %v914, %v907
      %v999 = vpack.c.b16 %v915, %v908
      %v1000 = vpack.c.b16 %v916, %v909
      %v1001 = vpack.c.b16 %v917, %v910
      %v1002 = vpack.c.b16 %v918, %v911
      %v1003 = vpack.c.b16 %v926, %v919
      %v1004 = vpack.c.b16 %v927, %v920
      %v1005 = vpack.c.b16 %v928, %v921
      %v1006 = vpack.c.b16 %v929, %v922
      %v1007 = vpack.c.b16 %v930, %v923
      %v1008 = vpack.c.b16 %v931, %v924
      %v1009 = vpack.c.b16 %v932, %v925
      %v1010 = vpack.c.b16 %v940, %v933
      %v1011 = vpack.c.b16 %v941, %v934
      %v1012 = vpack.c.b16 %v942, %v935
      %v1013 = vpack.c.b16 %v943, %v936
      %v1014 = vpack.c.b16 %v944, %v937
      %v1015 = vpack.c.b16 %v945, %v938
      %v1016 = vpack.c.b16 %v946, %v939
      %v1017 = vpack.c.b16 %v954, %v947
      %v1018 = vpack.c.b16 %v955, %v948
      %v1019 = vpack.c.b16 %v956, %v949
      %v1020 = vpack.c.b16 %v957, %v950
      %v1021 = vpack.c.b16 %v958, %v951
      %v1022 = vpack.c.b16 %v959, %v952
      %v1023 = vpack.c.b16 %v960, %v953
      %v1024 = vpack.c.b16 %v968, %v961
      %v1025 = vpack.c.b16 %v969, %v962
      %v1026 = vpack.c.b16 %v970, %v963
      %v1027 = vpack.c.b16 %v971, %v964
      %v1028 = vpack.c.b16 %v972, %v965
      %v1029 = vpack.c.b16 %v973, %v966
      %v1030 = vpack.c.b16 %v974, %v967
      %v1199 = vunpack.c.l.b16 %v683
      %v1200 = vunpack.c.l.b16 %v684
      %v1201 = vunpack.c.l.b16 %v685
      %v1202 = vunpack.c.l.b16 %v686
      %v1203 = vunpack.c.l.b16 %v687
      %v1204 = vunpack.c.l.b16 %v688
      %v1205 = vunpack.c.l.b16 %v689
      %v1206 = vunpack.c.l.b16 %v690
      %v1207 = vunpack.c.l.b16 %v691
      %v1208 = vunpack.c.l.b16 %v692
      %v1209 = vunpack.c.l.b16 %v693
      %v1210 = vunpack.c.l.b16 %v694
      %v1211 = vunpack.c.l.b16 %v695
      %v1212 = vunpack.c.l.b16 %v696
      %v1213 = vunpack.c.l.b16 %v697
      %v1214 = vunpack.c.l.b16 %v698
      %v1215 = vunpack.c.l.b16 %v699
      %v1216 = vunpack.c.l.b16 %v700
      %v1217 = vunpack.c.l.b16 %v701
      %v1218 = vunpack.c.l.b16 %v702
      %v1219 = vunpack.c.l.b16 %v703
      %v1220 = vunpack.c.l.b16 %v704
      %v1221 = vunpack.c.l.b16 %v705
      %v1222 = vunpack.c.l.b16 %v706
      %v1223 = vunpack.c.l.b16 %v707
      %v1224 = vunpack.c.l.b16 %v708
      %v1225 = vunpack.c.l.b16 %v709
      %v1226 = vunpack.c.l.b16 %v710
      %v1227 = vunpack.c.l.b16 %v711
      %v1228 = vunpack.c.l.b16 %v712
      %v1229 = vunpack.c.l.b16 %v713
      %v1230 = vunpack.c.l.b16 %v714
      %v1231 = vunpack.c.l.b16 %v715
      %v1232 = vunpack.c.l.b16 %v716
      %v1233 = vunpack.c.l.b16 %v717
      %v1234 = vunpack.c.l.b16 %v718
      %v1235 = vunpack.c.l.b16 %v719
      %v1236 = vunpack.c.l.b16 %v720
      %v1237 = vunpack.c.l.b16 %v721
      %v1238 = vunpack.c.l.b16 %v722
      %v1239 = vunpack.c.l.b16 %v723
      %v1240 = vunpack.c.l.b16 %v724
      %v1241 = vunpack.c.l.b16 %v725
      %v1242 = vunpack.c.l.b16 %v726
      %v1243 = vunpack.c.l.b16 %v727
      %v1244 = vunpack.c.l.b16 %v728
      %v1245 = vunpack.c.l.b16 %v729
      %v1246 = vunpack.c.l.b16 %v730
      %v1247 = vunpack.c.l.b16 %v731
      %v1248 = vunpack.c.l.b16 %v732
      %v1249 = vunpack.c.l.b16 %v733
      %v1250 = vunpack.c.l.b16 %v734
      %v1251 = vunpack.c.l.b16 %v735
      %v1252 = vunpack.c.l.b16 %v736
      %v1253 = vunpack.c.l.b16 %v737
      %v1254 = vunpack.c.l.b16 %v738
      %v1255 = vunpack.c.l.b16 %v739
      %v1256 = vunpack.c.l.b16 %v740
      %v1257 = vunpack.c.l.b16 %v741
      %v1258 = vunpack.c.l.b16 %v742
      %v1259 = vunpack.c.l.b16 %v743
      %v1260 = vunpack.c.l.b16 %v744
      %v1261 = vunpack.c.l.b16 %v745
      %v1262 = vunpack.c.l.b16 %v746
      %v1263 = vunpack.c.l.b16 %v747
      %v1264 = vunpack.c.l.b16 %v748
      %v1265 = vunpack.c.l.b16 %v749
      %v1266 = vunpack.c.l.b16 %v750
      %v1267 = vunpack.c.l.b16 %v751
      %v1268 = vunpack.c.l.b16 %v752
      %v1269 = vunpack.c.l.b16 %v753
      %v1270 = vunpack.c.l.b16 %v754
      %v1271 = vunpack.c.l.b16 %v755
      %v1272 = vunpack.c.l.b16 %v756
      %v1273 = vunpack.c.l.b16 %v757
      %v1274 = vunpack.c.l.b16 %v758
      %v1275 = vunpack.c.l.b16 %v759
      %v1276 = vunpack.c.l.b16 %v760
      %v1277 = vunpack.c.l.b16 %v761
      %v1278 = vunpack.c.l.b16 %v762
      %v1279 = vunpack.c.l.b16 %v763
      %v1280 = vunpack.c.l.b16 %v764
      %v1281 = vunpack.c.l.b16 %v765
      %v1282 = vunpack.c.l.b16 %v766
      %v1283 = vunpack.c.l.b16 %v767
      %v1284 = vunpack.c.l.b16 %v768
      %v1285 = vunpack.c.l.b16 %v769
      %v1286 = vunpack.c.l.b16 %v770
      %v1287 = vunpack.c.l.b16 %v771
      %v1288 = vunpack.c.l.b16 %v772
      %v1289 = vunpack.c.l.b16 %v773
      %v1290 = vunpack.c.l.b16 %v774
      %v1291 = vunpack.c.l.b16 %v775
      %v1292 = vunpack.c.l.b16 %v776
      %v1293 = vunpack.c.l.b16 %v777
      %v1294 = vunpack.c.l.b16 %v778
      %v1295 = vunpack.c.l.b16 %v779
      %v1296 = vunpack.c.l.b16 %v780
      %v1297 = vunpack.c.l.b16 %v781
      %v1298 = vunpack.c.l.b16 %v782
      %v1299 = vunpack.c.l.b16 %v783
      %v1300 = vunpack.c.l.b16 %v784
      %v1301 = vunpack.c.l.b16 %v785
      %v1302 = vunpack.c.l.b16 %v786
      %v1303 = vunpack.c.l.b16 %v787
      %v1304 = vunpack.c.l.b16 %v788
      %v1305 = vunpack.c.l.b16 %v789
      %v1306 = vunpack.c.l.b16 %v790
      %v1307 = vunpack.c.l.b16 %v791
      %v1308 = vunpack.c.l.b16 %v792
      %v1309 = vunpack.c.l.b16 %v793
      %v1310 = vunpack.c.l.b16 %v794
      %v1311 = vpack.c.b16 %v1200, %v1199
      %v1312 = vpack.c.b16 %v1202, %v1201
      %v1313 = vpack.c.b16 %v1204, %v1203
      %v1314 = vpack.c.b16 %v1206, %v1205
      %v1315 = vpack.c.b16 %v1208, %v1207
      %v1316 = vpack.c.b16 %v1210, %v1209
      %v1317 = vpack.c.b16 %v1212, %v1211
      %v1318 = vpack.c.b16 %v1214, %v1213
      %v1319 = vpack.c.b16 %v1216, %v1215
      %v1320 = vpack.c.b16 %v1218, %v1217
      %v1321 = vpack.c.b16 %v1220, %v1219
      %v1322 = vpack.c.b16 %v1222, %v1221
      %v1323 = vpack.c.b16 %v1224, %v1223
      %v1324 = vpack.c.b16 %v1226, %v1225
      %v1325 = vpack.c.b16 %v1228, %v1227
      %v1326 = vpack.c.b16 %v1230, %v1229
      %v1327 = vpack.c.b16 %v1232, %v1231
      %v1328 = vpack.c.b16 %v1234, %v1233
      %v1329 = vpack.c.b16 %v1236, %v1235
      %v1330 = vpack.c.b16 %v1238, %v1237
      %v1331 = vpack.c.b16 %v1240, %v1239
      %v1332 = vpack.c.b16 %v1242, %v1241
      %v1333 = vpack.c.b16 %v1244, %v1243
      %v1334 = vpack.c.b16 %v1246, %v1245
      %v1335 = vpack.c.b16 %v1248, %v1247
      %v1336 = vpack.c.b16 %v1250, %v1249
      %v1337 = vpack.c.b16 %v1252, %v1251
      %v1338 = vpack.c.b16 %v1254, %v1253
      %v1339 = vpack.c.b16 %v1256, %v1255
      %v1340 = vpack.c.b16 %v1258, %v1257
      %v1341 = vpack.c.b16 %v1260, %v1259
      %v1342 = vpack.c.b16 %v1262, %v1261
      %v1343 = vpack.c.b16 %v1264, %v1263
      %v1344 = vpack.c.b16 %v1266, %v1265
      %v1345 = vpack.c.b16 %v1268, %v1267
      %v1346 = vpack.c.b16 %v1270, %v1269
      %v1347 = vpack.c.b16 %v1272, %v1271
      %v1348 = vpack.c.b16 %v1274, %v1273
      %v1349 = vpack.c.b16 %v1276, %v1275
      %v1350 = vpack.c.b16 %v1278, %v1277
      %v1351 = vpack.c.b16 %v1280, %v1279
      %v1352 = vpack.c.b16 %v1282, %v1281
      %v1353 = vpack.c.b16 %v1284, %v1283
      %v1354 = vpack.c.b16 %v1286, %v1285
      %v1355 = vpack.c.b16 %v1288, %v1287
      %v1356 = vpack.c.b16 %v1290, %v1289
      %v1357 = vpack.c.b16 %v1292, %v1291
      %v1358 = vpack.c.b16 %v1294, %v1293
      %v1359 = vpack.c.b16 %v1296, %v1295
      %v1360 = vpack.c.b16 %v1298, %v1297
      %v1361 = vpack.c.b16 %v1300, %v1299
      %v1362 = vpack.c.b16 %v1302, %v1301
      %v1363 = vpack.c.b16 %v1304, %v1303
      %v1364 = vpack.c.b16 %v1306, %v1305
      %v1365 = vpack.c.b16 %v1308, %v1307
      %v1366 = vpack.c.b16 %v1310, %v1309
      %1423 = vmatpush.bf16.msra.mxu0 %v1318
      %1424 = vmatpush.bf16.msra.mxu0 %v1317
      %1425 = vmatpush.bf16.msra.mxu0 %v1316
      %1426 = vmatpush.bf16.msra.mxu0 %v1315
      %1427 = vmatpush.bf16.msra.mxu0 %v1314
      %1428 = vmatpush.bf16.msra.mxu0 %v1313
      %1429 = vmatpush.bf16.msra.mxu0 %v1312
      %1430 = vmatpush.bf16.msra.mxu0 %v1311
      %1431 = vmatmul.bf16.gmra.mxu0 %v975
      %v1432 = vpop.f32.mrf.mxu0
      %v1433 = vadd.f32 %v797, %v1432
      %v1434 = vpop.f32.mrf.mxu0
      %v1435 = vadd.f32 %v797, %v1434
      %1436 = vmatmul.bf16.gmra.mxu0 %v982
      %v1437 = vpop.f32.mrf.mxu0
      %v1438 = vadd.f32 %v797, %v1437
      %v1439 = vpop.f32.mrf.mxu0
      %v1440 = vadd.f32 %v797, %v1439
      %1441 = vmatmul.bf16.gmra.mxu0 %v989
      %v1442 = vpop.f32.mrf.mxu0
      %v1443 = vadd.f32 %v797, %v1442
      %v1444 = vpop.f32.mrf.mxu0
      %v1445 = vadd.f32 %v797, %v1444
      %1446 = vmatmul.bf16.gmra.mxu0 %v996
      %v1447 = vpop.f32.mrf.mxu0
      %v1448 = vadd.f32 %v797, %v1447
      %v1449 = vpop.f32.mrf.mxu0
      %v1450 = vadd.f32 %v797, %v1449
      %1451 = vmatmul.bf16.gmra.mxu0 %v1003
      %v1452 = vpop.f32.mrf.mxu0
      %v1453 = vadd.f32 %v797, %v1452
      %v1454 = vpop.f32.mrf.mxu0
      %v1455 = vadd.f32 %v797, %v1454
      %1456 = vmatmul.bf16.gmra.mxu0 %v1010
      %v1457 = vpop.f32.mrf.mxu0
      %v1458 = vadd.f32 %v797, %v1457
      %v1459 = vpop.f32.mrf.mxu0
      %v1460 = vadd.f32 %v797, %v1459
      %1461 = vmatmul.bf16.gmra.mxu0 %v1017
      %v1462 = vpop.f32.mrf.mxu0
      %v1463 = vadd.f32 %v797, %v1462
      %v1464 = vpop.f32.mrf.mxu0
      %v1465 = vadd.f32 %v797, %v1464
      %1466 = vmatmul.bf16.gmra.mxu0 %v1024
      %v1467 = vpop.f32.mrf.mxu0
      %v1468 = vadd.f32 %v797, %v1467
      %v1469 = vpop.f32.mrf.mxu0
      %v1470 = vadd.f32 %v797, %v1469
      %1471 = vdwg.mxu0
      %1472 = vmatpush.bf16.msra.mxu0 %v1326
      %1473 = vmatpush.bf16.msra.mxu0 %v1325
      %1474 = vmatpush.bf16.msra.mxu0 %v1324
      %1475 = vmatpush.bf16.msra.mxu0 %v1323
      %1476 = vmatpush.bf16.msra.mxu0 %v1322
      %1477 = vmatpush.bf16.msra.mxu0 %v1321
      %1478 = vmatpush.bf16.msra.mxu0 %v1320
      %1479 = vmatpush.bf16.msra.mxu0 %v1319
      %1480 = vmatmul.bf16.gmra.mxu0 %v976
      %v1481 = vpop.f32.mrf.mxu0
      %v1482 = vadd.f32 %v1433, %v1481
      %v1483 = vpop.f32.mrf.mxu0
      %v1484 = vadd.f32 %v1435, %v1483
      %1485 = vmatmul.bf16.gmra.mxu0 %v983
      %v1486 = vpop.f32.mrf.mxu0
      %v1487 = vadd.f32 %v1438, %v1486
      %v1488 = vpop.f32.mrf.mxu0
      %v1489 = vadd.f32 %v1440, %v1488
      %1490 = vmatmul.bf16.gmra.mxu0 %v990
      %v1491 = vpop.f32.mrf.mxu0
      %v1492 = vadd.f32 %v1443, %v1491
      %v1493 = vpop.f32.mrf.mxu0
      %v1494 = vadd.f32 %v1445, %v1493
      %1495 = vmatmul.bf16.gmra.mxu0 %v997
      %v1496 = vpop.f32.mrf.mxu0
      %v1497 = vadd.f32 %v1448, %v1496
      %v1498 = vpop.f32.mrf.mxu0
      %v1499 = vadd.f32 %v1450, %v1498
      %1500 = vmatmul.bf16.gmra.mxu0 %v1004
      %v1501 = vpop.f32.mrf.mxu0
      %v1502 = vadd.f32 %v1453, %v1501
      %v1503 = vpop.f32.mrf.mxu0
      %v1504 = vadd.f32 %v1455, %v1503
      %1505 = vmatmul.bf16.gmra.mxu0 %v1011
      %v1506 = vpop.f32.mrf.mxu0
      %v1507 = vadd.f32 %v1458, %v1506
      %v1508 = vpop.f32.mrf.mxu0
      %v1509 = vadd.f32 %v1460, %v1508
      %1510 = vmatmul.bf16.gmra.mxu0 %v1018
      %v1511 = vpop.f32.mrf.mxu0
      %v1512 = vadd.f32 %v1463, %v1511
      %v1513 = vpop.f32.mrf.mxu0
      %v1514 = vadd.f32 %v1465, %v1513
      %1515 = vmatmul.bf16.gmra.mxu0 %v1025
      %v1516 = vpop.f32.mrf.mxu0
      %v1517 = vadd.f32 %v1468, %v1516
      %v1518 = vpop.f32.mrf.mxu0
      %v1519 = vadd.f32 %v1470, %v1518
      %1520 = vdwg.mxu0
      %1521 = vmatpush.bf16.msra.mxu0 %v1334
      %1522 = vmatpush.bf16.msra.mxu0 %v1333
      %1523 = vmatpush.bf16.msra.mxu0 %v1332
      %1524 = vmatpush.bf16.msra.mxu0 %v1331
      %1525 = vmatpush.bf16.msra.mxu0 %v1330
      %1526 = vmatpush.bf16.msra.mxu0 %v1329
      %1527 = vmatpush.bf16.msra.mxu0 %v1328
      %1528 = vmatpush.bf16.msra.mxu0 %v1327
      %1529 = vmatmul.bf16.gmra.mxu0 %v977
      %v1530 = vpop.f32.mrf.mxu0
      %v1531 = vadd.f32 %v1482, %v1530
      %v1532 = vpop.f32.mrf.mxu0
      %v1533 = vadd.f32 %v1484, %v1532
      %1534 = vmatmul.bf16.gmra.mxu0 %v984
      %v1535 = vpop.f32.mrf.mxu0
      %v1536 = vadd.f32 %v1487, %v1535
      %v1537 = vpop.f32.mrf.mxu0
      %v1538 = vadd.f32 %v1489, %v1537
      %1539 = vmatmul.bf16.gmra.mxu0 %v991
      %v1540 = vpop.f32.mrf.mxu0
      %v1541 = vadd.f32 %v1492, %v1540
      %v1542 = vpop.f32.mrf.mxu0
      %v1543 = vadd.f32 %v1494, %v1542
      %1544 = vmatmul.bf16.gmra.mxu0 %v998
      %v1545 = vpop.f32.mrf.mxu0
      %v1546 = vadd.f32 %v1497, %v1545
      %v1547 = vpop.f32.mrf.mxu0
      %v1548 = vadd.f32 %v1499, %v1547
      %1549 = vmatmul.bf16.gmra.mxu0 %v1005
      %v1550 = vpop.f32.mrf.mxu0
      %v1551 = vadd.f32 %v1502, %v1550
      %v1552 = vpop.f32.mrf.mxu0
      %v1553 = vadd.f32 %v1504, %v1552
      %1554 = vmatmul.bf16.gmra.mxu0 %v1012
      %v1555 = vpop.f32.mrf.mxu0
      %v1556 = vadd.f32 %v1507, %v1555
      %v1557 = vpop.f32.mrf.mxu0
      %v1558 = vadd.f32 %v1509, %v1557
      %1559 = vmatmul.bf16.gmra.mxu0 %v1019
      %v1560 = vpop.f32.mrf.mxu0
      %v1561 = vadd.f32 %v1512, %v1560
      %v1562 = vpop.f32.mrf.mxu0
      %v1563 = vadd.f32 %v1514, %v1562
      %1564 = vmatmul.bf16.gmra.mxu0 %v1026
      %v1565 = vpop.f32.mrf.mxu0
      %v1566 = vadd.f32 %v1517, %v1565
      %v1567 = vpop.f32.mrf.mxu0
      %v1568 = vadd.f32 %v1519, %v1567
      %1569 = vdwg.mxu0
      %1570 = vmatpush.bf16.msra.mxu0 %v1342
      %1571 = vmatpush.bf16.msra.mxu0 %v1341
      %1572 = vmatpush.bf16.msra.mxu0 %v1340
      %1573 = vmatpush.bf16.msra.mxu0 %v1339
      %1574 = vmatpush.bf16.msra.mxu0 %v1338
      %1575 = vmatpush.bf16.msra.mxu0 %v1337
      %1576 = vmatpush.bf16.msra.mxu0 %v1336
      %1577 = vmatpush.bf16.msra.mxu0 %v1335
      %1578 = vmatmul.bf16.gmra.mxu0 %v978
      %v1579 = vpop.f32.mrf.mxu0
      %v1580 = vadd.f32 %v1531, %v1579
      %v1581 = vpop.f32.mrf.mxu0
      %v1582 = vadd.f32 %v1533, %v1581
      %1583 = vmatmul.bf16.gmra.mxu0 %v985
      %v1584 = vpop.f32.mrf.mxu0
      %v1585 = vadd.f32 %v1536, %v1584
      %v1586 = vpop.f32.mrf.mxu0
      %v1587 = vadd.f32 %v1538, %v1586
      %1588 = vmatmul.bf16.gmra.mxu0 %v992
      %v1589 = vpop.f32.mrf.mxu0
      %v1590 = vadd.f32 %v1541, %v1589
      %v1591 = vpop.f32.mrf.mxu0
      %v1592 = vadd.f32 %v1543, %v1591
      %1593 = vmatmul.bf16.gmra.mxu0 %v999
      %v1594 = vpop.f32.mrf.mxu0
      %v1595 = vadd.f32 %v1546, %v1594
      %v1596 = vpop.f32.mrf.mxu0
      %v1597 = vadd.f32 %v1548, %v1596
      %1598 = vmatmul.bf16.gmra.mxu0 %v1006
      %v1599 = vpop.f32.mrf.mxu0
      %v1600 = vadd.f32 %v1551, %v1599
      %v1601 = vpop.f32.mrf.mxu0
      %v1602 = vadd.f32 %v1553, %v1601
      %1603 = vmatmul.bf16.gmra.mxu0 %v1013
      %v1604 = vpop.f32.mrf.mxu0
      %v1605 = vadd.f32 %v1556, %v1604
      %v1606 = vpop.f32.mrf.mxu0
      %v1607 = vadd.f32 %v1558, %v1606
      %1608 = vmatmul.bf16.gmra.mxu0 %v1020
      %v1609 = vpop.f32.mrf.mxu0
      %v1610 = vadd.f32 %v1561, %v1609
      %v1611 = vpop.f32.mrf.mxu0
      %v1612 = vadd.f32 %v1563, %v1611
      %1613 = vmatmul.bf16.gmra.mxu0 %v1027
      %v1614 = vpop.f32.mrf.mxu0
      %v1615 = vadd.f32 %v1566, %v1614
      %v1616 = vpop.f32.mrf.mxu0
      %v1617 = vadd.f32 %v1568, %v1616
      %1618 = vdwg.mxu0
      %1619 = vmatpush.bf16.msra.mxu0 %v1350
      %1620 = vmatpush.bf16.msra.mxu0 %v1349
      %1621 = vmatpush.bf16.msra.mxu0 %v1348
      %1622 = vmatpush.bf16.msra.mxu0 %v1347
      %1623 = vmatpush.bf16.msra.mxu0 %v1346
      %1624 = vmatpush.bf16.msra.mxu0 %v1345
      %1625 = vmatpush.bf16.msra.mxu0 %v1344
      %1626 = vmatpush.bf16.msra.mxu0 %v1343
      %1627 = vmatmul.bf16.gmra.mxu0 %v979
      %v1628 = vpop.f32.mrf.mxu0
      %v1629 = vadd.f32 %v1580, %v1628
      %v1630 = vpop.f32.mrf.mxu0
      %v1631 = vadd.f32 %v1582, %v1630
      %1632 = vmatmul.bf16.gmra.mxu0 %v986
      %v1633 = vpop.f32.mrf.mxu0
      %v1634 = vadd.f32 %v1585, %v1633
      %v1635 = vpop.f32.mrf.mxu0
      %v1636 = vadd.f32 %v1587, %v1635
      %1637 = vmatmul.bf16.gmra.mxu0 %v993
      %v1638 = vpop.f32.mrf.mxu0
      %v1639 = vadd.f32 %v1590, %v1638
      %v1640 = vpop.f32.mrf.mxu0
      %v1641 = vadd.f32 %v1592, %v1640
      %1642 = vmatmul.bf16.gmra.mxu0 %v1000
      %v1643 = vpop.f32.mrf.mxu0
      %v1644 = vadd.f32 %v1595, %v1643
      %v1645 = vpop.f32.mrf.mxu0
      %v1646 = vadd.f32 %v1597, %v1645
      %1647 = vmatmul.bf16.gmra.mxu0 %v1007
      %v1648 = vpop.f32.mrf.mxu0
      %v1649 = vadd.f32 %v1600, %v1648
      %v1650 = vpop.f32.mrf.mxu0
      %v1651 = vadd.f32 %v1602, %v1650
      %1652 = vmatmul.bf16.gmra.mxu0 %v1014
      %v1653 = vpop.f32.mrf.mxu0
      %v1654 = vadd.f32 %v1605, %v1653
      %v1655 = vpop.f32.mrf.mxu0
      %v1656 = vadd.f32 %v1607, %v1655
      %1657 = vmatmul.bf16.gmra.mxu0 %v1021
      %v1658 = vpop.f32.mrf.mxu0
      %v1659 = vadd.f32 %v1610, %v1658
      %v1660 = vpop.f32.mrf.mxu0
      %v1661 = vadd.f32 %v1612, %v1660
      %1662 = vmatmul.bf16.gmra.mxu0 %v1028
      %v1663 = vpop.f32.mrf.mxu0
      %v1664 = vadd.f32 %v1615, %v1663
      %v1665 = vpop.f32.mrf.mxu0
      %v1666 = vadd.f32 %v1617, %v1665
      %1667 = vdwg.mxu0
      %1668 = vmatpush.bf16.msra.mxu0 %v1358
      %1669 = vmatpush.bf16.msra.mxu0 %v1357
      %1670 = vmatpush.bf16.msra.mxu0 %v1356
      %1671 = vmatpush.bf16.msra.mxu0 %v1355
      %1672 = vmatpush.bf16.msra.mxu0 %v1354
      %1673 = vmatpush.bf16.msra.mxu0 %v1353
      %1674 = vmatpush.bf16.msra.mxu0 %v1352
      %1675 = vmatpush.bf16.msra.mxu0 %v1351
      %1676 = vmatmul.bf16.gmra.mxu0 %v980
      %v1677 = vpop.f32.mrf.mxu0
      %v1678 = vadd.f32 %v1629, %v1677
      %v1679 = vpop.f32.mrf.mxu0
      %v1680 = vadd.f32 %v1631, %v1679
      %1681 = vmatmul.bf16.gmra.mxu0 %v987
      %v1682 = vpop.f32.mrf.mxu0
      %v1683 = vadd.f32 %v1634, %v1682
      %v1684 = vpop.f32.mrf.mxu0
      %v1685 = vadd.f32 %v1636, %v1684
      %1686 = vmatmul.bf16.gmra.mxu0 %v994
      %v1687 = vpop.f32.mrf.mxu0
      %v1688 = vadd.f32 %v1639, %v1687
      %v1689 = vpop.f32.mrf.mxu0
      %v1690 = vadd.f32 %v1641, %v1689
      %1691 = vmatmul.bf16.gmra.mxu0 %v1001
      %v1692 = vpop.f32.mrf.mxu0
      %v1693 = vadd.f32 %v1644, %v1692
      %v1694 = vpop.f32.mrf.mxu0
      %v1695 = vadd.f32 %v1646, %v1694
      %1696 = vmatmul.bf16.gmra.mxu0 %v1008
      %v1697 = vpop.f32.mrf.mxu0
      %v1698 = vadd.f32 %v1649, %v1697
      %v1699 = vpop.f32.mrf.mxu0
      %v1700 = vadd.f32 %v1651, %v1699
      %1701 = vmatmul.bf16.gmra.mxu0 %v1015
      %v1702 = vpop.f32.mrf.mxu0
      %v1703 = vadd.f32 %v1654, %v1702
      %v1704 = vpop.f32.mrf.mxu0
      %v1705 = vadd.f32 %v1656, %v1704
      %1706 = vmatmul.bf16.gmra.mxu0 %v1022
      %v1707 = vpop.f32.mrf.mxu0
      %v1708 = vadd.f32 %v1659, %v1707
      %v1709 = vpop.f32.mrf.mxu0
      %v1710 = vadd.f32 %v1661, %v1709
      %1711 = vmatmul.bf16.gmra.mxu0 %v1029
      %v1712 = vpop.f32.mrf.mxu0
      %v1713 = vadd.f32 %v1664, %v1712
      %v1714 = vpop.f32.mrf.mxu0
      %v1715 = vadd.f32 %v1666, %v1714
      %1716 = vdwg.mxu0
      %1717 = vmatpush.bf16.msra.mxu0 %v1366
      %1718 = vmatpush.bf16.msra.mxu0 %v1365
      %1719 = vmatpush.bf16.msra.mxu0 %v1364
      %1720 = vmatpush.bf16.msra.mxu0 %v1363
      %1721 = vmatpush.bf16.msra.mxu0 %v1362
      %1722 = vmatpush.bf16.msra.mxu0 %v1361
      %1723 = vmatpush.bf16.msra.mxu0 %v1360
      %1724 = vmatpush.bf16.msra.mxu0 %v1359
      %1725 = vmatmul.bf16.gmra.mxu0 %v981
      %v1726 = vpop.f32.mrf.mxu0
      %v1727 = vadd.f32 %v1678, %v1726
      %v1728 = vpop.f32.mrf.mxu0
      %v1729 = vadd.f32 %v1680, %v1728
      %1730 = vmatmul.bf16.gmra.mxu0 %v988
      %v1731 = vpop.f32.mrf.mxu0
      %v1732 = vadd.f32 %v1683, %v1731
      %v1733 = vpop.f32.mrf.mxu0
      %v1734 = vadd.f32 %v1685, %v1733
      %1735 = vmatmul.bf16.gmra.mxu0 %v995
      %v1736 = vpop.f32.mrf.mxu0
      %v1737 = vadd.f32 %v1688, %v1736
      %v1738 = vpop.f32.mrf.mxu0
      %v1739 = vadd.f32 %v1690, %v1738
      %1740 = vmatmul.bf16.gmra.mxu0 %v1002
      %v1741 = vpop.f32.mrf.mxu0
      %v1742 = vadd.f32 %v1693, %v1741
      %v1743 = vpop.f32.mrf.mxu0
      %v1744 = vadd.f32 %v1695, %v1743
      %1745 = vmatmul.bf16.gmra.mxu0 %v1009
      %v1746 = vpop.f32.mrf.mxu0
      %v1747 = vadd.f32 %v1698, %v1746
      %v1748 = vpop.f32.mrf.mxu0
      %v1749 = vadd.f32 %v1700, %v1748
      %1750 = vmatmul.bf16.gmra.mxu0 %v1016
      %v1751 = vpop.f32.mrf.mxu0
      %v1752 = vadd.f32 %v1703, %v1751
      %v1753 = vpop.f32.mrf.mxu0
      %v1754 = vadd.f32 %v1705, %v1753
      %1755 = vmatmul.bf16.gmra.mxu0 %v1023
      %v1756 = vpop.f32.mrf.mxu0
      %v1757 = vadd.f32 %v1708, %v1756
      %v1758 = vpop.f32.mrf.mxu0
      %v1759 = vadd.f32 %v1710, %v1758
      %1760 = vmatmul.bf16.gmra.mxu0 %v1030
      %v1761 = vpop.f32.mrf.mxu0
      %v1762 = vadd.f32 %v1713, %v1761
      %v1763 = vpop.f32.mrf.mxu0
      %v1764 = vadd.f32 %v1715, %v1763
      %1765 = vdwg.mxu0
      %v1766 = vmax.f32 %v1727, 0.0
      %v1767 = vmax.f32 %v1729, 0.0
      %v1768 = vmax.f32 %v1732, 0.0
      %v1769 = vmax.f32 %v1734, 0.0
      %v1770 = vmax.f32 %v1737, 0.0
      %v1771 = vmax.f32 %v1739, 0.0
      %v1772 = vmax.f32 %v1742, 0.0
      %v1773 = vmax.f32 %v1744, 0.0
      %v1774 = vmax.f32 %v1747, 0.0
      %v1775 = vmax.f32 %v1749, 0.0
      %v1776 = vmax.f32 %v1752, 0.0
      %v1777 = vmax.f32 %v1754, 0.0
      %v1778 = vmax.f32 %v1757, 0.0
      %v1779 = vmax.f32 %v1759, 0.0
      %v1780 = vmax.f32 %v1762, 0.0
      %v1781 = vmax.f32 %v1764, 0.0
      %v1782 = vpack.c.bf16 %v1767, %v1766
      %v1783 = vpack.c.bf16 %v1769, %v1768
      %v1784 = vpack.c.bf16 %v1771, %v1770
      %v1785 = vpack.c.bf16 %v1773, %v1772
      %v1786 = vpack.c.bf16 %v1775, %v1774
      %v1787 = vpack.c.bf16 %v1777, %v1776
      %v1788 = vpack.c.bf16 %v1779, %v1778
      %v1789 = vpack.c.bf16 %v1781, %v1780
      %v1790 = vld [vmem:[%s4] sm:$0xf]
      %v1791 = vld [vmem:[%s4 + $0x4] sm:$0xf]
      %v1792 = vld [vmem:[%s4 + $0x8] sm:$0xf]
      %v1793 = vld [vmem:[%s4 + $0xc] sm:$0xf]
      %v1794 = vld [vmem:[%s4 + $0x10] sm:$0xf]
      %v1795 = vld [vmem:[%s4 + $0x14] sm:$0xf]
      %v1796 = vld [vmem:[%s4 + $0x18] sm:$0xf]
      %v1797 = vld [vmem:[%s4 + $0x1c] sm:$0xf]
      %v1798 = vld [vmem:[%s4 + $0x20] sm:$0xf]
      %v1799 = vld [vmem:[%s4 + $0x24] sm:$0xf]
      %v1800 = vld [vmem:[%s4 + $0x28] sm:$0xf]
      %v1801 = vld [vmem:[%s4 + $0x2c] sm:$0xf]
      %v1802 = vld [vmem:[%s4 + $0x30] sm:$0xf]
      %v1803 = vld [vmem:[%s4 + $0x34] sm:$0xf]
      %v1804 = vld [vmem:[%s4 + $0x38] sm:$0xf]
      %v1805 = vld [vmem:[%s4 + $0x3c] sm:$0xf]
      %v1806 = vld [vmem:[%s5] sm:$0x1]
      %v1808 = vperm.slane %v1806, 0
      %v1826 = vunpack.c.l.b16 %v1790
      %v1827 = vunpack.c.l.b16 %v1791
      %v1828 = vunpack.c.l.b16 %v1792
      %v1829 = vunpack.c.l.b16 %v1793
      %v1830 = vunpack.c.l.b16 %v1794
      %v1831 = vunpack.c.l.b16 %v1795
      %v1832 = vunpack.c.l.b16 %v1796
      %v1833 = vunpack.c.l.b16 %v1797
      %v1834 = vunpack.c.l.b16 %v1798
      %v1835 = vunpack.c.l.b16 %v1799
      %v1836 = vunpack.c.l.b16 %v1800
      %v1837 = vunpack.c.l.b16 %v1801
      %v1838 = vunpack.c.l.b16 %v1802
      %v1839 = vunpack.c.l.b16 %v1803
      %v1840 = vunpack.c.l.b16 %v1804
      %v1841 = vunpack.c.l.b16 %v1805
      %v1842 = vpack.c.b16 %v1827, %v1826
      %v1843 = vpack.c.b16 %v1829, %v1828
      %v1844 = vpack.c.b16 %v1831, %v1830
      %v1845 = vpack.c.b16 %v1833, %v1832
      %v1846 = vpack.c.b16 %v1835, %v1834
      %v1847 = vpack.c.b16 %v1837, %v1836
      %v1848 = vpack.c.b16 %v1839, %v1838
      %v1849 = vpack.c.b16 %v1841, %v1840
      %1858 = vmatpush.bf16.msra.mxu0 %v1849
      %1859 = vmatpush.bf16.msra.mxu0 %v1848
      %1860 = vmatpush.bf16.msra.mxu0 %v1847
      %1861 = vmatpush.bf16.msra.mxu0 %v1846
      %1862 = vmatpush.bf16.msra.mxu0 %v1845
      %1863 = vmatpush.bf16.msra.mxu0 %v1844
      %1864 = vmatpush.bf16.msra.mxu0 %v1843
      %1865 = vmatpush.bf16.msra.mxu0 %v1842
      %1866 = vmatmul.bf16.gmra.mxu0 %v1782
      %v1867 = vpop.f32.mrf.mxu0
      %v1868 = vadd.f32 %v1808, %v1867
      %v1869 = vpop.f32.mrf.mxu0
      %v1870 = vadd.f32 %v1808, %v1869
      %1871 = vmatmul.bf16.gmra.mxu0 %v1783
      %v1872 = vpop.f32.mrf.mxu0
      %v1873 = vadd.f32 %v1808, %v1872
      %v1874 = vpop.f32.mrf.mxu0
      %v1875 = vadd.f32 %v1808, %v1874
      %1876 = vmatmul.bf16.gmra.mxu0 %v1784
      %v1877 = vpop.f32.mrf.mxu0
      %v1878 = vadd.f32 %v1808, %v1877
      %v1879 = vpop.f32.mrf.mxu0
      %v1880 = vadd.f32 %v1808, %v1879
      %1881 = vmatmul.bf16.gmra.mxu0 %v1785
      %v1882 = vpop.f32.mrf.mxu0
      %v1883 = vadd.f32 %v1808, %v1882
      %v1884 = vpop.f32.mrf.mxu0
      %v1885 = vadd.f32 %v1808, %v1884
      %1886 = vmatmul.bf16.gmra.mxu0 %v1786
      %v1887 = vpop.f32.mrf.mxu0
      %v1888 = vadd.f32 %v1808, %v1887
      %v1889 = vpop.f32.mrf.mxu0
      %v1890 = vadd.f32 %v1808, %v1889
      %1891 = vmatmul.bf16.gmra.mxu0 %v1787
      %v1892 = vpop.f32.mrf.mxu0
      %v1893 = vadd.f32 %v1808, %v1892
      %v1894 = vpop.f32.mrf.mxu0
      %v1895 = vadd.f32 %v1808, %v1894
      %1896 = vmatmul.bf16.gmra.mxu0 %v1788
      %v1897 = vpop.f32.mrf.mxu0
      %v1898 = vadd.f32 %v1808, %v1897
      %v1899 = vpop.f32.mrf.mxu0
      %v1900 = vadd.f32 %v1808, %v1899
      %1901 = vmatmul.bf16.gmra.mxu0 %v1789
      %v1902 = vpop.f32.mrf.mxu0
      %v1903 = vadd.f32 %v1808, %v1902
      %v1904 = vpop.f32.mrf.mxu0
      %v1905 = vadd.f32 %v1808, %v1904
      %1906 = vdwg.mxu0
      %v1907 = vmax.f32 %v1868, 0.0
      %v1908 = vmax.f32 %v1870, 0.0
      %v1909 = vmax.f32 %v1873, 0.0
      %v1910 = vmax.f32 %v1875, 0.0
      %v1911 = vmax.f32 %v1878, 0.0
      %v1912 = vmax.f32 %v1880, 0.0
      %v1913 = vmax.f32 %v1883, 0.0
      %v1914 = vmax.f32 %v1885, 0.0
      %v1915 = vmax.f32 %v1888, 0.0
      %v1916 = vmax.f32 %v1890, 0.0
      %v1917 = vmax.f32 %v1893, 0.0
      %v1918 = vmax.f32 %v1895, 0.0
      %v1919 = vmax.f32 %v1898, 0.0
      %v1920 = vmax.f32 %v1900, 0.0
      %v1921 = vmax.f32 %v1903, 0.0
      %v1922 = vmax.f32 %v1905, 0.0
      %v1923 = vpack.c.bf16 %v1908, %v1907
      %v1924 = vpack.c.bf16 %v1910, %v1909
      %v1925 = vpack.c.bf16 %v1912, %v1911
      %v1926 = vpack.c.bf16 %v1914, %v1913
      %v1927 = vpack.c.bf16 %v1916, %v1915
      %v1928 = vpack.c.bf16 %v1918, %v1917
      %v1929 = vpack.c.bf16 %v1920, %v1919
      %v1930 = vpack.c.bf16 %v1922, %v1921
      %v1931 = vld [vmem:[%s6] sm:$0xff]
      %v1932 = vld [vmem:[%s6 + $0x8] sm:$0xff]
      %v1933 = vld [vmem:[%s6 + $0x10] sm:$0xff]
      %v1934 = vld [vmem:[%s6 + $0x18] sm:$0xff]
      %v1935 = vld [vmem:[%s6 + $0x20] sm:$0xff]
      %v1936 = vld [vmem:[%s6 + $0x28] sm:$0xff]
      %v1937 = vld [vmem:[%s6 + $0x30] sm:$0xff]
      %v1938 = vld [vmem:[%s6 + $0x38] sm:$0xff]
      %v1939 = vld [vmem:[%s6 + $0x40] sm:$0xff]
      %v1940 = vld [vmem:[%s6 + $0x48] sm:$0xff]
      %v1941 = vld [vmem:[%s6 + $0x50] sm:$0xff]
      %v1942 = vld [vmem:[%s6 + $0x58] sm:$0xff]
      %v1943 = vld [vmem:[%s6 + $0x60] sm:$0xff]
      %v1944 = vld [vmem:[%s6 + $0x68] sm:$0xff]
      %v1945 = vld [vmem:[%s6 + $0x70] sm:$0xff]
      %v1946 = vld [vmem:[%s6 + $0x78] sm:$0xff]
      %v1947 = vld [vmem:[%s7] sm:$0x3]
      %v1949 = vperm.slane %v1947, 0
      %v1950 = vperm.slane %v1947, 1
      %v1969 = vunpack.c.l.b16 %v1931
      %v1970 = vunpack.c.h.b16 %v1931
      %v1971 = vunpack.c.l.b16 %v1932
      %v1972 = vunpack.c.h.b16 %v1932
      %v1973 = vunpack.c.l.b16 %v1933
      %v1974 = vunpack.c.h.b16 %v1933
      %v1975 = vunpack.c.l.b16 %v1934
      %v1976 = vunpack.c.h.b16 %v1934
      %v1977 = vunpack.c.l.b16 %v1935
      %v1978 = vunpack.c.h.b16 %v1935
      %v1979 = vunpack.c.l.b16 %v1936
      %v1980 = vunpack.c.h.b16 %v1936
      %v1981 = vunpack.c.l.b16 %v1937
      %v1982 = vunpack.c.h.b16 %v1937
      %v1983 = vunpack.c.l.b16 %v1938
      %v1984 = vunpack.c.h.b16 %v1938
      %v1985 = vunpack.c.l.b16 %v1939
      %v1986 = vunpack.c.h.b16 %v1939
      %v1987 = vunpack.c.l.b16 %v1940
      %v1988 = vunpack.c.h.b16 %v1940
      %v1989 = vunpack.c.l.b16 %v1941
      %v1990 = vunpack.c.h.b16 %v1941
      %v1991 = vunpack.c.l.b16 %v1942
      %v1992 = vunpack.c.h.b16 %v1942
      %v1993 = vunpack.c.l.b16 %v1943
      %v1994 = vunpack.c.h.b16 %v1943
      %v1995 = vunpack.c.l.b16 %v1944
      %v1996 = vunpack.c.h.b16 %v1944
      %v1997 = vunpack.c.l.b16 %v1945
      %v1998 = vunpack.c.h.b16 %v1945
      %v1999 = vunpack.c.l.b16 %v1946
      %v2000 = vunpack.c.h.b16 %v1946
      %v2001 = vpack.c.b16 %v1971, %v1969
      %v2002 = vpack.c.b16 %v1972, %v1970
      %v2003 = vpack.c.b16 %v1975, %v1973
      %v2004 = vpack.c.b16 %v1976, %v1974
      %v2005 = vpack.c.b16 %v1979, %v1977
      %v2006 = vpack.c.b16 %v1980, %v1978
      %v2007 = vpack.c.b16 %v1983, %v1981
      %v2008 = vpack.c.b16 %v1984, %v1982
      %v2009 = vpack.c.b16 %v1987, %v1985
      %v2010 = vpack.c.b16 %v1988, %v1986
      %v2011 = vpack.c.b16 %v1991, %v1989
      %v2012 = vpack.c.b16 %v1992, %v1990
      %v2013 = vpack.c.b16 %v1995, %v1993
      %v2014 = vpack.c.b16 %v1996, %v1994
      %v2015 = vpack.c.b16 %v1999, %v1997
      %v2016 = vpack.c.b16 %v2000, %v1998
      %2033 = vmatpush.bf16.msra.mxu0 %v2015
      %2034 = vmatpush.bf16.msra.mxu0 %v2013
      %2035 = vmatpush.bf16.msra.mxu0 %v2011
      %2036 = vmatpush.bf16.msra.mxu0 %v2009
      %2037 = vmatpush.bf16.msra.mxu0 %v2007
      %2038 = vmatpush.bf16.msra.mxu0 %v2005
      %2039 = vmatpush.bf16.msra.mxu0 %v2003
      %2040 = vmatpush.bf16.msra.mxu0 %v2001
      %2041 = vmatmul.bf16.gmra.mxu0 %v1923
      %v2042 = vpop.f32.mrf.mxu0
      %v2043 = vadd.f32 %v1949, %v2042
      %v2044 = vpop.f32.mrf.mxu0
      %v2045 = vadd.f32 %v1949, %v2044
      %2046 = vmatmul.bf16.gmra.mxu0 %v1924
      %v2047 = vpop.f32.mrf.mxu0
      %v2048 = vadd.f32 %v1949, %v2047
      %v2049 = vpop.f32.mrf.mxu0
      %v2050 = vadd.f32 %v1949, %v2049
      %2051 = vmatmul.bf16.gmra.mxu0 %v1925
      %v2052 = vpop.f32.mrf.mxu0
      %v2053 = vadd.f32 %v1949, %v2052
      %v2054 = vpop.f32.mrf.mxu0
      %v2055 = vadd.f32 %v1949, %v2054
      %2056 = vmatmul.bf16.gmra.mxu0 %v1926
      %v2057 = vpop.f32.mrf.mxu0
      %v2058 = vadd.f32 %v1949, %v2057
      %v2059 = vpop.f32.mrf.mxu0
      %v2060 = vadd.f32 %v1949, %v2059
      %2061 = vmatmul.bf16.gmra.mxu0 %v1927
      %v2062 = vpop.f32.mrf.mxu0
      %v2063 = vadd.f32 %v1949, %v2062
      %v2064 = vpop.f32.mrf.mxu0
      %v2065 = vadd.f32 %v1949, %v2064
      %2066 = vmatmul.bf16.gmra.mxu0 %v1928
      %v2067 = vpop.f32.mrf.mxu0
      %v2068 = vadd.f32 %v1949, %v2067
      %v2069 = vpop.f32.mrf.mxu0
      %v2070 = vadd.f32 %v1949, %v2069
      %2071 = vmatmul.bf16.gmra.mxu0 %v1929
      %v2072 = vpop.f32.mrf.mxu0
      %v2073 = vadd.f32 %v1949, %v2072
      %v2074 = vpop.f32.mrf.mxu0
      %v2075 = vadd.f32 %v1949, %v2074
      %2076 = vmatmul.bf16.gmra.mxu0 %v1930
      %v2077 = vpop.f32.mrf.mxu0
      %v2078 = vadd.f32 %v1949, %v2077
      %v2079 = vpop.f32.mrf.mxu0
      %v2080 = vadd.f32 %v1949, %v2079
      %2081 = vdwg.mxu0
      %2082 = vmatpush.bf16.msra.mxu0 %v2016
      %2083 = vmatpush.bf16.msra.mxu0 %v2014
      %2084 = vmatpush.bf16.msra.mxu0 %v2012
      %2085 = vmatpush.bf16.msra.mxu0 %v2010
      %2086 = vmatpush.bf16.msra.mxu0 %v2008
      %2087 = vmatpush.bf16.msra.mxu0 %v2006
      %2088 = vmatpush.bf16.msra.mxu0 %v2004
      %2089 = vmatpush.bf16.msra.mxu0 %v2002
      %2090 = vmatmul.bf16.gmra.mxu0 %v1923
      %v2091 = vpop.f32.mrf.mxu0
      %v2092 = vadd.f32 %v1950, %v2091
      %v2093 = vpop.f32.mrf.mxu0
      %v2094 = vadd.f32 %v1950, %v2093
      %2095 = vmatmul.bf16.gmra.mxu0 %v1924
      %v2096 = vpop.f32.mrf.mxu0
      %v2097 = vadd.f32 %v1950, %v2096
      %v2098 = vpop.f32.mrf.mxu0
      %v2099 = vadd.f32 %v1950, %v2098
      %2100 = vmatmul.bf16.gmra.mxu0 %v1925
      %v2101 = vpop.f32.mrf.mxu0
      %v2102 = vadd.f32 %v1950, %v2101
      %v2103 = vpop.f32.mrf.mxu0
      %v2104 = vadd.f32 %v1950, %v2103
      %2105 = vmatmul.bf16.gmra.mxu0 %v1926
      %v2106 = vpop.f32.mrf.mxu0
      %v2107 = vadd.f32 %v1950, %v2106
      %v2108 = vpop.f32.mrf.mxu0
      %v2109 = vadd.f32 %v1950, %v2108
      %2110 = vmatmul.bf16.gmra.mxu0 %v1927
      %v2111 = vpop.f32.mrf.mxu0
      %v2112 = vadd.f32 %v1950, %v2111
      %v2113 = vpop.f32.mrf.mxu0
      %v2114 = vadd.f32 %v1950, %v2113
      %2115 = vmatmul.bf16.gmra.mxu0 %v1928
      %v2116 = vpop.f32.mrf.mxu0
      %v2117 = vadd.f32 %v1950, %v2116
      %v2118 = vpop.f32.mrf.mxu0
      %v2119 = vadd.f32 %v1950, %v2118
      %2120 = vmatmul.bf16.gmra.mxu0 %v1929
      %v2121 = vpop.f32.mrf.mxu0
      %v2122 = vadd.f32 %v1950, %v2121
      %v2123 = vpop.f32.mrf.mxu0
      %v2124 = vadd.f32 %v1950, %v2123
      %2125 = vmatmul.bf16.gmra.mxu0 %v1930
      %v2126 = vpop.f32.mrf.mxu0
      %v2127 = vadd.f32 %v1950, %v2126
      %v2128 = vpop.f32.mrf.mxu0
      %v2129 = vadd.f32 %v1950, %v2128
      %2130 = vdwg.mxu0
      %v2131 = vmax.f32 %v2092, 0.0
      %v2132 = vmax.f32 %v2094, 0.0
      %v2133 = vmax.f32 %v2097, 0.0
      %v2134 = vmax.f32 %v2099, 0.0
      %v2135 = vmax.f32 %v2102, 0.0
      %v2136 = vmax.f32 %v2104, 0.0
      %v2137 = vmax.f32 %v2107, 0.0
      %v2138 = vmax.f32 %v2109, 0.0
      %v2139 = vmax.f32 %v2112, 0.0
      %v2140 = vmax.f32 %v2114, 0.0
      %v2141 = vmax.f32 %v2117, 0.0
      %v2142 = vmax.f32 %v2119, 0.0
      %v2143 = vmax.f32 %v2122, 0.0
      %v2144 = vmax.f32 %v2124, 0.0
      %v2145 = vmax.f32 %v2127, 0.0
      %v2146 = vmax.f32 %v2129, 0.0
      %vm2147 = vcmp.ne.f32.partialorder %v2092, %v2092
      %vm2148 = vcmp.ne.f32.partialorder %v2094, %v2094
      %vm2149 = vcmp.ne.f32.partialorder %v2097, %v2097
      %vm2150 = vcmp.ne.f32.partialorder %v2099, %v2099
      %vm2151 = vcmp.ne.f32.partialorder %v2102, %v2102
      %vm2152 = vcmp.ne.f32.partialorder %v2104, %v2104
      %vm2153 = vcmp.ne.f32.partialorder %v2107, %v2107
      %vm2154 = vcmp.ne.f32.partialorder %v2109, %v2109
      %vm2155 = vcmp.ne.f32.partialorder %v2112, %v2112
      %vm2156 = vcmp.ne.f32.partialorder %v2114, %v2114
      %vm2157 = vcmp.ne.f32.partialorder %v2117, %v2117
      %vm2158 = vcmp.ne.f32.partialorder %v2119, %v2119
      %vm2159 = vcmp.ne.f32.partialorder %v2122, %v2122
      %vm2160 = vcmp.ne.f32.partialorder %v2124, %v2124
      %vm2161 = vcmp.ne.f32.partialorder %v2127, %v2127
      %vm2162 = vcmp.ne.f32.partialorder %v2129, %v2129
      %v2163 = vadd.f32 %v2092, 0.0
      %v2164 = vadd.f32 %v2094, 0.0
      %v2165 = vadd.f32 %v2097, 0.0
      %v2166 = vadd.f32 %v2099, 0.0
      %v2167 = vadd.f32 %v2102, 0.0
      %v2168 = vadd.f32 %v2104, 0.0
      %v2169 = vadd.f32 %v2107, 0.0
      %v2170 = vadd.f32 %v2109, 0.0
      %v2171 = vadd.f32 %v2112, 0.0
      %v2172 = vadd.f32 %v2114, 0.0
      %v2173 = vadd.f32 %v2117, 0.0
      %v2174 = vadd.f32 %v2119, 0.0
      %v2175 = vadd.f32 %v2122, 0.0
      %v2176 = vadd.f32 %v2124, 0.0
      %v2177 = vadd.f32 %v2127, 0.0
      %v2178 = vadd.f32 %v2129, 0.0
      %v2179 = vand.u32 2147483647, %v2092
      %v2180 = vand.u32 2147483647, %v2094
      %v2181 = vand.u32 2147483647, %v2097
      %v2182 = vand.u32 2147483647, %v2099
      %v2183 = vand.u32 2147483647, %v2102
      %v2184 = vand.u32 2147483647, %v2104
      %v2185 = vand.u32 2147483647, %v2107
      %v2186 = vand.u32 2147483647, %v2109
      %v2187 = vand.u32 2147483647, %v2112
      %v2188 = vand.u32 2147483647, %v2114
      %v2189 = vand.u32 2147483647, %v2117
      %v2190 = vand.u32 2147483647, %v2119
      %v2191 = vand.u32 2147483647, %v2122
      %v2192 = vand.u32 2147483647, %v2124
      %v2193 = vand.u32 2147483647, %v2127
      %v2194 = vand.u32 2147483647, %v2129
      %v2195 = vsub.f32 0.0, %v2179
      %v2196 = vsub.f32 0.0, %v2180
      %v2197 = vsub.f32 0.0, %v2181
      %v2198 = vsub.f32 0.0, %v2182
      %v2199 = vsub.f32 0.0, %v2183
      %v2200 = vsub.f32 0.0, %v2184
      %v2201 = vsub.f32 0.0, %v2185
      %v2202 = vsub.f32 0.0, %v2186
      %v2203 = vsub.f32 0.0, %v2187
      %v2204 = vsub.f32 0.0, %v2188
      %v2205 = vsub.f32 0.0, %v2189
      %v2206 = vsub.f32 0.0, %v2190
      %v2207 = vsub.f32 0.0, %v2191
      %v2208 = vsub.f32 0.0, %v2192
      %v2209 = vsub.f32 0.0, %v2193
      %v2210 = vsub.f32 0.0, %v2194
      %v2211 = vmul.f32 %v2195, 1.442695
      %v2212 = vpow.pop %v2211
      %v2213 = vmul.f32 %v2196, 1.442695
      %v2214 = vpow.pop %v2213
      %v2215 = vmul.f32 %v2197, 1.442695
      %v2216 = vpow.pop %v2215
      %v2217 = vmul.f32 %v2198, 1.442695
      %v2218 = vpow.pop %v2217
      %v2219 = vmul.f32 %v2199, 1.442695
      %v2220 = vpow.pop %v2219
      %v2221 = vmul.f32 %v2200, 1.442695
      %v2222 = vpow.pop %v2221
      %v2223 = vmul.f32 %v2201, 1.442695
      %v2224 = vpow.pop %v2223
      %v2225 = vmul.f32 %v2202, 1.442695
      %v2226 = vpow.pop %v2225
      %v2227 = vmul.f32 %v2203, 1.442695
      %v2228 = vpow.pop %v2227
      %v2229 = vmul.f32 %v2204, 1.442695
      %v2230 = vpow.pop %v2229
      %v2231 = vmul.f32 %v2205, 1.442695
      %v2232 = vpow.pop %v2231
      %v2233 = vmul.f32 %v2206, 1.442695
      %v2234 = vpow.pop %v2233
      %v2235 = vmul.f32 %v2207, 1.442695
      %v2236 = vpow.pop %v2235
      %v2237 = vmul.f32 %v2208, 1.442695
      %v2238 = vpow.pop %v2237
      %v2239 = vmul.f32 %v2209, 1.442695
      %v2240 = vpow.pop %v2239
      %v2241 = vmul.f32 %v2210, 1.442695
      %v2242 = vpow.pop %v2241
      %v2243 = vadd.f32 %v2212, 1.0
      %v2244 = vlog2.pop %v2243
      %v2245 = vmul.f32 %v2244, 0.6931472
      %v2246 = vmul.f32 -0.5, %v2212
      %v2247 = vadd.f32 %v2246, 1.0
      %v2248 = vmul.f32 %v2247, %v2212
      %v2249 = vand.u32 2147483647, %v2212
      %vm2250 = vcmp.lt.f32.partialorder %v2249, 0.0004427343
      %v2251 = vsel %vm2250, %v2248, %v2245
      %v2252 = vadd.f32 %v2214, 1.0
      %v2253 = vlog2.pop %v2252
      %v2254 = vmul.f32 %v2253, 0.6931472
      %v2255 = vmul.f32 -0.5, %v2214
      %v2256 = vadd.f32 %v2255, 1.0
      %v2257 = vmul.f32 %v2256, %v2214
      %v2258 = vand.u32 2147483647, %v2214
      %vm2259 = vcmp.lt.f32.partialorder %v2258, 0.0004427343
      %v2260 = vsel %vm2259, %v2257, %v2254
      %v2261 = vadd.f32 %v2216, 1.0
      %v2262 = vlog2.pop %v2261
      %v2263 = vmul.f32 %v2262, 0.6931472
      %v2264 = vmul.f32 -0.5, %v2216
      %v2265 = vadd.f32 %v2264, 1.0
      %v2266 = vmul.f32 %v2265, %v2216
      %v2267 = vand.u32 2147483647, %v2216
      %vm2268 = vcmp.lt.f32.partialorder %v2267, 0.0004427343
      %v2269 = vsel %vm2268, %v2266, %v2263
      %v2270 = vadd.f32 %v2218, 1.0
      %v2271 = vlog2.pop %v2270
      %v2272 = vmul.f32 %v2271, 0.6931472
      %v2273 = vmul.f32 -0.5, %v2218
      %v2274 = vadd.f32 %v2273, 1.0
      %v2275 = vmul.f32 %v2274, %v2218
      %v2276 = vand.u32 2147483647, %v2218
      %vm2277 = vcmp.lt.f32.partialorder %v2276, 0.0004427343
      %v2278 = vsel %vm2277, %v2275, %v2272
      %v2279 = vadd.f32 %v2220, 1.0
      %v2280 = vlog2.pop %v2279
      %v2281 = vmul.f32 %v2280, 0.6931472
      %v2282 = vmul.f32 -0.5, %v2220
      %v2283 = vadd.f32 %v2282, 1.0
      %v2284 = vmul.f32 %v2283, %v2220
      %v2285 = vand.u32 2147483647, %v2220
      %vm2286 = vcmp.lt.f32.partialorder %v2285, 0.0004427343
      %v2287 = vsel %vm2286, %v2284, %v2281
      %v2288 = vadd.f32 %v2222, 1.0
      %v2289 = vlog2.pop %v2288
      %v2290 = vmul.f32 %v2289, 0.6931472
      %v2291 = vmul.f32 -0.5, %v2222
      %v2292 = vadd.f32 %v2291, 1.0
      %v2293 = vmul.f32 %v2292, %v2222
      %v2294 = vand.u32 2147483647, %v2222
      %vm2295 = vcmp.lt.f32.partialorder %v2294, 0.0004427343
      %v2296 = vsel %vm2295, %v2293, %v2290
      %v2297 = vadd.f32 %v2224, 1.0
      %v2298 = vlog2.pop %v2297
      %v2299 = vmul.f32 %v2298, 0.6931472
      %v2300 = vmul.f32 -0.5, %v2224
      %v2301 = vadd.f32 %v2300, 1.0
      %v2302 = vmul.f32 %v2301, %v2224
      %v2303 = vand.u32 2147483647, %v2224
      %vm2304 = vcmp.lt.f32.partialorder %v2303, 0.0004427343
      %v2305 = vsel %vm2304, %v2302, %v2299
      %v2306 = vadd.f32 %v2226, 1.0
      %v2307 = vlog2.pop %v2306
      %v2308 = vmul.f32 %v2307, 0.6931472
      %v2309 = vmul.f32 -0.5, %v2226
      %v2310 = vadd.f32 %v2309, 1.0
      %v2311 = vmul.f32 %v2310, %v2226
      %v2312 = vand.u32 2147483647, %v2226
      %vm2313 = vcmp.lt.f32.partialorder %v2312, 0.0004427343
      %v2314 = vsel %vm2313, %v2311, %v2308
      %v2315 = vadd.f32 %v2228, 1.0
      %v2316 = vlog2.pop %v2315
      %v2317 = vmul.f32 %v2316, 0.6931472
      %v2318 = vmul.f32 -0.5, %v2228
      %v2319 = vadd.f32 %v2318, 1.0
      %v2320 = vmul.f32 %v2319, %v2228
      %v2321 = vand.u32 2147483647, %v2228
      %vm2322 = vcmp.lt.f32.partialorder %v2321, 0.0004427343
      %v2323 = vsel %vm2322, %v2320, %v2317
      %v2324 = vadd.f32 %v2230, 1.0
      %v2325 = vlog2.pop %v2324
      %v2326 = vmul.f32 %v2325, 0.6931472
      %v2327 = vmul.f32 -0.5, %v2230
      %v2328 = vadd.f32 %v2327, 1.0
      %v2329 = vmul.f32 %v2328, %v2230
      %v2330 = vand.u32 2147483647, %v2230
      %vm2331 = vcmp.lt.f32.partialorder %v2330, 0.0004427343
      %v2332 = vsel %vm2331, %v2329, %v2326
      %v2333 = vadd.f32 %v2232, 1.0
      %v2334 = vlog2.pop %v2333
      %v2335 = vmul.f32 %v2334, 0.6931472
      %v2336 = vmul.f32 -0.5, %v2232
      %v2337 = vadd.f32 %v2336, 1.0
      %v2338 = vmul.f32 %v2337, %v2232
      %v2339 = vand.u32 2147483647, %v2232
      %vm2340 = vcmp.lt.f32.partialorder %v2339, 0.0004427343
      %v2341 = vsel %vm2340, %v2338, %v2335
      %v2342 = vadd.f32 %v2234, 1.0
      %v2343 = vlog2.pop %v2342
      %v2344 = vmul.f32 %v2343, 0.6931472
      %v2345 = vmul.f32 -0.5, %v2234
      %v2346 = vadd.f32 %v2345, 1.0
      %v2347 = vmul.f32 %v2346, %v2234
      %v2348 = vand.u32 2147483647, %v2234
      %vm2349 = vcmp.lt.f32.partialorder %v2348, 0.0004427343
      %v2350 = vsel %vm2349, %v2347, %v2344
      %v2351 = vadd.f32 %v2236, 1.0
      %v2352 = vlog2.pop %v2351
      %v2353 = vmul.f32 %v2352, 0.6931472
      %v2354 = vmul.f32 -0.5, %v2236
      %v2355 = vadd.f32 %v2354, 1.0
      %v2356 = vmul.f32 %v2355, %v2236
      %v2357 = vand.u32 2147483647, %v2236
      %vm2358 = vcmp.lt.f32.partialorder %v2357, 0.0004427343
      %v2359 = vsel %vm2358, %v2356, %v2353
      %v2360 = vadd.f32 %v2238, 1.0
      %v2361 = vlog2.pop %v2360
      %v2362 = vmul.f32 %v2361, 0.6931472
      %v2363 = vmul.f32 -0.5, %v2238
      %v2364 = vadd.f32 %v2363, 1.0
      %v2365 = vmul.f32 %v2364, %v2238
      %v2366 = vand.u32 2147483647, %v2238
      %vm2367 = vcmp.lt.f32.partialorder %v2366, 0.0004427343
      %v2368 = vsel %vm2367, %v2365, %v2362
      %v2369 = vadd.f32 %v2240, 1.0
      %v2370 = vlog2.pop %v2369
      %v2371 = vmul.f32 %v2370, 0.6931472
      %v2372 = vmul.f32 -0.5, %v2240
      %v2373 = vadd.f32 %v2372, 1.0
      %v2374 = vmul.f32 %v2373, %v2240
      %v2375 = vand.u32 2147483647, %v2240
      %vm2376 = vcmp.lt.f32.partialorder %v2375, 0.0004427343
      %v2377 = vsel %vm2376, %v2374, %v2371
      %v2378 = vadd.f32 %v2242, 1.0
      %v2379 = vlog2.pop %v2378
      %v2380 = vmul.f32 %v2379, 0.6931472
      %v2381 = vmul.f32 -0.5, %v2242
      %v2382 = vadd.f32 %v2381, 1.0
      %v2383 = vmul.f32 %v2382, %v2242
      %v2384 = vand.u32 2147483647, %v2242
      %vm2385 = vcmp.lt.f32.partialorder %v2384, 0.0004427343
      %v2386 = vsel %vm2385, %v2383, %v2380
      %v2387 = vadd.f32 %v2131, %v2251
      %v2388 = vadd.f32 %v2132, %v2260
      %v2389 = vadd.f32 %v2133, %v2269
      %v2390 = vadd.f32 %v2134, %v2278
      %v2391 = vadd.f32 %v2135, %v2287
      %v2392 = vadd.f32 %v2136, %v2296
      %v2393 = vadd.f32 %v2137, %v2305
      %v2394 = vadd.f32 %v2138, %v2314
      %v2395 = vadd.f32 %v2139, %v2323
      %v2396 = vadd.f32 %v2140, %v2332
      %v2397 = vadd.f32 %v2141, %v2341
      %v2398 = vadd.f32 %v2142, %v2350
      %v2399 = vadd.f32 %v2143, %v2359
      %v2400 = vadd.f32 %v2144, %v2368
      %v2401 = vadd.f32 %v2145, %v2377
      %v2402 = vadd.f32 %v2146, %v2386
      %v2403 = vsel %vm2147, %v2163, %v2387
      %v2404 = vsel %vm2148, %v2164, %v2388
      %v2405 = vsel %vm2149, %v2165, %v2389
      %v2406 = vsel %vm2150, %v2166, %v2390
      %v2407 = vsel %vm2151, %v2167, %v2391
      %v2408 = vsel %vm2152, %v2168, %v2392
      %v2409 = vsel %vm2153, %v2169, %v2393
      %v2410 = vsel %vm2154, %v2170, %v2394
      %v2411 = vsel %vm2155, %v2171, %v2395
      %v2412 = vsel %vm2156, %v2172, %v2396
      %v2413 = vsel %vm2157, %v2173, %v2397
      %v2414 = vsel %vm2158, %v2174, %v2398
      %v2415 = vsel %vm2159, %v2175, %v2399
      %v2416 = vsel %vm2160, %v2176, %v2400
      %v2417 = vsel %vm2161, %v2177, %v2401
      %v2418 = vsel %vm2162, %v2178, %v2402
      %v2419 = vld [vmem:[%s592] sm:$0xff]
      %v2420 = vld [vmem:[%s592 + $0x8] sm:$0xff]
      %v2421 = vld [vmem:[%s592 + $0x10] sm:$0xff]
      %v2422 = vld [vmem:[%s592 + $0x18] sm:$0xff]
      %v2423 = vld [vmem:[%s592 + $0x20] sm:$0xff]
      %v2424 = vld [vmem:[%s592 + $0x28] sm:$0xff]
      %v2425 = vld [vmem:[%s592 + $0x30] sm:$0xff]
      %v2426 = vld [vmem:[%s592 + $0x38] sm:$0xff]
      %v2427 = vld [vmem:[%s592 + $0x40] sm:$0xff]
      %v2428 = vld [vmem:[%s592 + $0x48] sm:$0xff]
      %v2429 = vld [vmem:[%s592 + $0x50] sm:$0xff]
      %v2430 = vld [vmem:[%s592 + $0x58] sm:$0xff]
      %v2431 = vld [vmem:[%s592 + $0x60] sm:$0xff]
      %v2432 = vld [vmem:[%s592 + $0x68] sm:$0xff]
      %v2433 = vld [vmem:[%s592 + $0x70] sm:$0xff]
      %v2434 = vld [vmem:[%s592 + $0x78] sm:$0xff]
      %v2435 = vmul.f32 %v2403, %v2419
      %v2436 = vmul.f32 %v2404, %v2420
      %v2437 = vmul.f32 %v2405, %v2421
      %v2438 = vmul.f32 %v2406, %v2422
      %v2439 = vmul.f32 %v2407, %v2423
      %v2440 = vmul.f32 %v2408, %v2424
      %v2441 = vmul.f32 %v2409, %v2425
      %v2442 = vmul.f32 %v2410, %v2426
      %v2443 = vmul.f32 %v2411, %v2427
      %v2444 = vmul.f32 %v2412, %v2428
      %v2445 = vmul.f32 %v2413, %v2429
      %v2446 = vmul.f32 %v2414, %v2430
      %v2447 = vmul.f32 %v2415, %v2431
      %v2448 = vmul.f32 %v2416, %v2432
      %v2449 = vmul.f32 %v2417, %v2433
      %v2450 = vmul.f32 %v2418, %v2434
      %v2451 = vadd.f32 %v2043, %v2435
      %v2452 = vadd.f32 %v2045, %v2436
      %v2453 = vadd.f32 %v2048, %v2437
      %v2454 = vadd.f32 %v2050, %v2438
      %v2455 = vadd.f32 %v2053, %v2439
      %v2456 = vadd.f32 %v2055, %v2440
      %v2457 = vadd.f32 %v2058, %v2441
      %v2458 = vadd.f32 %v2060, %v2442
      %v2459 = vadd.f32 %v2063, %v2443
      %v2460 = vadd.f32 %v2065, %v2444
      %v2461 = vadd.f32 %v2068, %v2445
      %v2462 = vadd.f32 %v2070, %v2446
      %v2463 = vadd.f32 %v2073, %v2447
      %v2464 = vadd.f32 %v2075, %v2448
      %v2465 = vadd.f32 %v2078, %v2449
      %v2466 = vadd.f32 %v2080, %v2450
      %v2467 = vpack.c.bf16 %v2452, %v2451
      %v2468 = vpack.c.bf16 %v2454, %v2453
      %v2469 = vpack.c.bf16 %v2456, %v2455
      %v2470 = vpack.c.bf16 %v2458, %v2457
      %v2471 = vpack.c.bf16 %v2460, %v2459
      %v2472 = vpack.c.bf16 %v2462, %v2461
      %v2473 = vpack.c.bf16 %v2464, %v2463
      %v2474 = vpack.c.bf16 %v2466, %v2465
      %v2475 = vld [vmem:[%s8] sm:$0xf]
      %v2476 = vld [vmem:[%s8 + $0x4] sm:$0xf]
      %v2477 = vld [vmem:[%s8 + $0x8] sm:$0xf]
      %v2478 = vld [vmem:[%s8 + $0xc] sm:$0xf]
      %v2479 = vld [vmem:[%s8 + $0x10] sm:$0xf]
      %v2480 = vld [vmem:[%s8 + $0x14] sm:$0xf]
      %v2481 = vld [vmem:[%s8 + $0x18] sm:$0xf]
      %v2482 = vld [vmem:[%s8 + $0x1c] sm:$0xf]
      %v2483 = vld [vmem:[%s8 + $0x20] sm:$0xf]
      %v2484 = vld [vmem:[%s8 + $0x24] sm:$0xf]
      %v2485 = vld [vmem:[%s8 + $0x28] sm:$0xf]
      %v2486 = vld [vmem:[%s8 + $0x2c] sm:$0xf]
      %v2487 = vld [vmem:[%s8 + $0x30] sm:$0xf]
      %v2488 = vld [vmem:[%s8 + $0x34] sm:$0xf]
      %v2489 = vld [vmem:[%s8 + $0x38] sm:$0xf]
      %v2490 = vld [vmem:[%s8 + $0x3c] sm:$0xf]
      %v2491 = vld [vmem:[%s9] sm:$0x1]
      %v2493 = vperm.slane %v2491, 0
      %v2511 = vunpack.c.l.b16 %v2475
      %v2512 = vunpack.c.l.b16 %v2476
      %v2513 = vunpack.c.l.b16 %v2477
      %v2514 = vunpack.c.l.b16 %v2478
      %v2515 = vunpack.c.l.b16 %v2479
      %v2516 = vunpack.c.l.b16 %v2480
      %v2517 = vunpack.c.l.b16 %v2481
      %v2518 = vunpack.c.l.b16 %v2482
      %v2519 = vunpack.c.l.b16 %v2483
      %v2520 = vunpack.c.l.b16 %v2484
      %v2521 = vunpack.c.l.b16 %v2485
      %v2522 = vunpack.c.l.b16 %v2486
      %v2523 = vunpack.c.l.b16 %v2487
      %v2524 = vunpack.c.l.b16 %v2488
      %v2525 = vunpack.c.l.b16 %v2489
      %v2526 = vunpack.c.l.b16 %v2490
      %v2527 = vpack.c.b16 %v2512, %v2511
      %v2528 = vpack.c.b16 %v2514, %v2513
      %v2529 = vpack.c.b16 %v2516, %v2515
      %v2530 = vpack.c.b16 %v2518, %v2517
      %v2531 = vpack.c.b16 %v2520, %v2519
      %v2532 = vpack.c.b16 %v2522, %v2521
      %v2533 = vpack.c.b16 %v2524, %v2523
      %v2534 = vpack.c.b16 %v2526, %v2525
      %2543 = vmatpush.bf16.msra.mxu0 %v2534
      %2544 = vmatpush.bf16.msra.mxu0 %v2533
      %2545 = vmatpush.bf16.msra.mxu0 %v2532
      %2546 = vmatpush.bf16.msra.mxu0 %v2531
      %2547 = vmatpush.bf16.msra.mxu0 %v2530
      %2548 = vmatpush.bf16.msra.mxu0 %v2529
      %2549 = vmatpush.bf16.msra.mxu0 %v2528
      %2550 = vmatpush.bf16.msra.mxu0 %v2527
      %2551 = vmatmul.bf16.gmra.mxu0 %v2467
      %v2552 = vpop.f32.mrf.mxu0
      %v2553 = vadd.f32 %v2493, %v2552
      %v2554 = vpop.f32.mrf.mxu0
      %v2555 = vadd.f32 %v2493, %v2554
      %2556 = vmatmul.bf16.gmra.mxu0 %v2468
      %v2557 = vpop.f32.mrf.mxu0
      %v2558 = vadd.f32 %v2493, %v2557
      %v2559 = vpop.f32.mrf.mxu0
      %v2560 = vadd.f32 %v2493, %v2559
      %2561 = vmatmul.bf16.gmra.mxu0 %v2469
      %v2562 = vpop.f32.mrf.mxu0
      %v2563 = vadd.f32 %v2493, %v2562
      %v2564 = vpop.f32.mrf.mxu0
      %v2565 = vadd.f32 %v2493, %v2564
      %2566 = vmatmul.bf16.gmra.mxu0 %v2470
      %v2567 = vpop.f32.mrf.mxu0
      %v2568 = vadd.f32 %v2493, %v2567
      %v2569 = vpop.f32.mrf.mxu0
      %v2570 = vadd.f32 %v2493, %v2569
      %2571 = vmatmul.bf16.gmra.mxu0 %v2471
      %v2572 = vpop.f32.mrf.mxu0
      %v2573 = vadd.f32 %v2493, %v2572
      %v2574 = vpop.f32.mrf.mxu0
      %v2575 = vadd.f32 %v2493, %v2574
      %2576 = vmatmul.bf16.gmra.mxu0 %v2472
      %v2577 = vpop.f32.mrf.mxu0
      %v2578 = vadd.f32 %v2493, %v2577
      %v2579 = vpop.f32.mrf.mxu0
      %v2580 = vadd.f32 %v2493, %v2579
      %2581 = vmatmul.bf16.gmra.mxu0 %v2473
      %v2582 = vpop.f32.mrf.mxu0
      %v2583 = vadd.f32 %v2493, %v2582
      %v2584 = vpop.f32.mrf.mxu0
      %v2585 = vadd.f32 %v2493, %v2584
      %2586 = vmatmul.bf16.gmra.mxu0 %v2474
      %v2587 = vpop.f32.mrf.mxu0
      %v2588 = vadd.f32 %v2493, %v2587
      %v2589 = vpop.f32.mrf.mxu0
      %v2590 = vadd.f32 %v2493, %v2589
      %2591 = vdwg.mxu0
      %v2592 = vmax.f32 %v2553, 0.0
      %v2593 = vmax.f32 %v2555, 0.0
      %v2594 = vmax.f32 %v2558, 0.0
      %v2595 = vmax.f32 %v2560, 0.0
      %v2596 = vmax.f32 %v2563, 0.0
      %v2597 = vmax.f32 %v2565, 0.0
      %v2598 = vmax.f32 %v2568, 0.0
      %v2599 = vmax.f32 %v2570, 0.0
      %v2600 = vmax.f32 %v2573, 0.0
      %v2601 = vmax.f32 %v2575, 0.0
      %v2602 = vmax.f32 %v2578, 0.0
      %v2603 = vmax.f32 %v2580, 0.0
      %v2604 = vmax.f32 %v2583, 0.0
      %v2605 = vmax.f32 %v2585, 0.0
      %v2606 = vmax.f32 %v2588, 0.0
      %v2607 = vmax.f32 %v2590, 0.0
      %v2608 = vpack.c.bf16 %v2593, %v2592
      %v2609 = vpack.c.bf16 %v2595, %v2594
      %v2610 = vpack.c.bf16 %v2597, %v2596
      %v2611 = vpack.c.bf16 %v2599, %v2598
      %v2612 = vpack.c.bf16 %v2601, %v2600
      %v2613 = vpack.c.bf16 %v2603, %v2602
      %v2614 = vpack.c.bf16 %v2605, %v2604
      %v2615 = vpack.c.bf16 %v2607, %v2606
      %v2616 = vld [vmem:[%s10] sm:$0xf]
      %v2617 = vld [vmem:[%s10 + $0x4] sm:$0xf]
      %v2618 = vld [vmem:[%s10 + $0x8] sm:$0xf]
      %v2619 = vld [vmem:[%s10 + $0xc] sm:$0xf]
      %v2620 = vld [vmem:[%s10 + $0x10] sm:$0xf]
      %v2621 = vld [vmem:[%s10 + $0x14] sm:$0xf]
      %v2622 = vld [vmem:[%s10 + $0x18] sm:$0xf]
      %v2623 = vld [vmem:[%s10 + $0x1c] sm:$0xf]
      %v2624 = vld [vmem:[%s10 + $0x20] sm:$0xf]
      %v2625 = vld [vmem:[%s10 + $0x24] sm:$0xf]
      %v2626 = vld [vmem:[%s10 + $0x28] sm:$0xf]
      %v2627 = vld [vmem:[%s10 + $0x2c] sm:$0xf]
      %v2628 = vld [vmem:[%s10 + $0x30] sm:$0xf]
      %v2629 = vld [vmem:[%s10 + $0x34] sm:$0xf]
      %v2630 = vld [vmem:[%s10 + $0x38] sm:$0xf]
      %v2631 = vld [vmem:[%s10 + $0x3c] sm:$0xf]
      %v2632 = vld [vmem:[%s11] sm:$0x1]
      %v2634 = vperm.slane %v2632, 0
      %v2652 = vunpack.c.l.b16 %v2616
      %v2653 = vunpack.c.l.b16 %v2617
      %v2654 = vunpack.c.l.b16 %v2618
      %v2655 = vunpack.c.l.b16 %v2619
      %v2656 = vunpack.c.l.b16 %v2620
      %v2657 = vunpack.c.l.b16 %v2621
      %v2658 = vunpack.c.l.b16 %v2622
      %v2659 = vunpack.c.l.b16 %v2623
      %v2660 = vunpack.c.l.b16 %v2624
      %v2661 = vunpack.c.l.b16 %v2625
      %v2662 = vunpack.c.l.b16 %v2626
      %v2663 = vunpack.c.l.b16 %v2627
      %v2664 = vunpack.c.l.b16 %v2628
      %v2665 = vunpack.c.l.b16 %v2629
      %v2666 = vunpack.c.l.b16 %v2630
      %v2667 = vunpack.c.l.b16 %v2631
      %v2668 = vpack.c.b16 %v2653, %v2652
      %v2669 = vpack.c.b16 %v2655, %v2654
      %v2670 = vpack.c.b16 %v2657, %v2656
      %v2671 = vpack.c.b16 %v2659, %v2658
      %v2672 = vpack.c.b16 %v2661, %v2660
      %v2673 = vpack.c.b16 %v2663, %v2662
      %v2674 = vpack.c.b16 %v2665, %v2664
      %v2675 = vpack.c.b16 %v2667, %v2666
      %2684 = vmatpush.bf16.msra.mxu0 %v2675
      %2685 = vmatpush.bf16.msra.mxu0 %v2674
      %2686 = vmatpush.bf16.msra.mxu0 %v2673
      %2687 = vmatpush.bf16.msra.mxu0 %v2672
      %2688 = vmatpush.bf16.msra.mxu0 %v2671
      %2689 = vmatpush.bf16.msra.mxu0 %v2670
      %2690 = vmatpush.bf16.msra.mxu0 %v2669
      %2691 = vmatpush.bf16.msra.mxu0 %v2668
      %2692 = vmatmul.bf16.gmra.mxu0 %v2608
      %v2693 = vpop.f32.mrf.mxu0
      %v2694 = vadd.f32 %v2634, %v2693
      %v2695 = vpop.f32.mrf.mxu0
      %v2696 = vadd.f32 %v2634, %v2695
      %2697 = vmatmul.bf16.gmra.mxu0 %v2609
      %v2698 = vpop.f32.mrf.mxu0
      %v2699 = vadd.f32 %v2634, %v2698
      %v2700 = vpop.f32.mrf.mxu0
      %v2701 = vadd.f32 %v2634, %v2700
      %2702 = vmatmul.bf16.gmra.mxu0 %v2610
      %v2703 = vpop.f32.mrf.mxu0
      %v2704 = vadd.f32 %v2634, %v2703
      %v2705 = vpop.f32.mrf.mxu0
      %v2706 = vadd.f32 %v2634, %v2705
      %2707 = vmatmul.bf16.gmra.mxu0 %v2611
      %v2708 = vpop.f32.mrf.mxu0
      %v2709 = vadd.f32 %v2634, %v2708
      %v2710 = vpop.f32.mrf.mxu0
      %v2711 = vadd.f32 %v2634, %v2710
      %2712 = vmatmul.bf16.gmra.mxu0 %v2612
      %v2713 = vpop.f32.mrf.mxu0
      %v2714 = vadd.f32 %v2634, %v2713
      %v2715 = vpop.f32.mrf.mxu0
      %v2716 = vadd.f32 %v2634, %v2715
      %2717 = vmatmul.bf16.gmra.mxu0 %v2613
      %v2718 = vpop.f32.mrf.mxu0
      %v2719 = vadd.f32 %v2634, %v2718
      %v2720 = vpop.f32.mrf.mxu0
      %v2721 = vadd.f32 %v2634, %v2720
      %2722 = vmatmul.bf16.gmra.mxu0 %v2614
      %v2723 = vpop.f32.mrf.mxu0
      %v2724 = vadd.f32 %v2634, %v2723
      %v2725 = vpop.f32.mrf.mxu0
      %v2726 = vadd.f32 %v2634, %v2725
      %2727 = vmatmul.bf16.gmra.mxu0 %v2615
      %v2728 = vpop.f32.mrf.mxu0
      %v2729 = vadd.f32 %v2634, %v2728
      %v2730 = vpop.f32.mrf.mxu0
      %v2731 = vadd.f32 %v2634, %v2730
      %2732 = vdwg.mxu0
      %v2733 = vmax.f32 %v2694, 0.0
      %v2734 = vmax.f32 %v2696, 0.0
      %v2735 = vmax.f32 %v2699, 0.0
      %v2736 = vmax.f32 %v2701, 0.0
      %v2737 = vmax.f32 %v2704, 0.0
      %v2738 = vmax.f32 %v2706, 0.0
      %v2739 = vmax.f32 %v2709, 0.0
      %v2740 = vmax.f32 %v2711, 0.0
      %v2741 = vmax.f32 %v2714, 0.0
      %v2742 = vmax.f32 %v2716, 0.0
      %v2743 = vmax.f32 %v2719, 0.0
      %v2744 = vmax.f32 %v2721, 0.0
      %v2745 = vmax.f32 %v2724, 0.0
      %v2746 = vmax.f32 %v2726, 0.0
      %v2747 = vmax.f32 %v2729, 0.0
      %v2748 = vmax.f32 %v2731, 0.0
      %v2749 = vpack.c.bf16 %v2734, %v2733
      %v2750 = vpack.c.bf16 %v2736, %v2735
      %v2751 = vpack.c.bf16 %v2738, %v2737
      %v2752 = vpack.c.bf16 %v2740, %v2739
      %v2753 = vpack.c.bf16 %v2742, %v2741
      %v2754 = vpack.c.bf16 %v2744, %v2743
      %v2755 = vpack.c.bf16 %v2746, %v2745
      %v2756 = vpack.c.bf16 %v2748, %v2747
      %v2757 = vld [vmem:[%s12] sm:$0xff]
      %v2758 = vld [vmem:[%s12 + $0x8] sm:$0xff]
      %v2759 = vld [vmem:[%s12 + $0x10] sm:$0xff]
      %v2760 = vld [vmem:[%s12 + $0x18] sm:$0xf]
      %v2761 = vld [vmem:[%s12 + $0x1c] sm:$0xff]
      %v2762 = vld [vmem:[%s12 + $0x24] sm:$0xff]
      %v2763 = vld [vmem:[%s12 + $0x2c] sm:$0xff]
      %v2764 = vld [vmem:[%s12 + $0x34] sm:$0xf]
      %v2765 = vld [vmem:[%s12 + $0x38] sm:$0xff]
      %v2766 = vld [vmem:[%s12 + $0x40] sm:$0xff]
      %v2767 = vld [vmem:[%s12 + $0x48] sm:$0xff]
      %v2768 = vld [vmem:[%s12 + $0x50] sm:$0xf]
      %v2769 = vld [vmem:[%s12 + $0x54] sm:$0xff]
      %v2770 = vld [vmem:[%s12 + $0x5c] sm:$0xff]
      %v2771 = vld [vmem:[%s12 + $0x64] sm:$0xff]
      %v2772 = vld [vmem:[%s12 + $0x6c] sm:$0xf]
      %v2773 = vld [vmem:[%s12 + $0x70] sm:$0xff]
      %v2774 = vld [vmem:[%s12 + $0x78] sm:$0xff]
      %v2775 = vld [vmem:[%s12 + $0x80] sm:$0xff]
      %v2776 = vld [vmem:[%s12 + $0x88] sm:$0xf]
      %v2777 = vld [vmem:[%s12 + $0x8c] sm:$0xff]
      %v2778 = vld [vmem:[%s12 + $0x94] sm:$0xff]
      %v2779 = vld [vmem:[%s12 + $0x9c] sm:$0xff]
      %v2780 = vld [vmem:[%s12 + $0xa4] sm:$0xf]
      %v2781 = vld [vmem:[%s12 + $0xa8] sm:$0xff]
      %v2782 = vld [vmem:[%s12 + $0xb0] sm:$0xff]
      %v2783 = vld [vmem:[%s12 + $0xb8] sm:$0xff]
      %v2784 = vld [vmem:[%s12 + $0xc0] sm:$0xf]
      %v2785 = vld [vmem:[%s12 + $0xc4] sm:$0xff]
      %v2786 = vld [vmem:[%s12 + $0xcc] sm:$0xff]
      %v2787 = vld [vmem:[%s12 + $0xd4] sm:$0xff]
      %v2788 = vld [vmem:[%s12 + $0xdc] sm:$0xf]
      %v2789 = vld [vmem:[%s12 + $0xe0] sm:$0xff]
      %v2790 = vld [vmem:[%s12 + $0xe8] sm:$0xff]
      %v2791 = vld [vmem:[%s12 + $0xf0] sm:$0xff]
      %v2792 = vld [vmem:[%s12 + $0xf8] sm:$0xf]
      %v2793 = vld [vmem:[%s12 + $0xfc] sm:$0xff]
      %v2794 = vld [vmem:[%s12 + $0x104] sm:$0xff]
      %v2795 = vld [vmem:[%s12 + $0x10c] sm:$0xff]
      %v2796 = vld [vmem:[%s12 + $0x114] sm:$0xf]
      %v2797 = vld [vmem:[%s12 + $0x118] sm:$0xff]
      %v2798 = vld [vmem:[%s12 + $0x120] sm:$0xff]
      %v2799 = vld [vmem:[%s12 + $0x128] sm:$0xff]
      %v2800 = vld [vmem:[%s12 + $0x130] sm:$0xf]
      %v2801 = vld [vmem:[%s12 + $0x134] sm:$0xff]
      %v2802 = vld [vmem:[%s12 + $0x13c] sm:$0xff]
      %v2803 = vld [vmem:[%s12 + $0x144] sm:$0xff]
      %v2804 = vld [vmem:[%s12 + $0x14c] sm:$0xf]
      %v2805 = vld [vmem:[%s12 + $0x150] sm:$0xff]
      %v2806 = vld [vmem:[%s12 + $0x158] sm:$0xff]
      %v2807 = vld [vmem:[%s12 + $0x160] sm:$0xff]
      %v2808 = vld [vmem:[%s12 + $0x168] sm:$0xf]
      %v2809 = vld [vmem:[%s12 + $0x16c] sm:$0xff]
      %v2810 = vld [vmem:[%s12 + $0x174] sm:$0xff]
      %v2811 = vld [vmem:[%s12 + $0x17c] sm:$0xff]
      %v2812 = vld [vmem:[%s12 + $0x184] sm:$0xf]
      %v2813 = vld [vmem:[%s12 + $0x188] sm:$0xff]
      %v2814 = vld [vmem:[%s12 + $0x190] sm:$0xff]
      %v2815 = vld [vmem:[%s12 + $0x198] sm:$0xff]
      %v2816 = vld [vmem:[%s12 + $0x1a0] sm:$0xf]
      %v2817 = vld [vmem:[%s12 + $0x1a4] sm:$0xff]
      %v2818 = vld [vmem:[%s12 + $0x1ac] sm:$0xff]
      %v2819 = vld [vmem:[%s12 + $0x1b4] sm:$0xff]
      %v2820 = vld [vmem:[%s12 + $0x1bc] sm:$0xf]
      %v2821 = vld [vmem:[%s13] sm:$0xff]
      %v2823 = vperm.slane %v2821, 0
      %v2824 = vperm.slane %v2821, 1
      %v2825 = vperm.slane %v2821, 2
      %v2826 = vperm.slane %v2821, 3
      %v2827 = vperm.slane %v2821, 4
      %v2828 = vperm.slane %v2821, 5
      %v2829 = vperm.slane %v2821, 6
      %v2901 = vunpack.c.l.b16 %v2757
      %v2902 = vunpack.c.h.b16 %v2757
      %v2903 = vunpack.c.l.b16 %v2758
      %v2904 = vunpack.c.h.b16 %v2758
      %v2905 = vunpack.c.l.b16 %v2759
      %v2906 = vunpack.c.h.b16 %v2759
      %v2907 = vunpack.c.l.b16 %v2760
      %v2908 = vunpack.c.l.b16 %v2761
      %v2909 = vunpack.c.h.b16 %v2761
      %v2910 = vunpack.c.l.b16 %v2762
      %v2911 = vunpack.c.h.b16 %v2762
      %v2912 = vunpack.c.l.b16 %v2763
      %v2913 = vunpack.c.h.b16 %v2763
      %v2914 = vunpack.c.l.b16 %v2764
      %v2915 = vunpack.c.l.b16 %v2765
      %v2916 = vunpack.c.h.b16 %v2765
      %v2917 = vunpack.c.l.b16 %v2766
      %v2918 = vunpack.c.h.b16 %v2766
      %v2919 = vunpack.c.l.b16 %v2767
      %v2920 = vunpack.c.h.b16 %v2767
      %v2921 = vunpack.c.l.b16 %v2768
      %v2922 = vunpack.c.l.b16 %v2769
      %v2923 = vunpack.c.h.b16 %v2769
      %v2924 = vunpack.c.l.b16 %v2770
      %v2925 = vunpack.c.h.b16 %v2770
      %v2926 = vunpack.c.l.b16 %v2771
      %v2927 = vunpack.c.h.b16 %v2771
      %v2928 = vunpack.c.l.b16 %v2772
      %v2929 = vunpack.c.l.b16 %v2773
      %v2930 = vunpack.c.h.b16 %v2773
      %v2931 = vunpack.c.l.b16 %v2774
      %v2932 = vunpack.c.h.b16 %v2774
      %v2933 = vunpack.c.l.b16 %v2775
      %v2934 = vunpack.c.h.b16 %v2775
      %v2935 = vunpack.c.l.b16 %v2776
      %v2936 = vunpack.c.l.b16 %v2777
      %v2937 = vunpack.c.h.b16 %v2777
      %v2938 = vunpack.c.l.b16 %v2778
      %v2939 = vunpack.c.h.b16 %v2778
      %v2940 = vunpack.c.l.b16 %v2779
      %v2941 = vunpack.c.h.b16 %v2779
      %v2942 = vunpack.c.l.b16 %v2780
      %v2943 = vunpack.c.l.b16 %v2781
      %v2944 = vunpack.c.h.b16 %v2781
      %v2945 = vunpack.c.l.b16 %v2782
      %v2946 = vunpack.c.h.b16 %v2782
      %v2947 = vunpack.c.l.b16 %v2783
      %v2948 = vunpack.c.h.b16 %v2783
      %v2949 = vunpack.c.l.b16 %v2784
      %v2950 = vunpack.c.l.b16 %v2785
      %v2951 = vunpack.c.h.b16 %v2785
      %v2952 = vunpack.c.l.b16 %v2786
      %v2953 = vunpack.c.h.b16 %v2786
      %v2954 = vunpack.c.l.b16 %v2787
      %v2955 = vunpack.c.h.b16 %v2787
      %v2956 = vunpack.c.l.b16 %v2788
      %v2957 = vunpack.c.l.b16 %v2789
      %v2958 = vunpack.c.h.b16 %v2789
      %v2959 = vunpack.c.l.b16 %v2790
      %v2960 = vunpack.c.h.b16 %v2790
      %v2961 = vunpack.c.l.b16 %v2791
      %v2962 = vunpack.c.h.b16 %v2791
      %v2963 = vunpack.c.l.b16 %v2792
      %v2964 = vunpack.c.l.b16 %v2793
      %v2965 = vunpack.c.h.b16 %v2793
      %v2966 = vunpack.c.l.b16 %v2794
      %v2967 = vunpack.c.h.b16 %v2794
      %v2968 = vunpack.c.l.b16 %v2795
      %v2969 = vunpack.c.h.b16 %v2795
      %v2970 = vunpack.c.l.b16 %v2796
      %v2971 = vunpack.c.l.b16 %v2797
      %v2972 = vunpack.c.h.b16 %v2797
      %v2973 = vunpack.c.l.b16 %v2798
      %v2974 = vunpack.c.h.b16 %v2798
      %v2975 = vunpack.c.l.b16 %v2799
      %v2976 = vunpack.c.h.b16 %v2799
      %v2977 = vunpack.c.l.b16 %v2800
      %v2978 = vunpack.c.l.b16 %v2801
      %v2979 = vunpack.c.h.b16 %v2801
      %v2980 = vunpack.c.l.b16 %v2802
      %v2981 = vunpack.c.h.b16 %v2802
      %v2982 = vunpack.c.l.b16 %v2803
      %v2983 = vunpack.c.h.b16 %v2803
      %v2984 = vunpack.c.l.b16 %v2804
      %v2985 = vunpack.c.l.b16 %v2805
      %v2986 = vunpack.c.h.b16 %v2805
      %v2987 = vunpack.c.l.b16 %v2806
      %v2988 = vunpack.c.h.b16 %v2806
      %v2989 = vunpack.c.l.b16 %v2807
      %v2990 = vunpack.c.h.b16 %v2807
      %v2991 = vunpack.c.l.b16 %v2808
      %v2992 = vunpack.c.l.b16 %v2809
      %v2993 = vunpack.c.h.b16 %v2809
      %v2994 = vunpack.c.l.b16 %v2810
      %v2995 = vunpack.c.h.b16 %v2810
      %v2996 = vunpack.c.l.b16 %v2811
      %v2997 = vunpack.c.h.b16 %v2811
      %v2998 = vunpack.c.l.b16 %v2812
      %v2999 = vunpack.c.l.b16 %v2813
      %v3000 = vunpack.c.h.b16 %v2813
      %v3001 = vunpack.c.l.b16 %v2814
      %v3002 = vunpack.c.h.b16 %v2814
      %v3003 = vunpack.c.l.b16 %v2815
      %v3004 = vunpack.c.h.b16 %v2815
      %v3005 = vunpack.c.l.b16 %v2816
      %v3006 = vunpack.c.l.b16 %v2817
      %v3007 = vunpack.c.h.b16 %v2817
      %v3008 = vunpack.c.l.b16 %v2818
      %v3009 = vunpack.c.h.b16 %v2818
      %v3010 = vunpack.c.l.b16 %v2819
      %v3011 = vunpack.c.h.b16 %v2819
      %v3012 = vunpack.c.l.b16 %v2820
      %v3013 = vpack.c.b16 %v2908, %v2901
      %v3014 = vpack.c.b16 %v2909, %v2902
      %v3015 = vpack.c.b16 %v2910, %v2903
      %v3016 = vpack.c.b16 %v2911, %v2904
      %v3017 = vpack.c.b16 %v2912, %v2905
      %v3018 = vpack.c.b16 %v2913, %v2906
      %v3019 = vpack.c.b16 %v2914, %v2907
      %v3020 = vpack.c.b16 %v2922, %v2915
      %v3021 = vpack.c.b16 %v2923, %v2916
      %v3022 = vpack.c.b16 %v2924, %v2917
      %v3023 = vpack.c.b16 %v2925, %v2918
      %v3024 = vpack.c.b16 %v2926, %v2919
      %v3025 = vpack.c.b16 %v2927, %v2920
      %v3026 = vpack.c.b16 %v2928, %v2921
      %v3027 = vpack.c.b16 %v2936, %v2929
      %v3028 = vpack.c.b16 %v2937, %v2930
      %v3029 = vpack.c.b16 %v2938, %v2931
      %v3030 = vpack.c.b16 %v2939, %v2932
      %v3031 = vpack.c.b16 %v2940, %v2933
      %v3032 = vpack.c.b16 %v2941, %v2934
      %v3033 = vpack.c.b16 %v2942, %v2935
      %v3034 = vpack.c.b16 %v2950, %v2943
      %v3035 = vpack.c.b16 %v2951, %v2944
      %v3036 = vpack.c.b16 %v2952, %v2945
      %v3037 = vpack.c.b16 %v2953, %v2946
      %v3038 = vpack.c.b16 %v2954, %v2947
      %v3039 = vpack.c.b16 %v2955, %v2948
      %v3040 = vpack.c.b16 %v2956, %v2949
      %v3041 = vpack.c.b16 %v2964, %v2957
      %v3042 = vpack.c.b16 %v2965, %v2958
      %v3043 = vpack.c.b16 %v2966, %v2959
      %v3044 = vpack.c.b16 %v2967, %v2960
      %v3045 = vpack.c.b16 %v2968, %v2961
      %v3046 = vpack.c.b16 %v2969, %v2962
      %v3047 = vpack.c.b16 %v2970, %v2963
      %v3048 = vpack.c.b16 %v2978, %v2971
      %v3049 = vpack.c.b16 %v2979, %v2972
      %v3050 = vpack.c.b16 %v2980, %v2973
      %v3051 = vpack.c.b16 %v2981, %v2974
      %v3052 = vpack.c.b16 %v2982, %v2975
      %v3053 = vpack.c.b16 %v2983, %v2976
      %v3054 = vpack.c.b16 %v2984, %v2977
      %v3055 = vpack.c.b16 %v2992, %v2985
      %v3056 = vpack.c.b16 %v2993, %v2986
      %v3057 = vpack.c.b16 %v2994, %v2987
      %v3058 = vpack.c.b16 %v2995, %v2988
      %v3059 = vpack.c.b16 %v2996, %v2989
      %v3060 = vpack.c.b16 %v2997, %v2990
      %v3061 = vpack.c.b16 %v2998, %v2991
      %v3062 = vpack.c.b16 %v3006, %v2999
      %v3063 = vpack.c.b16 %v3007, %v3000
      %v3064 = vpack.c.b16 %v3008, %v3001
      %v3065 = vpack.c.b16 %v3009, %v3002
      %v3066 = vpack.c.b16 %v3010, %v3003
      %v3067 = vpack.c.b16 %v3011, %v3004
      %v3068 = vpack.c.b16 %v3012, %v3005
      %3125 = vmatpush.bf16.msra.mxu0 %v3062
      %3126 = vmatpush.bf16.msra.mxu0 %v3055
      %3127 = vmatpush.bf16.msra.mxu0 %v3048
      %3128 = vmatpush.bf16.msra.mxu0 %v3041
      %3129 = vmatpush.bf16.msra.mxu0 %v3034
      %3130 = vmatpush.bf16.msra.mxu0 %v3027
      %3131 = vmatpush.bf16.msra.mxu0 %v3020
      %3132 = vmatpush.bf16.msra.mxu0 %v3013
      %3133 = vmatmul.bf16.gmra.mxu0 %v2749
      %v3134 = vpop.f32.mrf.mxu0
      %v3135 = vadd.f32 %v2823, %v3134
      %v3136 = vpop.f32.mrf.mxu0
      %v3137 = vadd.f32 %v2823, %v3136
      %3138 = vmatmul.bf16.gmra.mxu0 %v2750
      %v3139 = vpop.f32.mrf.mxu0
      %v3140 = vadd.f32 %v2823, %v3139
      %v3141 = vpop.f32.mrf.mxu0
      %v3142 = vadd.f32 %v2823, %v3141
      %3143 = vmatmul.bf16.gmra.mxu0 %v2751
      %v3144 = vpop.f32.mrf.mxu0
      %v3145 = vadd.f32 %v2823, %v3144
      %v3146 = vpop.f32.mrf.mxu0
      %v3147 = vadd.f32 %v2823, %v3146
      %3148 = vmatmul.bf16.gmra.mxu0 %v2752
      %v3149 = vpop.f32.mrf.mxu0
      %v3150 = vadd.f32 %v2823, %v3149
      %v3151 = vpop.f32.mrf.mxu0
      %v3152 = vadd.f32 %v2823, %v3151
      %3153 = vmatmul.bf16.gmra.mxu0 %v2753
      %v3154 = vpop.f32.mrf.mxu0
      %v3155 = vadd.f32 %v2823, %v3154
      %v3156 = vpop.f32.mrf.mxu0
      %v3157 = vadd.f32 %v2823, %v3156
      %3158 = vmatmul.bf16.gmra.mxu0 %v2754
      %v3159 = vpop.f32.mrf.mxu0
      %v3160 = vadd.f32 %v2823, %v3159
      %v3161 = vpop.f32.mrf.mxu0
      %v3162 = vadd.f32 %v2823, %v3161
      %3163 = vmatmul.bf16.gmra.mxu0 %v2755
      %v3164 = vpop.f32.mrf.mxu0
      %v3165 = vadd.f32 %v2823, %v3164
      %v3166 = vpop.f32.mrf.mxu0
      %v3167 = vadd.f32 %v2823, %v3166
      %3168 = vmatmul.bf16.gmra.mxu0 %v2756
      %v3169 = vpop.f32.mrf.mxu0
      %v3170 = vadd.f32 %v2823, %v3169
      %v3171 = vpop.f32.mrf.mxu0
      %v3172 = vadd.f32 %v2823, %v3171
      %3173 = vdwg.mxu0
      %3174 = vmatpush.bf16.msra.mxu0 %v3063
      %3175 = vmatpush.bf16.msra.mxu0 %v3056
      %3176 = vmatpush.bf16.msra.mxu0 %v3049
      %3177 = vmatpush.bf16.msra.mxu0 %v3042
      %3178 = vmatpush.bf16.msra.mxu0 %v3035
      %3179 = vmatpush.bf16.msra.mxu0 %v3028
      %3180 = vmatpush.bf16.msra.mxu0 %v3021
      %3181 = vmatpush.bf16.msra.mxu0 %v3014
      %3182 = vmatmul.bf16.gmra.mxu0 %v2749
      %v3183 = vpop.f32.mrf.mxu0
      %v3184 = vadd.f32 %v2824, %v3183
      %v3185 = vpop.f32.mrf.mxu0
      %v3186 = vadd.f32 %v2824, %v3185
      %3187 = vmatmul.bf16.gmra.mxu0 %v2750
      %v3188 = vpop.f32.mrf.mxu0
      %v3189 = vadd.f32 %v2824, %v3188
      %v3190 = vpop.f32.mrf.mxu0
      %v3191 = vadd.f32 %v2824, %v3190
      %3192 = vmatmul.bf16.gmra.mxu0 %v2751
      %v3193 = vpop.f32.mrf.mxu0
      %v3194 = vadd.f32 %v2824, %v3193
      %v3195 = vpop.f32.mrf.mxu0
      %v3196 = vadd.f32 %v2824, %v3195
      %3197 = vmatmul.bf16.gmra.mxu0 %v2752
      %v3198 = vpop.f32.mrf.mxu0
      %v3199 = vadd.f32 %v2824, %v3198
      %v3200 = vpop.f32.mrf.mxu0
      %v3201 = vadd.f32 %v2824, %v3200
      %3202 = vmatmul.bf16.gmra.mxu0 %v2753
      %v3203 = vpop.f32.mrf.mxu0
      %v3204 = vadd.f32 %v2824, %v3203
      %v3205 = vpop.f32.mrf.mxu0
      %v3206 = vadd.f32 %v2824, %v3205
      %3207 = vmatmul.bf16.gmra.mxu0 %v2754
      %v3208 = vpop.f32.mrf.mxu0
      %v3209 = vadd.f32 %v2824, %v3208
      %v3210 = vpop.f32.mrf.mxu0
      %v3211 = vadd.f32 %v2824, %v3210
      %3212 = vmatmul.bf16.gmra.mxu0 %v2755
      %v3213 = vpop.f32.mrf.mxu0
      %v3214 = vadd.f32 %v2824, %v3213
      %v3215 = vpop.f32.mrf.mxu0
      %v3216 = vadd.f32 %v2824, %v3215
      %3217 = vmatmul.bf16.gmra.mxu0 %v2756
      %v3218 = vpop.f32.mrf.mxu0
      %v3219 = vadd.f32 %v2824, %v3218
      %v3220 = vpop.f32.mrf.mxu0
      %v3221 = vadd.f32 %v2824, %v3220
      %3222 = vdwg.mxu0
      %3223 = vmatpush.bf16.msra.mxu0 %v3064
      %3224 = vmatpush.bf16.msra.mxu0 %v3057
      %3225 = vmatpush.bf16.msra.mxu0 %v3050
      %3226 = vmatpush.bf16.msra.mxu0 %v3043
      %3227 = vmatpush.bf16.msra.mxu0 %v3036
      %3228 = vmatpush.bf16.msra.mxu0 %v3029
      %3229 = vmatpush.bf16.msra.mxu0 %v3022
      %3230 = vmatpush.bf16.msra.mxu0 %v3015
      %3231 = vmatmul.bf16.gmra.mxu0 %v2749
      %v3232 = vpop.f32.mrf.mxu0
      %v3233 = vadd.f32 %v2825, %v3232
      %v3234 = vpop.f32.mrf.mxu0
      %v3235 = vadd.f32 %v2825, %v3234
      %3236 = vmatmul.bf16.gmra.mxu0 %v2750
      %v3237 = vpop.f32.mrf.mxu0
      %v3238 = vadd.f32 %v2825, %v3237
      %v3239 = vpop.f32.mrf.mxu0
      %v3240 = vadd.f32 %v2825, %v3239
      %3241 = vmatmul.bf16.gmra.mxu0 %v2751
      %v3242 = vpop.f32.mrf.mxu0
      %v3243 = vadd.f32 %v2825, %v3242
      %v3244 = vpop.f32.mrf.mxu0
      %v3245 = vadd.f32 %v2825, %v3244
      %3246 = vmatmul.bf16.gmra.mxu0 %v2752
      %v3247 = vpop.f32.mrf.mxu0
      %v3248 = vadd.f32 %v2825, %v3247
      %v3249 = vpop.f32.mrf.mxu0
      %v3250 = vadd.f32 %v2825, %v3249
      %3251 = vmatmul.bf16.gmra.mxu0 %v2753
      %v3252 = vpop.f32.mrf.mxu0
      %v3253 = vadd.f32 %v2825, %v3252
      %v3254 = vpop.f32.mrf.mxu0
      %v3255 = vadd.f32 %v2825, %v3254
      %3256 = vmatmul.bf16.gmra.mxu0 %v2754
      %v3257 = vpop.f32.mrf.mxu0
      %v3258 = vadd.f32 %v2825, %v3257
      %v3259 = vpop.f32.mrf.mxu0
      %v3260 = vadd.f32 %v2825, %v3259
      %3261 = vmatmul.bf16.gmra.mxu0 %v2755
      %v3262 = vpop.f32.mrf.mxu0
      %v3263 = vadd.f32 %v2825, %v3262
      %v3264 = vpop.f32.mrf.mxu0
      %v3265 = vadd.f32 %v2825, %v3264
      %3266 = vmatmul.bf16.gmra.mxu0 %v2756
      %v3267 = vpop.f32.mrf.mxu0
      %v3268 = vadd.f32 %v2825, %v3267
      %v3269 = vpop.f32.mrf.mxu0
      %v3270 = vadd.f32 %v2825, %v3269
      %3271 = vdwg.mxu0
      %3272 = vmatpush.bf16.msra.mxu0 %v3065
      %3273 = vmatpush.bf16.msra.mxu0 %v3058
      %3274 = vmatpush.bf16.msra.mxu0 %v3051
      %3275 = vmatpush.bf16.msra.mxu0 %v3044
      %3276 = vmatpush.bf16.msra.mxu0 %v3037
      %3277 = vmatpush.bf16.msra.mxu0 %v3030
      %3278 = vmatpush.bf16.msra.mxu0 %v3023
      %3279 = vmatpush.bf16.msra.mxu0 %v3016
      %3280 = vmatmul.bf16.gmra.mxu0 %v2749
      %v3281 = vpop.f32.mrf.mxu0
      %v3282 = vadd.f32 %v2826, %v3281
      %v3283 = vpop.f32.mrf.mxu0
      %v3284 = vadd.f32 %v2826, %v3283
      %3285 = vmatmul.bf16.gmra.mxu0 %v2750
      %v3286 = vpop.f32.mrf.mxu0
      %v3287 = vadd.f32 %v2826, %v3286
      %v3288 = vpop.f32.mrf.mxu0
      %v3289 = vadd.f32 %v2826, %v3288
      %3290 = vmatmul.bf16.gmra.mxu0 %v2751
      %v3291 = vpop.f32.mrf.mxu0
      %v3292 = vadd.f32 %v2826, %v3291
      %v3293 = vpop.f32.mrf.mxu0
      %v3294 = vadd.f32 %v2826, %v3293
      %3295 = vmatmul.bf16.gmra.mxu0 %v2752
      %v3296 = vpop.f32.mrf.mxu0
      %v3297 = vadd.f32 %v2826, %v3296
      %v3298 = vpop.f32.mrf.mxu0
      %v3299 = vadd.f32 %v2826, %v3298
      %3300 = vmatmul.bf16.gmra.mxu0 %v2753
      %v3301 = vpop.f32.mrf.mxu0
      %v3302 = vadd.f32 %v2826, %v3301
      %v3303 = vpop.f32.mrf.mxu0
      %v3304 = vadd.f32 %v2826, %v3303
      %3305 = vmatmul.bf16.gmra.mxu0 %v2754
      %v3306 = vpop.f32.mrf.mxu0
      %v3307 = vadd.f32 %v2826, %v3306
      %v3308 = vpop.f32.mrf.mxu0
      %v3309 = vadd.f32 %v2826, %v3308
      %3310 = vmatmul.bf16.gmra.mxu0 %v2755
      %v3311 = vpop.f32.mrf.mxu0
      %v3312 = vadd.f32 %v2826, %v3311
      %v3313 = vpop.f32.mrf.mxu0
      %v3314 = vadd.f32 %v2826, %v3313
      %3315 = vmatmul.bf16.gmra.mxu0 %v2756
      %v3316 = vpop.f32.mrf.mxu0
      %v3317 = vadd.f32 %v2826, %v3316
      %v3318 = vpop.f32.mrf.mxu0
      %v3319 = vadd.f32 %v2826, %v3318
      %3320 = vdwg.mxu0
      %3321 = vmatpush.bf16.msra.mxu0 %v3066
      %3322 = vmatpush.bf16.msra.mxu0 %v3059
      %3323 = vmatpush.bf16.msra.mxu0 %v3052
      %3324 = vmatpush.bf16.msra.mxu0 %v3045
      %3325 = vmatpush.bf16.msra.mxu0 %v3038
      %3326 = vmatpush.bf16.msra.mxu0 %v3031
      %3327 = vmatpush.bf16.msra.mxu0 %v3024
      %3328 = vmatpush.bf16.msra.mxu0 %v3017
      %3329 = vmatmul.bf16.gmra.mxu0 %v2749
      %v3330 = vpop.f32.mrf.mxu0
      %v3331 = vadd.f32 %v2827, %v3330
      %v3332 = vpop.f32.mrf.mxu0
      %v3333 = vadd.f32 %v2827, %v3332
      %3334 = vmatmul.bf16.gmra.mxu0 %v2750
      %v3335 = vpop.f32.mrf.mxu0
      %v3336 = vadd.f32 %v2827, %v3335
      %v3337 = vpop.f32.mrf.mxu0
      %v3338 = vadd.f32 %v2827, %v3337
      %3339 = vmatmul.bf16.gmra.mxu0 %v2751
      %v3340 = vpop.f32.mrf.mxu0
      %v3341 = vadd.f32 %v2827, %v3340
      %v3342 = vpop.f32.mrf.mxu0
      %v3343 = vadd.f32 %v2827, %v3342
      %3344 = vmatmul.bf16.gmra.mxu0 %v2752
      %v3345 = vpop.f32.mrf.mxu0
      %v3346 = vadd.f32 %v2827, %v3345
      %v3347 = vpop.f32.mrf.mxu0
      %v3348 = vadd.f32 %v2827, %v3347
      %3349 = vmatmul.bf16.gmra.mxu0 %v2753
      %v3350 = vpop.f32.mrf.mxu0
      %v3351 = vadd.f32 %v2827, %v3350
      %v3352 = vpop.f32.mrf.mxu0
      %v3353 = vadd.f32 %v2827, %v3352
      %3354 = vmatmul.bf16.gmra.mxu0 %v2754
      %v3355 = vpop.f32.mrf.mxu0
      %v3356 = vadd.f32 %v2827, %v3355
      %v3357 = vpop.f32.mrf.mxu0
      %v3358 = vadd.f32 %v2827, %v3357
      %3359 = vmatmul.bf16.gmra.mxu0 %v2755
      %v3360 = vpop.f32.mrf.mxu0
      %v3361 = vadd.f32 %v2827, %v3360
      %v3362 = vpop.f32.mrf.mxu0
      %v3363 = vadd.f32 %v2827, %v3362
      %3364 = vmatmul.bf16.gmra.mxu0 %v2756
      %v3365 = vpop.f32.mrf.mxu0
      %v3366 = vadd.f32 %v2827, %v3365
      %v3367 = vpop.f32.mrf.mxu0
      %v3368 = vadd.f32 %v2827, %v3367
      %3369 = vdwg.mxu0
      %3370 = vmatpush.bf16.msra.mxu0 %v3067
      %3371 = vmatpush.bf16.msra.mxu0 %v3060
      %3372 = vmatpush.bf16.msra.mxu0 %v3053
      %3373 = vmatpush.bf16.msra.mxu0 %v3046
      %3374 = vmatpush.bf16.msra.mxu0 %v3039
      %3375 = vmatpush.bf16.msra.mxu0 %v3032
      %3376 = vmatpush.bf16.msra.mxu0 %v3025
      %3377 = vmatpush.bf16.msra.mxu0 %v3018
      %3378 = vmatmul.bf16.gmra.mxu0 %v2749
      %v3379 = vpop.f32.mrf.mxu0
      %v3380 = vadd.f32 %v2828, %v3379
      %v3381 = vpop.f32.mrf.mxu0
      %v3382 = vadd.f32 %v2828, %v3381
      %3383 = vmatmul.bf16.gmra.mxu0 %v2750
      %v3384 = vpop.f32.mrf.mxu0
      %v3385 = vadd.f32 %v2828, %v3384
      %v3386 = vpop.f32.mrf.mxu0
      %v3387 = vadd.f32 %v2828, %v3386
      %3388 = vmatmul.bf16.gmra.mxu0 %v2751
      %v3389 = vpop.f32.mrf.mxu0
      %v3390 = vadd.f32 %v2828, %v3389
      %v3391 = vpop.f32.mrf.mxu0
      %v3392 = vadd.f32 %v2828, %v3391
      %3393 = vmatmul.bf16.gmra.mxu0 %v2752
      %v3394 = vpop.f32.mrf.mxu0
      %v3395 = vadd.f32 %v2828, %v3394
      %v3396 = vpop.f32.mrf.mxu0
      %v3397 = vadd.f32 %v2828, %v3396
      %3398 = vmatmul.bf16.gmra.mxu0 %v2753
      %v3399 = vpop.f32.mrf.mxu0
      %v3400 = vadd.f32 %v2828, %v3399
      %v3401 = vpop.f32.mrf.mxu0
      %v3402 = vadd.f32 %v2828, %v3401
      %3403 = vmatmul.bf16.gmra.mxu0 %v2754
      %v3404 = vpop.f32.mrf.mxu0
      %v3405 = vadd.f32 %v2828, %v3404
      %v3406 = vpop.f32.mrf.mxu0
      %v3407 = vadd.f32 %v2828, %v3406
      %3408 = vmatmul.bf16.gmra.mxu0 %v2755
      %v3409 = vpop.f32.mrf.mxu0
      %v3410 = vadd.f32 %v2828, %v3409
      %v3411 = vpop.f32.mrf.mxu0
      %v3412 = vadd.f32 %v2828, %v3411
      %3413 = vmatmul.bf16.gmra.mxu0 %v2756
      %v3414 = vpop.f32.mrf.mxu0
      %v3415 = vadd.f32 %v2828, %v3414
      %v3416 = vpop.f32.mrf.mxu0
      %v3417 = vadd.f32 %v2828, %v3416
      %3418 = vdwg.mxu0
      %3419 = vmatpush.bf16.msra.mxu0 %v3068
      %3420 = vmatpush.bf16.msra.mxu0 %v3061
      %3421 = vmatpush.bf16.msra.mxu0 %v3054
      %3422 = vmatpush.bf16.msra.mxu0 %v3047
      %3423 = vmatpush.bf16.msra.mxu0 %v3040
      %3424 = vmatpush.bf16.msra.mxu0 %v3033
      %3425 = vmatpush.bf16.msra.mxu0 %v3026
      %3426 = vmatpush.bf16.msra.mxu0 %v3019
      %3427 = vmatmul.bf16.gmra.mxu0 %v2749
      %v3428 = vpop.f32.mrf.mxu0
      %v3429 = vadd.f32 %v2829, %v3428
      %v3430 = vpop.f32.mrf.mxu0
      %v3431 = vadd.f32 %v2829, %v3430
      %3432 = vmatmul.bf16.gmra.mxu0 %v2750
      %v3433 = vpop.f32.mrf.mxu0
      %v3434 = vadd.f32 %v2829, %v3433
      %v3435 = vpop.f32.mrf.mxu0
      %v3436 = vadd.f32 %v2829, %v3435
      %3437 = vmatmul.bf16.gmra.mxu0 %v2751
      %v3438 = vpop.f32.mrf.mxu0
      %v3439 = vadd.f32 %v2829, %v3438
      %v3440 = vpop.f32.mrf.mxu0
      %v3441 = vadd.f32 %v2829, %v3440
      %3442 = vmatmul.bf16.gmra.mxu0 %v2752
      %v3443 = vpop.f32.mrf.mxu0
      %v3444 = vadd.f32 %v2829, %v3443
      %v3445 = vpop.f32.mrf.mxu0
      %v3446 = vadd.f32 %v2829, %v3445
      %3447 = vmatmul.bf16.gmra.mxu0 %v2753
      %v3448 = vpop.f32.mrf.mxu0
      %v3449 = vadd.f32 %v2829, %v3448
      %v3450 = vpop.f32.mrf.mxu0
      %v3451 = vadd.f32 %v2829, %v3450
      %3452 = vmatmul.bf16.gmra.mxu0 %v2754
      %v3453 = vpop.f32.mrf.mxu0
      %v3454 = vadd.f32 %v2829, %v3453
      %v3455 = vpop.f32.mrf.mxu0
      %v3456 = vadd.f32 %v2829, %v3455
      %3457 = vmatmul.bf16.gmra.mxu0 %v2755
      %v3458 = vpop.f32.mrf.mxu0
      %v3459 = vadd.f32 %v2829, %v3458
      %v3460 = vpop.f32.mrf.mxu0
      %v3461 = vadd.f32 %v2829, %v3460
      %3462 = vmatmul.bf16.gmra.mxu0 %v2756
      %v3463 = vpop.f32.mrf.mxu0
      %v3464 = vadd.f32 %v2829, %v3463
      %v3465 = vpop.f32.mrf.mxu0
      %v3466 = vadd.f32 %v2829, %v3465
      %3467 = vdwg.mxu0
      %3468 = vst [vmem:[%s598] sm:$0xff] %v2043
      %3469 = vst [vmem:[%s598 + $0x8] sm:$0xff] %v2045
      %3470 = vst [vmem:[%s598 + $0x10] sm:$0xff] %v2048
      %3471 = vst [vmem:[%s598 + $0x18] sm:$0xff] %v2050
      %3472 = vst [vmem:[%s598 + $0x20] sm:$0xff] %v2053
      %3473 = vst [vmem:[%s598 + $0x28] sm:$0xff] %v2055
      %3474 = vst [vmem:[%s598 + $0x30] sm:$0xff] %v2058
      %3475 = vst [vmem:[%s598 + $0x38] sm:$0xff] %v2060
      %3476 = vst [vmem:[%s598 + $0x40] sm:$0xff] %v2063
      %3477 = vst [vmem:[%s598 + $0x48] sm:$0xff] %v2065
      %3478 = vst [vmem:[%s598 + $0x50] sm:$0xff] %v2068
      %3479 = vst [vmem:[%s598 + $0x58] sm:$0xff] %v2070
      %3480 = vst [vmem:[%s598 + $0x60] sm:$0xff] %v2073
      %3481 = vst [vmem:[%s598 + $0x68] sm:$0xff] %v2075
      %3482 = vst [vmem:[%s598 + $0x70] sm:$0xff] %v2078
      %3483 = vst [vmem:[%s598 + $0x78] sm:$0xff] %v2080
      %3484 = vst [vmem:[%s604] sm:$0xff] %v2403
      %3485 = vst [vmem:[%s604 + $0x8] sm:$0xff] %v2404
      %3486 = vst [vmem:[%s604 + $0x10] sm:$0xff] %v2405
      %3487 = vst [vmem:[%s604 + $0x18] sm:$0xff] %v2406
      %3488 = vst [vmem:[%s604 + $0x20] sm:$0xff] %v2407
      %3489 = vst [vmem:[%s604 + $0x28] sm:$0xff] %v2408
      %3490 = vst [vmem:[%s604 + $0x30] sm:$0xff] %v2409
      %3491 = vst [vmem:[%s604 + $0x38] sm:$0xff] %v2410
      %3492 = vst [vmem:[%s604 + $0x40] sm:$0xff] %v2411
      %3493 = vst [vmem:[%s604 + $0x48] sm:$0xff] %v2412
      %3494 = vst [vmem:[%s604 + $0x50] sm:$0xff] %v2413
      %3495 = vst [vmem:[%s604 + $0x58] sm:$0xff] %v2414
      %3496 = vst [vmem:[%s604 + $0x60] sm:$0xff] %v2415
      %3497 = vst [vmem:[%s604 + $0x68] sm:$0xff] %v2416
      %3498 = vst [vmem:[%s604 + $0x70] sm:$0xff] %v2417
      %3499 = vst [vmem:[%s604 + $0x78] sm:$0xff] %v2418
      %3500 = vst [vmem:[%s610] sm:$0xff] %v2451
      %3501 = vst [vmem:[%s610 + $0x8] sm:$0xff] %v2452
      %3502 = vst [vmem:[%s610 + $0x10] sm:$0xff] %v2453
      %3503 = vst [vmem:[%s610 + $0x18] sm:$0xff] %v2454
      %3504 = vst [vmem:[%s610 + $0x20] sm:$0xff] %v2455
      %3505 = vst [vmem:[%s610 + $0x28] sm:$0xff] %v2456
      %3506 = vst [vmem:[%s610 + $0x30] sm:$0xff] %v2457
      %3507 = vst [vmem:[%s610 + $0x38] sm:$0xff] %v2458
      %3508 = vst [vmem:[%s610 + $0x40] sm:$0xff] %v2459
      %3509 = vst [vmem:[%s610 + $0x48] sm:$0xff] %v2460
      %3510 = vst [vmem:[%s610 + $0x50] sm:$0xff] %v2461
      %3511 = vst [vmem:[%s610 + $0x58] sm:$0xff] %v2462
      %3512 = vst [vmem:[%s610 + $0x60] sm:$0xff] %v2463
      %3513 = vst [vmem:[%s610 + $0x68] sm:$0xff] %v2464
      %3514 = vst [vmem:[%s610 + $0x70] sm:$0xff] %v2465
      %3515 = vst [vmem:[%s610 + $0x78] sm:$0xff] %v2466
      %3516 = vst [vmem:[%s617] sm:$0xff] %v3135
      %3517 = vst [vmem:[%s617 + $0x8] sm:$0xff] %v3184
      %3518 = vst [vmem:[%s617 + $0x10] sm:$0xff] %v3233
      %3519 = vst [vmem:[%s617 + $0x18] sm:$0xff] %v3282
      %3520 = vst [vmem:[%s617 + $0x20] sm:$0xff] %v3331
      %3521 = vst [vmem:[%s617 + $0x28] sm:$0xff] %v3380
      %3522 = vst [vmem:[%s617 + $0x30] sm:$0xff] %v3429
      %3523 = vst [vmem:[%s617 + $0x38] sm:$0xff] %v3137
      %3524 = vst [vmem:[%s617 + $0x40] sm:$0xff] %v3186
      %3525 = vst [vmem:[%s617 + $0x48] sm:$0xff] %v3235
      %3526 = vst [vmem:[%s617 + $0x50] sm:$0xff] %v3284
      %3527 = vst [vmem:[%s617 + $0x58] sm:$0xff] %v3333
      %3528 = vst [vmem:[%s617 + $0x60] sm:$0xff] %v3382
      %3529 = vst [vmem:[%s617 + $0x68] sm:$0xff] %v3431
      %3530 = vst [vmem:[%s617 + $0x70] sm:$0xff] %v3140
      %3531 = vst [vmem:[%s617 + $0x78] sm:$0xff] %v3189
      %3532 = vst [vmem:[%s617 + $0x80] sm:$0xff] %v3238
      %3533 = vst [vmem:[%s617 + $0x88] sm:$0xff] %v3287
      %3534 = vst [vmem:[%s617 + $0x90] sm:$0xff] %v3336
      %3535 = vst [vmem:[%s617 + $0x98] sm:$0xff] %v3385
      %3536 = vst [vmem:[%s617 + $0xa0] sm:$0xff] %v3434
      %3537 = vst [vmem:[%s617 + $0xa8] sm:$0xff] %v3142
      %3538 = vst [vmem:[%s617 + $0xb0] sm:$0xff] %v3191
      %3539 = vst [vmem:[%s617 + $0xb8] sm:$0xff] %v3240
      %3540 = vst [vmem:[%s617 + $0xc0] sm:$0xff] %v3289
      %3541 = vst [vmem:[%s617 + $0xc8] sm:$0xff] %v3338
      %3542 = vst [vmem:[%s617 + $0xd0] sm:$0xff] %v3387
      %3543 = vst [vmem:[%s617 + $0xd8] sm:$0xff] %v3436
      %3544 = vst [vmem:[%s617 + $0xe0] sm:$0xff] %v3145
      %3545 = vst [vmem:[%s617 + $0xe8] sm:$0xff] %v3194
      %3546 = vst [vmem:[%s617 + $0xf0] sm:$0xff] %v3243
      %3547 = vst [vmem:[%s617 + $0xf8] sm:$0xff] %v3292
      %3548 = vst [vmem:[%s617 + $0x100] sm:$0xff] %v3341
      %3549 = vst [vmem:[%s617 + $0x108] sm:$0xff] %v3390
      %3550 = vst [vmem:[%s617 + $0x110] sm:$0xff] %v3439
      %3551 = vst [vmem:[%s617 + $0x118] sm:$0xff] %v3147
      %3552 = vst [vmem:[%s617 + $0x120] sm:$0xff] %v3196
      %3553 = vst [vmem:[%s617 + $0x128] sm:$0xff] %v3245
      %3554 = vst [vmem:[%s617 + $0x130] sm:$0xff] %v3294
      %3555 = vst [vmem:[%s617 + $0x138] sm:$0xff] %v3343
      %3556 = vst [vmem:[%s617 + $0x140] sm:$0xff] %v3392
      %3557 = vst [vmem:[%s617 + $0x148] sm:$0xff] %v3441
      %3558 = vst [vmem:[%s617 + $0x150] sm:$0xff] %v3150
      %3559 = vst [vmem:[%s617 + $0x158] sm:$0xff] %v3199
      %3560 = vst [vmem:[%s617 + $0x160] sm:$0xff] %v3248
      %3561 = vst [vmem:[%s617 + $0x168] sm:$0xff] %v3297
      %3562 = vst [vmem:[%s617 + $0x170] sm:$0xff] %v3346
      %3563 = vst [vmem:[%s617 + $0x178] sm:$0xff] %v3395
      %3564 = vst [vmem:[%s617 + $0x180] sm:$0xff] %v3444
      %3565 = vst [vmem:[%s617 + $0x188] sm:$0xff] %v3152
      %3566 = vst [vmem:[%s617 + $0x190] sm:$0xff] %v3201
      %3567 = vst [vmem:[%s617 + $0x198] sm:$0xff] %v3250
      %3568 = vst [vmem:[%s617 + $0x1a0] sm:$0xff] %v3299
      %3569 = vst [vmem:[%s617 + $0x1a8] sm:$0xff] %v3348
      %3570 = vst [vmem:[%s617 + $0x1b0] sm:$0xff] %v3397
      %3571 = vst [vmem:[%s617 + $0x1b8] sm:$0xff] %v3446
      %3572 = vst [vmem:[%s617 + $0x1c0] sm:$0xff] %v3155
      %3573 = vst [vmem:[%s617 + $0x1c8] sm:$0xff] %v3204
      %3574 = vst [vmem:[%s617 + $0x1d0] sm:$0xff] %v3253
      %3575 = vst [vmem:[%s617 + $0x1d8] sm:$0xff] %v3302
      %3576 = vst [vmem:[%s617 + $0x1e0] sm:$0xff] %v3351
      %3577 = vst [vmem:[%s617 + $0x1e8] sm:$0xff] %v3400
      %3578 = vst [vmem:[%s617 + $0x1f0] sm:$0xff] %v3449
      %3579 = vst [vmem:[%s617 + $0x1f8] sm:$0xff] %v3157
      %3580 = vst [vmem:[%s617 + $0x200] sm:$0xff] %v3206
      %3581 = vst [vmem:[%s617 + $0x208] sm:$0xff] %v3255
      %3582 = vst [vmem:[%s617 + $0x210] sm:$0xff] %v3304
      %3583 = vst [vmem:[%s617 + $0x218] sm:$0xff] %v3353
      %3584 = vst [vmem:[%s617 + $0x220] sm:$0xff] %v3402
      %3585 = vst [vmem:[%s617 + $0x228] sm:$0xff] %v3451
      %3586 = vst [vmem:[%s617 + $0x230] sm:$0xff] %v3160
      %3587 = vst [vmem:[%s617 + $0x238] sm:$0xff] %v3209
      %3588 = vst [vmem:[%s617 + $0x240] sm:$0xff] %v3258
      %3589 = vst [vmem:[%s617 + $0x248] sm:$0xff] %v3307
      %3590 = vst [vmem:[%s617 + $0x250] sm:$0xff] %v3356
      %3591 = vst [vmem:[%s617 + $0x258] sm:$0xff] %v3405
      %3592 = vst [vmem:[%s617 + $0x260] sm:$0xff] %v3454
      %3593 = vst [vmem:[%s617 + $0x268] sm:$0xff] %v3162
      %3594 = vst [vmem:[%s617 + $0x270] sm:$0xff] %v3211
      %3595 = vst [vmem:[%s617 + $0x278] sm:$0xff] %v3260
      %3596 = vst [vmem:[%s617 + $0x280] sm:$0xff] %v3309
      %3597 = vst [vmem:[%s617 + $0x288] sm:$0xff] %v3358
      %3598 = vst [vmem:[%s617 + $0x290] sm:$0xff] %v3407
      %3599 = vst [vmem:[%s617 + $0x298] sm:$0xff] %v3456
      %3600 = vst [vmem:[%s617 + $0x2a0] sm:$0xff] %v3165
      %3601 = vst [vmem:[%s617 + $0x2a8] sm:$0xff] %v3214
      %3602 = vst [vmem:[%s617 + $0x2b0] sm:$0xff] %v3263
      %3603 = vst [vmem:[%s617 + $0x2b8] sm:$0xff] %v3312
      %3604 = vst [vmem:[%s617 + $0x2c0] sm:$0xff] %v3361
      %3605 = vst [vmem:[%s617 + $0x2c8] sm:$0xff] %v3410
      %3606 = vst [vmem:[%s617 + $0x2d0] sm:$0xff] %v3459
      %3607 = vst [vmem:[%s617 + $0x2d8] sm:$0xff] %v3167
      %3608 = vst [vmem:[%s617 + $0x2e0] sm:$0xff] %v3216
      %3609 = vst [vmem:[%s617 + $0x2e8] sm:$0xff] %v3265
      %3610 = vst [vmem:[%s617 + $0x2f0] sm:$0xff] %v3314
      %3611 = vst [vmem:[%s617 + $0x2f8] sm:$0xff] %v3363
      %3612 = vst [vmem:[%s617 + $0x300] sm:$0xff] %v3412
      %3613 = vst [vmem:[%s617 + $0x308] sm:$0xff] %v3461
      %3614 = vst [vmem:[%s617 + $0x310] sm:$0xff] %v3170
      %3615 = vst [vmem:[%s617 + $0x318] sm:$0xff] %v3219
      %3616 = vst [vmem:[%s617 + $0x320] sm:$0xff] %v3268
      %3617 = vst [vmem:[%s617 + $0x328] sm:$0xff] %v3317
      %3618 = vst [vmem:[%s617 + $0x330] sm:$0xff] %v3366
      %3619 = vst [vmem:[%s617 + $0x338] sm:$0xff] %v3415
      %3620 = vst [vmem:[%s617 + $0x340] sm:$0xff] %v3464
      %3621 = vst [vmem:[%s617 + $0x348] sm:$0xff] %v3172
      %3622 = vst [vmem:[%s617 + $0x350] sm:$0xff] %v3221
      %3623 = vst [vmem:[%s617 + $0x358] sm:$0xff] %v3270
      %3624 = vst [vmem:[%s617 + $0x360] sm:$0xff] %v3319
      %3625 = vst [vmem:[%s617 + $0x368] sm:$0xff] %v3368
      %3626 = vst [vmem:[%s617 + $0x370] sm:$0xff] %v3417
      %3627 = vst [vmem:[%s617 + $0x378] sm:$0xff] %v3466
      %s3628 = smul.u32 16, %s29
      %p3629 = scmp.lt.s32.totalorder %s3628, 31
      %s3630 = scalar_select %p3629, %s3628, 31
      %s3631 = smul.addr %s3630, 8
      %s3632 = scalar_lea.vmem %s14, %s3631
      %s3633 = smul.u32 16, %s29
      %p3634 = scmp.lt.s32.totalorder %s3633, 31
      %s3635 = scalar_select %p3634, %s3633, 31
      %s3636 = smul.addr %s3635, 8
      %s3637 = scalar_lea.vmem %s15, %s3636
      %s3638 = smul.u32 16, %s29
      %p3639 = scmp.lt.s32.totalorder %s3638, 31
      %s3640 = scalar_select %p3639, %s3638, 31
      %s3641 = smul.addr %s3640, 8
      %s3642 = scalar_lea.vmem %s16, %s3641
      %s3643 = smul.u32 16, %s29
      %p3644 = scmp.lt.s32.totalorder %s3643, 31
      %s3645 = scalar_select %p3644, %s3643, 31
      %s3646 = smul.addr %s3645, 7
      %s3647 = smul.addr %s3646, 8
      %s3648 = scalar_lea.vmem %s17, %s3647
      // Predicated region
      $region77: #{vae_forward.1} parent=75 // pred_check
        %p3649 = pneg %p351
      $region78: #{vae_forward.1} parent=75 // pred_check_branch
        %3651 = sbr.rel (%p3649) target = $region80
      $region79: #{vae_forward.1} parent=75 // pred_region
        %s3652 = smul.u32 16, %s29
      $region80: #{vae_forward.1} parent=75 // pred_fallthru
        _
      // Predicated region
      $region81: #{vae_forward.1} parent=75 // pred_check
        %p3653 = pneg %p377
      $region82: #{vae_forward.1} parent=75 // pred_check_branch
        %3655 = sbr.rel (%p3653) target = $region84
      $region83: #{vae_forward.1} parent=75 // pred_region
        %s3656 = smul.u32 16, %s29
      $region84: #{vae_forward.1} parent=75 // pred_fallthru
        _
      // Predicated region
      $region85: #{vae_forward.1} parent=75 // pred_check
        %p3657 = pneg %p403
      $region86: #{vae_forward.1} parent=75 // pred_check_branch
        %3659 = sbr.rel (%p3657) target = $region88
      $region87: #{vae_forward.1} parent=75 // pred_region
        %s3660 = smul.u32 16, %s29
      $region88: #{vae_forward.1} parent=75 // pred_fallthru
        _
      // Predicated region
      $region89: #{vae_forward.1} parent=75 // pred_check
        %p3661 = pneg %p429
      $region90: #{vae_forward.1} parent=75 // pred_check_branch
        %3663 = sbr.rel (%p3661) target = $region92
      $region91: #{vae_forward.1} parent=75 // pred_region
        %s3664 = smul.u32 16, %s29
      $region92: #{vae_forward.1} parent=75 // pred_fallthru
        _
    $region76: #{vae_forward.1} parent=5 // pred_fallthru
      _
    %p3665 = scmp.le.s32.totalorder 2, %s24
    // Predicated region
    $region93: #{vae_forward.1} parent=5 // pred_check
      %p3666 = pneg %p3665
    $region94: #{vae_forward.1} parent=5 // pred_check_branch
      %3668 = sbr.rel (%p3666) target = $region96
    $region95: #{vae_forward.1} parent=5 // pred_region
      %s3669 = ssub.s32 %s24, 2
      // Predicated region
      $region97: #{vae_forward.1} parent=95 // pred_check
        %p3670 = pneg %p357
      $region98: #{vae_forward.1} parent=95 // pred_check_branch
        %3672 = sbr.rel (%p3670) target = $region100
      $region99: #{vae_forward.1} parent=95 // pred_region
        %s3673 = smul.u32 16, %s30
        %p3674 = scmp.lt.s32.totalorder %s3673, 31
        %s3675 = scalar_select %p3674, %s3673, 31
        %s3676 = smul.addr %s3675, 8
        %s3677 = scalar_lea.vmem %s14, %s3676
      $region100: #{vae_forward.1} parent=95 // pred_fallthru
        _
      // Predicated region
      $region101: #{vae_forward.1} parent=95 // pred_check
        %p3678 = pneg %p383
      $region102: #{vae_forward.1} parent=95 // pred_check_branch
        %3680 = sbr.rel (%p3678) target = $region104
      $region103: #{vae_forward.1} parent=95 // pred_region
        %s3681 = smul.u32 16, %s30
        %p3682 = scmp.lt.s32.totalorder %s3681, 31
        %s3683 = scalar_select %p3682, %s3681, 31
        %s3684 = smul.addr %s3683, 8
        %s3685 = scalar_lea.vmem %s15, %s3684
      $region104: #{vae_forward.1} parent=95 // pred_fallthru
        _
      // Predicated region
      $region105: #{vae_forward.1} parent=95 // pred_check
        %p3686 = pneg %p409
      $region106: #{vae_forward.1} parent=95 // pred_check_branch
        %3688 = sbr.rel (%p3686) target = $region108
      $region107: #{vae_forward.1} parent=95 // pred_region
        %s3689 = smul.u32 16, %s30
        %p3690 = scmp.lt.s32.totalorder %s3689, 31
        %s3691 = scalar_select %p3690, %s3689, 31
        %s3692 = smul.addr %s3691, 8
        %s3693 = scalar_lea.vmem %s16, %s3692
      $region108: #{vae_forward.1} parent=95 // pred_fallthru
        _
      // Predicated region
      $region109: #{vae_forward.1} parent=95 // pred_check
        %p3694 = pneg %p435
      $region110: #{vae_forward.1} parent=95 // pred_check_branch
        %3696 = sbr.rel (%p3694) target = $region112
      $region111: #{vae_forward.1} parent=95 // pred_region
        %s3697 = smul.u32 16, %s30
        %p3698 = scmp.lt.s32.totalorder %s3697, 31
        %s3699 = scalar_select %p3698, %s3697, 31
        %s3700 = smul.addr %s3699, 7
        %s3701 = smul.addr %s3700, 8
        %s3702 = scalar_lea.vmem %s17, %s3701
      $region112: #{vae_forward.1} parent=95 // pred_fallthru
        _
    $region96: #{vae_forward.1} parent=5 // pred_fallthru
      _
  $region6: #{vae_forward.1} parent=0 // loop_footer
    %s28 = sadd.s32 1, %s24
  $region7: #{vae_forward.1} parent=0 // loop_footer_branch
    %23 = sbr.rel target = $region3
  $region8: #{vae_forward.1} parent=0 // loop_exit
    _

</llo_original>
